<compile_context>
chip_gen: v7x
topology: tpu7x:2x2x1
jax: 0.10.0
libtpu: 0.0.40
codegen_flags: <defaults>
</compile_context>

<pallas_src>
import functools

import jax
import jax.numpy as jnp
from jax.experimental import pallas as pl
from jax.experimental.pallas import tpu as pltpu

LN_EPS = 1e-5  # torch.nn.LayerNorm default eps


# ----------------------------------------------------------------------------
# VMEM budget (per-generation): 64 MiB on v5e/v6e (128 MiB physical), ~75% of
# physical on v7x (64 MiB physical) so Mosaic internal scratch still fits.
# ----------------------------------------------------------------------------
def _vmem_limit_bytes():
    cap = 128 * 1024 * 1024
    try:
        cap = int(pltpu.get_tpu_info().vmem_capacity_bytes)
    except Exception:
        pass
    return int(min(64 * 1024 * 1024, cap - cap // 4))


_VMEM_LIMIT = _vmem_limit_bytes()


# ----------------------------------------------------------------------------
# BlockSpec helper: constant-index operands (weights / biases) -> Buffered(1)
# so the resident copy is not duplicated by the default double-buffering.
# ----------------------------------------------------------------------------
def _resident(shape):
    nd = len(shape)
    index_map = lambda i: (0,) * nd
    try:
        return pl.BlockSpec(shape, index_map, pipeline_mode=pl.Buffered(1))
    except Exception:  # older jax without pipeline_mode / Buffered
        return pl.BlockSpec(shape, index_map)


# ----------------------------------------------------------------------------
# In-kernel math helpers
# ----------------------------------------------------------------------------
def _erf_f32(x):
    """f32 rational erf approximation (mul/add/div/clamp only)."""
    alpha = (0.00022905065861350646, 0.0034082910107109506,
             0.050955695062380861, 0.18520832239976145, 1.128379143519084)
    beta = (-1.1791602954361697e-7, 0.000023547966471313185,
            0.0010179625278914885, 0.014070470171167667,
            0.11098505178285362, 0.49746925110067538, 1.0)
    xc = jnp.clip(x, -4.0, 4.0)
    x2 = xc * xc
    p = jnp.float32(alpha[0])
    for a in alpha[1:]:
        p = p * x2 + jnp.float32(a)
    q = jnp.float32(beta[0])
    for b_ in beta[1:]:
        q = q * x2 + jnp.float32(b_)
    return xc * p / q


def _gelu_exact(x):
    # torch.nn.GELU() default: exact erf-based GELU.
    return 0.5 * x * (1.0 + _erf_f32(x * 0.7071067811865476))


def _layernorm_noaffine(x):
    # gamma/beta are folded into the following matmul weights host-side.
    mu = jnp.mean(x, axis=-1, keepdims=True)
    var = jnp.mean(jnp.square(x - mu), axis=-1, keepdims=True)
    return (x - mu) * jax.lax.rsqrt(var + LN_EPS)


# ----------------------------------------------------------------------------
# Tiling helpers (padding-based; no whole-array / wb=1 fallbacks)
# ----------------------------------------------------------------------------
def _pick_window_block(nb, nw, s, has_mask, max_rows=512):
    """Windows per grid step.  Prefers sublane-aligned slabs (wb*s % 8 == 0),
    >= 2 grid steps (keeps both v7x TensorCores busy), low padding waste, and
    then the largest wb.  With a per-window mask wb must divide nw so the
    mask index map stays a plain modulo."""
    cap = max(1, max_rows // s)
    if has_mask:
        cands = [c for c in range(1, min(cap, nw) + 1) if nw % c == 0]
    else:
        cands = list(range(1, min(cap, nb) + 1))

    def score(c):
        steps = (nb + c - 1) // c
        eff = nb / float(steps * c)          # fraction of computed windows that are real
        return ((c * s) % 8 == 0, steps >= 2, eff >= 0.75, c)

    return max(cands, key=score)


def _pick_row_tile(n, cap=512):
    """Row tile (multiple of 8, never above cap); caller pads the row count up
    to a multiple of the tile."""
    cap = max(8, (cap // 8) * 8)
    if n <= 8:
        return 8
    if n <= cap:
        # split into ~2 tiles so the 1-D 'parallel' grid still feeds 2 cores.
        return min(cap, ((n + 15) // 16) * 8)
    return cap


# ----------------------------------------------------------------------------
# Kernel 1: LayerNorm1 -> fused QKV -> windowed MHA -> single out proj
#           (+ fused first residual add when the shift rolls cancel)
# ----------------------------------------------------------------------------
def _attn_kernel(x_ref, wqkv_ref, bqkv_ref, wp_ref, bp_ref, bias_ref, *rest,
                 num_head, has_mask, add_residual):
    if has_mask:
        mask_ref, o_ref = rest
    else:
        (o_ref,) = rest

    wb, s, e = x_ref.shape
    d = e // num_head
    rows = wb * s

    x = x_ref[...].reshape(rows, e)          # pre-norm residual (window frame)
    xn = _layernorm_noaffine(x)              # LN1 affine folded into wqkv/bqkv

    # One fused QKV matmul: bf16 operands on the MXU, f32 accumulation.
    qkv = (jnp.dot(xn.astype(jnp.bfloat16), wqkv_ref[...],
                   preferred_element_type=jnp.float32) + bqkv_ref[...])

    bias = bias_ref[...]                     # (1, H, s, s) rel-pos bias
    mask = mask_ref[...] if has_mask else None

    # Per-head scores / softmax / weighted sum (tiny s x s matmuls on a
    # window-batched einsum), then ONE K=e projection on the concatenated
    # heads.  The q scale is already folded into the q columns of wqkv.
    z_heads = []
    for h in range(num_head):
        qh = qkv[:, h * d:(h + 1) * d].reshape(wb, s, d).astype(jnp.bfloat16)
        kh = qkv[:, e + h * d:e + (h + 1) * d].reshape(wb, s, d).astype(jnp.bfloat16)
        vh = qkv[:, 2 * e + h * d:2 * e + (h + 1) * d].reshape(wb, s, d).astype(jnp.bfloat16)

        att = jnp.einsum('wqd,wkd->wqk', qh, kh,
                         preferred_element_type=jnp.float32)       # (wb, s, s)
        att = att + bias[0, h]
        if has_mask:
            att = att + (mask[:, h] if mask.shape[1] == num_head else mask[:, 0])
        att = att - jnp.max(att, axis=-1, keepdims=True)
        att = jnp.exp(att)
        # softmax denom on the EUP slot (~1e-4 rel err; bf16 matmuls dominate).
        att = att * pl.reciprocal(jnp.sum(att, axis=-1, keepdims=True),
                                  approx=True)
        zh = jnp.einsum('wqk,wkd->wqd', att.astype(jnp.bfloat16), vh,
                        preferred_element_type=jnp.float32)        # (wb, s, d)
        z_heads.append(zh.reshape(rows, d))

    z = jnp.concatenate(z_heads, axis=-1).astype(jnp.bfloat16)     # (rows, e)
    out = jnp.dot(z, wp_ref[...], preferred_element_type=jnp.float32) + bp_ref[...]
    if add_residual:
        out = out + x                        # fused first residual add
    o_ref[...] = out.reshape(wb, s, e).astype(o_ref.dtype)


def window_attention(xw, params, pos_bias, mask, *, num_head, nw,
                     add_residual, max_rows=512):
    """xw: (b*nw, s, e) windowed (already rolled) pre-norm input.
    pos_bias: (1, H, s, s).  mask: None or (nw, mh, s, s) with mh in {1, H}."""
    nb, s, e = xw.shape
    has_mask = mask is not None
    wb = _pick_window_block(nb, nw, s, has_mask, max_rows)
    grid_n = pl.cdiv(nb, wb)
    nb_pad = grid_n * wb
    if nb_pad != nb:                         # pad instead of wb=1 fallback
        xw = jnp.pad(xw, ((0, nb_pad - nb), (0, 0), (0, 0)))
    n_tiles_per_batch = max(nw // wb, 1)

    kern = functools.partial(_attn_kernel, num_head=num_head,
                             has_mask=has_mask, add_residual=add_residual)

    in_specs = [
        pl.BlockSpec((wb, s, e), lambda i: (i, 0, 0)),             # x tile
        _resident((e, 3 * e)), _resident((1, 3 * e)),              # fused QKV
        _resident((e, e)), _resident((1, e)),                      # out proj
        _resident((1, num_head, s, s)),                            # pos bias
    ]
    inputs = [xw, params["wqkv"], params["bqkv"], params["wp"], params["bp"],
              pos_bias]
    if has_mask:
        mh = mask.shape[1]
        in_specs.append(pl.BlockSpec(
            (wb, mh, s, s), lambda i: (i % n_tiles_per_batch, 0, 0, 0)))
        inputs.append(mask)

    out = pl.pallas_call(
        kern,
        out_shape=jax.ShapeDtypeStruct((nb_pad, s, e), xw.dtype),
        grid=(grid_n,),
        in_specs=in_specs,
        out_specs=pl.BlockSpec((wb, s, e), lambda i: (i, 0, 0)),
        compiler_params=pltpu.CompilerParams(
            dimension_semantics=("parallel",),
            vmem_limit_bytes=_VMEM_LIMIT),
    )(*inputs)
    return out[:nb] if nb_pad != nb else out


# ----------------------------------------------------------------------------
# Kernel 2: LayerNorm2 -> Linear -> GELU -> Linear -> GELU -> +residual
#           (the reference MLP really does apply GELU after the 2nd Linear)
# ----------------------------------------------------------------------------
def _mlp_kernel(x_ref, w1_ref, b1_ref, w2_ref, b2_ref, o_ref):
    x = x_ref[...]                                         # (rt, e) f32
    xn = _layernorm_noaffine(x)                            # LN2 affine folded into w1/b1
    h1 = _gelu_exact(jnp.dot(xn.astype(jnp.bfloat16), w1_ref[...],
                             preferred_element_type=jnp.float32) + b1_ref[...])
    h2 = _gelu_exact(jnp.dot(h1.astype(jnp.bfloat16), w2_ref[...],
                             preferred_element_type=jnp.float32) + b2_ref[...])
    o_ref[...] = (x + h2).astype(o_ref.dtype)              # fused residual add


def mlp_block(x2d, params, *, row_tile_cap=512):
    # TODO(synk): on v7x with very large dim_hidden, additionally tile hdim
    # (two-chunk w1/w2 with an accumulator) to shrink the (rt, hdim) live set.
    n, e = x2d.shape
    hdim = params["w1"].shape[1]
    rt = _pick_row_tile(n, row_tile_cap)
    grid_n = pl.cdiv(n, rt)
    n_pad = grid_n * rt
    if n_pad != n:
        x2d = jnp.pad(x2d, ((0, n_pad - n), (0, 0)))
    out = pl.pallas_call(
        _mlp_kernel,
        out_shape=jax.ShapeDtypeStruct((n_pad, e), x2d.dtype),
        grid=(grid_n,),
        in_specs=[
            pl.BlockSpec((rt, e), lambda i: (i, 0)),
            _resident((e, hdim)), _resident((1, hdim)),
            _resident((hdim, e)), _resident((1, e)),
        ],
        out_specs=pl.BlockSpec((rt, e), lambda i: (i, 0)),
        compiler_params=pltpu.CompilerParams(
            dimension_semantics=("parallel",),
            vmem_limit_bytes=_VMEM_LIMIT),
    )(x2d, params["w1"], params["bb1"], params["w2"], params["bb2"])
    return out[:n] if n_pad != n else out


# ----------------------------------------------------------------------------
# SwinLayer forward (dim_input == 2 path of the PyTorch module)
# ----------------------------------------------------------------------------
def swin_layer_forward(x, params, *, dim_window, num_head,
                       shifted=False, mask=None):
    b, e, d1, d2 = x.shape
    w1, w2 = dim_window
    nw1, nw2 = d1 // w1, d2 // w2
    nw, s = nw1 * nw2, w1 * w2
    # TODO(synk): if e is not a multiple of 128 (e.g. Swin-T e=96), pad the
    # channel dim to 128 for lane-dense stores (needs LN masking), not done here.

    x = jnp.transpose(x, (0, 2, 3, 1))                    # e_last: (b,d1,d2,e)

    # norm1 is a per-token op, so it commutes with roll + window partition and
    # is fused inside the attention kernel.  The first residual add is fused
    # into the kernel only when the forward/backward rolls cancel exactly
    # (matches torch's (-w)//2 forward, w//2 backward shifts).
    fuse_res = (not shifted) or all(((-w) // 2) + (w // 2) == 0 for w in (w1, w2))

    xs = x
    if shifted:
        xs = jnp.roll(xs, shift=((-w1) // 2, (-w2) // 2), axis=(1, 2))
    xw = (xs.reshape(b, nw1, w1, nw2, w2, e)
            .transpose(0, 1, 3, 2, 4, 5)
            .reshape(b * nw, s, e))

    pos_bias = params["pos_bias"][None]                   # (1, H, s, s)
    m = None
    if shifted and mask is not None:                      # torch passes mask only when shifted
        m = jnp.asarray(mask, jnp.float32)
        if m.ndim > 4:                                    # e.g. (1, nw, mh, s, s)
            m = m.reshape((-1,) + m.shape[-3:])
        if m.ndim == 3:                                   # (nw, s, s)
            m = m[:, None]
        # m: (nw, mh, s, s) with mh in {1, num_head}; added in-kernel (no broadcast).

    y = window_attention(xw, params, pos_bias, m, num_head=num_head, nw=nw,
                         add_residual=fuse_res)
    y = (y.reshape(b, nw1, nw2, w1, w2, e)
          .transpose(0, 1, 3, 2, 4, 5)
          .reshape(b, d1, d2, e))
    if shifted:
        y = jnp.roll(y, shift=(w1 // 2, w2 // 2), axis=(1, 2))
    if not fuse_res:
        y = x + y                                         # residual in original frame

    # drop_conn / dropout are identity in eval mode.
    # TODO(synk): train-mode Dropout / StochasticDepth randomness not implemented.
    y2 = mlp_block(y.reshape(b * d1 * d2, e), params)     # norm2 + MLP + residual
    y = y2.reshape(b, d1, d2, e)

    return jnp.transpose(y, (0, 3, 1, 2))                 # e_first: (b,e,d1,d2)


# ----------------------------------------------------------------------------
# Parameters: torch-like raw params + one-time host-side kernel transform
# (weights stored as (in, out) = torch weight.T)
# ----------------------------------------------------------------------------
def init_raw_params(key, *, dim_embedding, dim_hidden, num_head, window_tokens):
    e, hdim, s = dim_embedding, dim_hidden, window_tokens
    ks = jax.random.split(key, 11)
    rnd = lambda k, shape: 0.02 * jax.random.normal(k, shape, jnp.float32)
    return {
        "g1": jnp.ones((e,), jnp.float32), "be1": jnp.zeros((e,), jnp.float32),
        "g2": jnp.ones((e,), jnp.float32), "be2": jnp.zeros((e,), jnp.float32),
        "wq": rnd(ks[0], (e, e)), "bq": rnd(ks[1], (e,)),
        "wk": rnd(ks[2], (e, e)), "bk": rnd(ks[3], (e,)),
        "wv": rnd(ks[4], (e, e)), "bv": rnd(ks[5], (e,)),
        "wp": rnd(ks[6], (e, e)), "bp": rnd(ks[7], (e,)),
        "w1": rnd(ks[8], (e, hdim)), "bb1": jnp.zeros((hdim,), jnp.float32),
        "w2": rnd(ks[9], (hdim, e)), "bb2": jnp.zeros((e,), jnp.float32),
        # torch's get_pos_bias starts from an all-zero trainable table; random
        # values here so the bias path is exercised numerically.
        "pos_bias": rnd(ks[10], (num_head, s, s)),
    }


def prepare_params(raw, *, num_head):
    """Fold LN1 affine + q scale into the fused QKV weight/bias, LN2 affine
    into w1/bb1, and cast matmul weights to bf16 (native MXU dtype, half the
    DMA / resident-VMEM footprint).  Biases / pos-bias stay f32."""
    e = raw["wq"].shape[0]
    scale = (e // num_head) ** -0.5
    g1, be1, g2, be2 = raw["g1"], raw["be1"], raw["g2"], raw["be2"]

    def fold(w, b, g, be, s=1.0):
        return s * (g[:, None] * w), s * (be @ w + b)

    wq, bq = fold(raw["wq"], raw["bq"], g1, be1, scale)
    wk, bk = fold(raw["wk"], raw["bk"], g1, be1)
    wv, bv = fold(raw["wv"], raw["bv"], g1, be1)
    w1, b1 = fold(raw["w1"], raw["bb1"], g2, be2)

    return {
        "wqkv": jnp.concatenate([wq, wk, wv], axis=1).astype(jnp.bfloat16),
        "bqkv": jnp.concatenate([bq, bk, bv])[None, :].astype(jnp.float32),
        "wp": raw["wp"].astype(jnp.bfloat16),
        "bp": raw["bp"][None, :].astype(jnp.float32),
        "w1": w1.astype(jnp.bfloat16),
        "bb1": b1[None, :].astype(jnp.float32),
        "w2": raw["w2"].astype(jnp.bfloat16),
        "bb2": raw["bb2"][None, :].astype(jnp.float32),
        "pos_bias": raw["pos_bias"].astype(jnp.float32),
    }


if __name__ == "__main__":
    b, dim_embedding, dim_hidden, num_head = 2, 32, 64, 4
    dim_data, dim_window = (8, 8), (4, 4)
    s = dim_window[0] * dim_window[1]
    nw = (dim_data[0] // dim_window[0]) * (dim_data[1] // dim_window[1])

    key = jax.random.PRNGKey(0)
    kx, kp, km = jax.random.split(key, 3)
    x = jax.random.normal(kx, (b, dim_embedding, *dim_data), jnp.float32)
    raw = init_raw_params(kp, dim_embedding=dim_embedding, dim_hidden=dim_hidden,
                          num_head=num_head, window_tokens=s)
    params = prepare_params(raw, num_head=num_head)

    fwd = jax.jit(swin_layer_forward,
                  static_argnames=("dim_window", "num_head", "shifted"))

    # Non-shifted block (no mask).
    out_a = fwd(x, params, dim_window=dim_window, num_head=num_head,
                shifted=False, mask=None)
    # Shifted block with a per-window attention mask (roll + in-kernel mask add).
    mask = jnp.where(jax.random.bernoulli(km, 0.85, (nw, 1, s, s)),
                     0.0, -100.0).astype(jnp.float32)
    out_b = fwd(x, params, dim_window=dim_window, num_head=num_head,
                shifted=True, mask=mask)

    jax.block_until_ready((out_a, out_b))
    assert out_a.shape == x.shape and out_a.dtype == jnp.float32
    assert out_b.shape == x.shape and out_b.dtype == jnp.float32
    assert bool(jnp.isfinite(out_a).all()) and bool(jnp.isfinite(out_b).all())
    print("KERNEL_OK")
</pallas_src>

<mosaic_0001>
module attributes {stable_mosaic.version = 11 : i64} {
  func.func @_attn_kernel(%arg0: i32, %arg1: memref<5x16x32xf32, #tpu.memory_space<vmem>>, %arg2: memref<32x96xbf16, #tpu.memory_space<vmem>>, %arg3: memref<1x96xf32, #tpu.memory_space<vmem>>, %arg4: memref<32x32xbf16, #tpu.memory_space<vmem>>, %arg5: memref<1x32xf32, #tpu.memory_space<vmem>>, %arg6: memref<1x4x16x16xf32, #tpu.memory_space<vmem>>, %arg7: memref<5x16x32xf32, #tpu.memory_space<vmem>>) attributes {dimension_semantics = [#tpu.dimension_semantics<parallel>], iteration_bounds = array<i64: 2>, scalar_prefetch = 0 : i64, scratch_operands = 0 : i64, tpu.core_type = #tpu.core_type<tc>, window_params = [{transform_indices = @transform_0, window_bounds = array<i64: 5, 16, 32>}, {pipeline_mode = #tpu.pipeline_mode<synchronous>, transform_indices = @transform_1, window_bounds = array<i64: 32, 96>}, {pipeline_mode = #tpu.pipeline_mode<synchronous>, transform_indices = @transform_2, window_bounds = array<i64: 1, 96>}, {pipeline_mode = #tpu.pipeline_mode<synchronous>, transform_indices = @transform_3, window_bounds = array<i64: 32, 32>}, {pipeline_mode = #tpu.pipeline_mode<synchronous>, transform_indices = @transform_4, window_bounds = array<i64: 1, 32>}, {pipeline_mode = #tpu.pipeline_mode<synchronous>, transform_indices = @transform_5, window_bounds = array<i64: 1, 4, 16, 16>}, {transform_indices = @transform_6, window_bounds = array<i64: 5, 16, 32>}]} {
    %c0 = arith.constant 0 : index
    %c0_0 = arith.constant 0 : index
    %c0_1 = arith.constant 0 : index
    %0 = vector.load %arg1[%c0, %c0_0, %c0_1] : memref<5x16x32xf32, #tpu.memory_space<vmem>>, vector<5x16x32xf32>
    %1 = vector.shape_cast %0 : vector<5x16x32xf32> to vector<80x32xf32>
    %cst = arith.constant dense<0.000000e+00> : vector<80xf32>
    %2 = vector.multi_reduction <add>, %1, %cst [1] : vector<80x32xf32> to vector<80xf32>
    %3 = vector.shape_cast %2 : vector<80xf32> to vector<80x1xf32>
    %cst_2 = arith.constant 3.200000e+01 : f32
    %4 = vector.broadcast %cst_2 : f32 to vector<80x1xf32>
    %5 = arith.divf %3, %4 : vector<80x1xf32>
    %6 = vector.broadcast %5 : vector<80x1xf32> to vector<80x32xf32>
    %7 = arith.subf %1, %6 : vector<80x32xf32>
    %8 = arith.mulf %7, %7 : vector<80x32xf32>
    %cst_3 = arith.constant dense<0.000000e+00> : vector<80xf32>
    %9 = vector.multi_reduction <add>, %8, %cst_3 [1] : vector<80x32xf32> to vector<80xf32>
    %10 = vector.shape_cast %9 : vector<80xf32> to vector<80x1xf32>
    %cst_4 = arith.constant 3.200000e+01 : f32
    %11 = vector.broadcast %cst_4 : f32 to vector<80x1xf32>
    %12 = arith.divf %10, %11 : vector<80x1xf32>
    %13 = vector.broadcast %5 : vector<80x1xf32> to vector<80x32xf32>
    %14 = arith.subf %1, %13 : vector<80x32xf32>
    %cst_5 = arith.constant 9.99999974E-6 : f32
    %15 = vector.broadcast %cst_5 : f32 to vector<80x1xf32>
    %16 = arith.addf %12, %15 : vector<80x1xf32>
    %17 = math.rsqrt %16 : vector<80x1xf32>
    %18 = vector.broadcast %17 : vector<80x1xf32> to vector<80x32xf32>
    %19 = arith.mulf %14, %18 : vector<80x32xf32>
    %20 = arith.truncf %19 : vector<80x32xf32> to vector<80x32xbf16>
    %c0_6 = arith.constant 0 : index
    %c0_7 = arith.constant 0 : index
    %21 = vector.load %arg2[%c0_6, %c0_7] : memref<32x96xbf16, #tpu.memory_space<vmem>>, vector<32x96xbf16>
    %cst_8 = arith.constant dense<0.000000e+00> : vector<80x96xf32>
    %22 = tpu.matmul %20, %21, %cst_8 {dimension_numbers = #tpu.dot_dimension_numbers<[1], [0], [0], [1], [0, 0, 1, 1], [], []>} : vector<80x32xbf16>, vector<32x96xbf16>, vector<80x96xf32> -> vector<80x96xf32>
    %c0_9 = arith.constant 0 : index
    %c0_10 = arith.constant 0 : index
    %23 = vector.load %arg3[%c0_9, %c0_10] : memref<1x96xf32, #tpu.memory_space<vmem>>, vector<1x96xf32>
    %24 = vector.broadcast %23 : vector<1x96xf32> to vector<80x96xf32>
    %25 = arith.addf %22, %24 : vector<80x96xf32>
    %c0_11 = arith.constant 0 : index
    %c0_12 = arith.constant 0 : index
    %c0_13 = arith.constant 0 : index
    %c0_14 = arith.constant 0 : index
    %26 = vector.load %arg6[%c0_11, %c0_12, %c0_13, %c0_14] : memref<1x4x16x16xf32, #tpu.memory_space<vmem>>, vector<1x4x16x16xf32>
    %27 = vector.extract_strided_slice %25 {offsets = [0, 0], sizes = [80, 8], strides = [1, 1]} : vector<80x96xf32> to vector<80x8xf32>
    %28 = vector.shape_cast %27 : vector<80x8xf32> to vector<5x16x8xf32>
    %29 = arith.truncf %28 : vector<5x16x8xf32> to vector<5x16x8xbf16>
    %30 = vector.extract_strided_slice %25 {offsets = [0, 32], sizes = [80, 8], strides = [1, 1]} : vector<80x96xf32> to vector<80x8xf32>
    %31 = vector.shape_cast %30 : vector<80x8xf32> to vector<5x16x8xf32>
    %32 = arith.truncf %31 : vector<5x16x8xf32> to vector<5x16x8xbf16>
    %33 = vector.extract_strided_slice %25 {offsets = [0, 64], sizes = [80, 8], strides = [1, 1]} : vector<80x96xf32> to vector<80x8xf32>
    %34 = vector.shape_cast %33 : vector<80x8xf32> to vector<5x16x8xf32>
    %35 = arith.truncf %34 : vector<5x16x8xf32> to vector<5x16x8xbf16>
    "tpu.trace_start"() <{level = 10 : i32, message = "wqd,wkd->wqk"}> : () -> ()
    %cst_15 = arith.constant dense<0.000000e+00> : vector<5x16x16xf32>
    %36 = tpu.matmul %29, %32, %cst_15 {dimension_numbers = #tpu.dot_dimension_numbers<[2], [2], [1], [1], [0, 0, 0, 1, 1, 1], [0], [0]>} : vector<5x16x8xbf16>, vector<5x16x8xbf16>, vector<5x16x16xf32> -> vector<5x16x16xf32>
    "tpu.trace_stop"() : () -> ()
    %37 = vector.extract_strided_slice %26 {offsets = [0, 0, 0, 0], sizes = [1, 1, 16, 16], strides = [1, 1, 1, 1]} : vector<1x4x16x16xf32> to vector<1x1x16x16xf32>
    %38 = vector.shape_cast %37 : vector<1x1x16x16xf32> to vector<16x16xf32>
    %39 = vector.shape_cast %38 : vector<16x16xf32> to vector<1x16x16xf32>
    %40 = vector.broadcast %39 : vector<1x16x16xf32> to vector<5x16x16xf32>
    %41 = arith.addf %36, %40 : vector<5x16x16xf32>
    %cst_16 = arith.constant dense<0xFF800000> : vector<5x16xf32>
    %42 = vector.multi_reduction <maximumf>, %41, %cst_16 [2] : vector<5x16x16xf32> to vector<5x16xf32>
    %43 = vector.shape_cast %42 : vector<5x16xf32> to vector<5x16x1xf32>
    %44 = vector.broadcast %43 : vector<5x16x1xf32> to vector<5x16x16xf32>
    %45 = arith.subf %41, %44 : vector<5x16x16xf32>
    %46 = math.exp %45 : vector<5x16x16xf32>
    %cst_17 = arith.constant dense<0.000000e+00> : vector<5x16xf32>
    %47 = vector.multi_reduction <add>, %46, %cst_17 [2] : vector<5x16x16xf32> to vector<5x16xf32>
    %48 = vector.shape_cast %47 : vector<5x16xf32> to vector<5x16x1xf32>
    %49 = tpu.reciprocal %48 {approx = true} : vector<5x16x1xf32> -> vector<5x16x1xf32>
    %50 = vector.broadcast %49 : vector<5x16x1xf32> to vector<5x16x16xf32>
    %51 = arith.mulf %46, %50 : vector<5x16x16xf32>
    %52 = arith.truncf %51 : vector<5x16x16xf32> to vector<5x16x16xbf16>
    "tpu.trace_start"() <{level = 10 : i32, message = "wqk,wkd->wqd"}> : () -> ()
    %cst_18 = arith.constant dense<0.000000e+00> : vector<5x16x8xf32>
    %53 = tpu.matmul %52, %35, %cst_18 {dimension_numbers = #tpu.dot_dimension_numbers<[2], [1], [1], [2], [0, 0, 0, 1, 1, 2], [0], [0]>} : vector<5x16x16xbf16>, vector<5x16x8xbf16>, vector<5x16x8xf32> -> vector<5x16x8xf32>
    "tpu.trace_stop"() : () -> ()
    %54 = vector.shape_cast %53 : vector<5x16x8xf32> to vector<80x8xf32>
    %55 = vector.extract_strided_slice %25 {offsets = [0, 8], sizes = [80, 8], strides = [1, 1]} : vector<80x96xf32> to vector<80x8xf32>
    %56 = vector.shape_cast %55 : vector<80x8xf32> to vector<5x16x8xf32>
    %57 = arith.truncf %56 : vector<5x16x8xf32> to vector<5x16x8xbf16>
    %58 = vector.extract_strided_slice %25 {offsets = [0, 40], sizes = [80, 8], strides = [1, 1]} : vector<80x96xf32> to vector<80x8xf32>
    %59 = vector.shape_cast %58 : vector<80x8xf32> to vector<5x16x8xf32>
    %60 = arith.truncf %59 : vector<5x16x8xf32> to vector<5x16x8xbf16>
    %61 = vector.extract_strided_slice %25 {offsets = [0, 72], sizes = [80, 8], strides = [1, 1]} : vector<80x96xf32> to vector<80x8xf32>
    %62 = vector.shape_cast %61 : vector<80x8xf32> to vector<5x16x8xf32>
    %63 = arith.truncf %62 : vector<5x16x8xf32> to vector<5x16x8xbf16>
    "tpu.trace_start"() <{level = 10 : i32, message = "wqd,wkd->wqk"}> : () -> ()
    %cst_19 = arith.constant dense<0.000000e+00> : vector<5x16x16xf32>
    %64 = tpu.matmul %57, %60, %cst_19 {dimension_numbers = #tpu.dot_dimension_numbers<[2], [2], [1], [1], [0, 0, 0, 1, 1, 1], [0], [0]>} : vector<5x16x8xbf16>, vector<5x16x8xbf16>, vector<5x16x16xf32> -> vector<5x16x16xf32>
    "tpu.trace_stop"() : () -> ()
    %65 = vector.extract_strided_slice %26 {offsets = [0, 1, 0, 0], sizes = [1, 1, 16, 16], strides = [1, 1, 1, 1]} : vector<1x4x16x16xf32> to vector<1x1x16x16xf32>
    %66 = vector.shape_cast %65 : vector<1x1x16x16xf32> to vector<16x16xf32>
    %67 = vector.shape_cast %66 : vector<16x16xf32> to vector<1x16x16xf32>
    %68 = vector.broadcast %67 : vector<1x16x16xf32> to vector<5x16x16xf32>
    %69 = arith.addf %64, %68 : vector<5x16x16xf32>
    %cst_20 = arith.constant dense<0xFF800000> : vector<5x16xf32>
    %70 = vector.multi_reduction <maximumf>, %69, %cst_20 [2] : vector<5x16x16xf32> to vector<5x16xf32>
    %71 = vector.shape_cast %70 : vector<5x16xf32> to vector<5x16x1xf32>
    %72 = vector.broadcast %71 : vector<5x16x1xf32> to vector<5x16x16xf32>
    %73 = arith.subf %69, %72 : vector<5x16x16xf32>
    %74 = math.exp %73 : vector<5x16x16xf32>
    %cst_21 = arith.constant dense<0.000000e+00> : vector<5x16xf32>
    %75 = vector.multi_reduction <add>, %74, %cst_21 [2] : vector<5x16x16xf32> to vector<5x16xf32>
    %76 = vector.shape_cast %75 : vector<5x16xf32> to vector<5x16x1xf32>
    %77 = tpu.reciprocal %76 {approx = true} : vector<5x16x1xf32> -> vector<5x16x1xf32>
    %78 = vector.broadcast %77 : vector<5x16x1xf32> to vector<5x16x16xf32>
    %79 = arith.mulf %74, %78 : vector<5x16x16xf32>
    %80 = arith.truncf %79 : vector<5x16x16xf32> to vector<5x16x16xbf16>
    "tpu.trace_start"() <{level = 10 : i32, message = "wqk,wkd->wqd"}> : () -> ()
    %cst_22 = arith.constant dense<0.000000e+00> : vector<5x16x8xf32>
    %81 = tpu.matmul %80, %63, %cst_22 {dimension_numbers = #tpu.dot_dimension_numbers<[2], [1], [1], [2], [0, 0, 0, 1, 1, 2], [0], [0]>} : vector<5x16x16xbf16>, vector<5x16x8xbf16>, vector<5x16x8xf32> -> vector<5x16x8xf32>
    "tpu.trace_stop"() : () -> ()
    %82 = vector.shape_cast %81 : vector<5x16x8xf32> to vector<80x8xf32>
    %83 = vector.extract_strided_slice %25 {offsets = [0, 16], sizes = [80, 8], strides = [1, 1]} : vector<80x96xf32> to vector<80x8xf32>
    %84 = vector.shape_cast %83 : vector<80x8xf32> to vector<5x16x8xf32>
    %85 = arith.truncf %84 : vector<5x16x8xf32> to vector<5x16x8xbf16>
    %86 = vector.extract_strided_slice %25 {offsets = [0, 48], sizes = [80, 8], strides = [1, 1]} : vector<80x96xf32> to vector<80x8xf32>
    %87 = vector.shape_cast %86 : vector<80x8xf32> to vector<5x16x8xf32>
    %88 = arith.truncf %87 : vector<5x16x8xf32> to vector<5x16x8xbf16>
    %89 = vector.extract_strided_slice %25 {offsets = [0, 80], sizes = [80, 8], strides = [1, 1]} : vector<80x96xf32> to vector<80x8xf32>
    %90 = vector.shape_cast %89 : vector<80x8xf32> to vector<5x16x8xf32>
    %91 = arith.truncf %90 : vector<5x16x8xf32> to vector<5x16x8xbf16>
    "tpu.trace_start"() <{level = 10 : i32, message = "wqd,wkd->wqk"}> : () -> ()
    %cst_23 = arith.constant dense<0.000000e+00> : vector<5x16x16xf32>
    %92 = tpu.matmul %85, %88, %cst_23 {dimension_numbers = #tpu.dot_dimension_numbers<[2], [2], [1], [1], [0, 0, 0, 1, 1, 1], [0], [0]>} : vector<5x16x8xbf16>, vector<5x16x8xbf16>, vector<5x16x16xf32> -> vector<5x16x16xf32>
    "tpu.trace_stop"() : () -> ()
    %93 = vector.extract_strided_slice %26 {offsets = [0, 2, 0, 0], sizes = [1, 1, 16, 16], strides = [1, 1, 1, 1]} : vector<1x4x16x16xf32> to vector<1x1x16x16xf32>
    %94 = vector.shape_cast %93 : vector<1x1x16x16xf32> to vector<16x16xf32>
    %95 = vector.shape_cast %94 : vector<16x16xf32> to vector<1x16x16xf32>
    %96 = vector.broadcast %95 : vector<1x16x16xf32> to vector<5x16x16xf32>
    %97 = arith.addf %92, %96 : vector<5x16x16xf32>
    %cst_24 = arith.constant dense<0xFF800000> : vector<5x16xf32>
    %98 = vector.multi_reduction <maximumf>, %97, %cst_24 [2] : vector<5x16x16xf32> to vector<5x16xf32>
    %99 = vector.shape_cast %98 : vector<5x16xf32> to vector<5x16x1xf32>
    %100 = vector.broadcast %99 : vector<5x16x1xf32> to vector<5x16x16xf32>
    %101 = arith.subf %97, %100 : vector<5x16x16xf32>
    %102 = math.exp %101 : vector<5x16x16xf32>
    %cst_25 = arith.constant dense<0.000000e+00> : vector<5x16xf32>
    %103 = vector.multi_reduction <add>, %102, %cst_25 [2] : vector<5x16x16xf32> to vector<5x16xf32>
    %104 = vector.shape_cast %103 : vector<5x16xf32> to vector<5x16x1xf32>
    %105 = tpu.reciprocal %104 {approx = true} : vector<5x16x1xf32> -> vector<5x16x1xf32>
    %106 = vector.broadcast %105 : vector<5x16x1xf32> to vector<5x16x16xf32>
    %107 = arith.mulf %102, %106 : vector<5x16x16xf32>
    %108 = arith.truncf %107 : vector<5x16x16xf32> to vector<5x16x16xbf16>
    "tpu.trace_start"() <{level = 10 : i32, message = "wqk,wkd->wqd"}> : () -> ()
    %cst_26 = arith.constant dense<0.000000e+00> : vector<5x16x8xf32>
    %109 = tpu.matmul %108, %91, %cst_26 {dimension_numbers = #tpu.dot_dimension_numbers<[2], [1], [1], [2], [0, 0, 0, 1, 1, 2], [0], [0]>} : vector<5x16x16xbf16>, vector<5x16x8xbf16>, vector<5x16x8xf32> -> vector<5x16x8xf32>
    "tpu.trace_stop"() : () -> ()
    %110 = vector.shape_cast %109 : vector<5x16x8xf32> to vector<80x8xf32>
    %111 = vector.extract_strided_slice %25 {offsets = [0, 24], sizes = [80, 8], strides = [1, 1]} : vector<80x96xf32> to vector<80x8xf32>
    %112 = vector.shape_cast %111 : vector<80x8xf32> to vector<5x16x8xf32>
    %113 = arith.truncf %112 : vector<5x16x8xf32> to vector<5x16x8xbf16>
    %114 = vector.extract_strided_slice %25 {offsets = [0, 56], sizes = [80, 8], strides = [1, 1]} : vector<80x96xf32> to vector<80x8xf32>
    %115 = vector.shape_cast %114 : vector<80x8xf32> to vector<5x16x8xf32>
    %116 = arith.truncf %115 : vector<5x16x8xf32> to vector<5x16x8xbf16>
    %117 = vector.extract_strided_slice %25 {offsets = [0, 88], sizes = [80, 8], strides = [1, 1]} : vector<80x96xf32> to vector<80x8xf32>
    %118 = vector.shape_cast %117 : vector<80x8xf32> to vector<5x16x8xf32>
    %119 = arith.truncf %118 : vector<5x16x8xf32> to vector<5x16x8xbf16>
    "tpu.trace_start"() <{level = 10 : i32, message = "wqd,wkd->wqk"}> : () -> ()
    %cst_27 = arith.constant dense<0.000000e+00> : vector<5x16x16xf32>
    %120 = tpu.matmul %113, %116, %cst_27 {dimension_numbers = #tpu.dot_dimension_numbers<[2], [2], [1], [1], [0, 0, 0, 1, 1, 1], [0], [0]>} : vector<5x16x8xbf16>, vector<5x16x8xbf16>, vector<5x16x16xf32> -> vector<5x16x16xf32>
    "tpu.trace_stop"() : () -> ()
    %121 = vector.extract_strided_slice %26 {offsets = [0, 3, 0, 0], sizes = [1, 1, 16, 16], strides = [1, 1, 1, 1]} : vector<1x4x16x16xf32> to vector<1x1x16x16xf32>
    %122 = vector.shape_cast %121 : vector<1x1x16x16xf32> to vector<16x16xf32>
    %123 = vector.shape_cast %122 : vector<16x16xf32> to vector<1x16x16xf32>
    %124 = vector.broadcast %123 : vector<1x16x16xf32> to vector<5x16x16xf32>
    %125 = arith.addf %120, %124 : vector<5x16x16xf32>
    %cst_28 = arith.constant dense<0xFF800000> : vector<5x16xf32>
    %126 = vector.multi_reduction <maximumf>, %125, %cst_28 [2] : vector<5x16x16xf32> to vector<5x16xf32>
    %127 = vector.shape_cast %126 : vector<5x16xf32> to vector<5x16x1xf32>
    %128 = vector.broadcast %127 : vector<5x16x1xf32> to vector<5x16x16xf32>
    %129 = arith.subf %125, %128 : vector<5x16x16xf32>
    %130 = math.exp %129 : vector<5x16x16xf32>
    %cst_29 = arith.constant dense<0.000000e+00> : vector<5x16xf32>
    %131 = vector.multi_reduction <add>, %130, %cst_29 [2] : vector<5x16x16xf32> to vector<5x16xf32>
    %132 = vector.shape_cast %131 : vector<5x16xf32> to vector<5x16x1xf32>
    %133 = tpu.reciprocal %132 {approx = true} : vector<5x16x1xf32> -> vector<5x16x1xf32>
    %134 = vector.broadcast %133 : vector<5x16x1xf32> to vector<5x16x16xf32>
    %135 = arith.mulf %130, %134 : vector<5x16x16xf32>
    %136 = arith.truncf %135 : vector<5x16x16xf32> to vector<5x16x16xbf16>
    "tpu.trace_start"() <{level = 10 : i32, message = "wqk,wkd->wqd"}> : () -> ()
    %cst_30 = arith.constant dense<0.000000e+00> : vector<5x16x8xf32>
    %137 = tpu.matmul %136, %119, %cst_30 {dimension_numbers = #tpu.dot_dimension_numbers<[2], [1], [1], [2], [0, 0, 0, 1, 1, 2], [0], [0]>} : vector<5x16x16xbf16>, vector<5x16x8xbf16>, vector<5x16x8xf32> -> vector<5x16x8xf32>
    "tpu.trace_stop"() : () -> ()
    %138 = vector.shape_cast %137 : vector<5x16x8xf32> to vector<80x8xf32>
    %139 = tpu.concatenate %54, %82, %110, %138 in 1 : vector<80x8xf32>, vector<80x8xf32>, vector<80x8xf32>, vector<80x8xf32> -> vector<80x32xf32>
    %140 = arith.truncf %139 : vector<80x32xf32> to vector<80x32xbf16>
    %c0_31 = arith.constant 0 : index
    %c0_32 = arith.constant 0 : index
    %141 = vector.load %arg4[%c0_31, %c0_32] : memref<32x32xbf16, #tpu.memory_space<vmem>>, vector<32x32xbf16>
    %cst_33 = arith.constant dense<0.000000e+00> : vector<80x32xf32>
    %142 = tpu.matmul %140, %141, %cst_33 {dimension_numbers = #tpu.dot_dimension_numbers<[1], [0], [0], [1], [0, 0, 1, 1], [], []>} : vector<80x32xbf16>, vector<32x32xbf16>, vector<80x32xf32> -> vector<80x32xf32>
    %c0_34 = arith.constant 0 : index
    %c0_35 = arith.constant 0 : index
    %143 = vector.load %arg5[%c0_34, %c0_35] : memref<1x32xf32, #tpu.memory_space<vmem>>, vector<1x32xf32>
    %144 = vector.broadcast %143 : vector<1x32xf32> to vector<80x32xf32>
    %145 = arith.addf %142, %144 : vector<80x32xf32>
    %146 = arith.addf %145, %1 : vector<80x32xf32>
    %147 = vector.shape_cast %146 : vector<80x32xf32> to vector<5x16x32xf32>
    %c0_36 = arith.constant 0 : index
    %c0_37 = arith.constant 0 : index
    %c0_38 = arith.constant 0 : index
    %148 = vector.load %arg7[%c0_36, %c0_37, %c0_38] : memref<5x16x32xf32, #tpu.memory_space<vmem>>, vector<5x16x32xf32>
    tpu.vector_store %arg7[%c0_36, %c0_37, %c0_38], %147 {strides = array<i32>} : memref<5x16x32xf32, #tpu.memory_space<vmem>>, vector<5x16x32xf32>,
    return
  }
  func.func @transform_0(%arg0: i32) -> (i32, i32, i32) {
    %c0_i32 = arith.constant 0 : i32
    %c0_i32_0 = arith.constant 0 : i32
    %c0_i32_1 = arith.constant 0 : i32
    return %arg0, %c0_i32, %c0_i32_0 : i32, i32, i32
  }
  func.func @transform_1(%arg0: i32) -> (i32, i32) {
    %c0_i32 = arith.constant 0 : i32
    %c0_i32_0 = arith.constant 0 : i32
    %c0_i32_1 = arith.constant 0 : i32
    return %c0_i32, %c0_i32_0 : i32, i32
  }
  func.func @transform_2(%arg0: i32) -> (i32, i32) {
    %c0_i32 = arith.constant 0 : i32
    %c0_i32_0 = arith.constant 0 : i32
    %c0_i32_1 = arith.constant 0 : i32
    return %c0_i32, %c0_i32_0 : i32, i32
  }
  func.func @transform_3(%arg0: i32) -> (i32, i32) {
    %c0_i32 = arith.constant 0 : i32
    %c0_i32_0 = arith.constant 0 : i32
    %c0_i32_1 = arith.constant 0 : i32
    return %c0_i32, %c0_i32_0 : i32, i32
  }
  func.func @transform_4(%arg0: i32) -> (i32, i32) {
    %c0_i32 = arith.constant 0 : i32
    %c0_i32_0 = arith.constant 0 : i32
    %c0_i32_1 = arith.constant 0 : i32
    return %c0_i32, %c0_i32_0 : i32, i32
  }
  func.func @transform_5(%arg0: i32) -> (i32, i32, i32, i32) {
    %c0_i32 = arith.constant 0 : i32
    %c0_i32_0 = arith.constant 0 : i32
    %c0_i32_1 = arith.constant 0 : i32
    %c0_i32_2 = arith.constant 0 : i32
    %c0_i32_3 = arith.constant 0 : i32
    return %c0_i32, %c0_i32_0, %c0_i32_1, %c0_i32_2 : i32, i32, i32, i32
  }
  func.func @transform_6(%arg0: i32) -> (i32, i32, i32) {
    %c0_i32 = arith.constant 0 : i32
    %c0_i32_0 = arith.constant 0 : i32
    %c0_i32_1 = arith.constant 0 : i32
    return %arg0, %c0_i32, %c0_i32_0 : i32, i32, i32
  }
}

module attributes {stable_mosaic.version = 11 : i64} {
  func.func @_mlp_kernel(%arg0: i32, %arg1: memref<64x32xf32, #tpu.memory_space<vmem>>, %arg2: memref<32x64xbf16, #tpu.memory_space<vmem>>, %arg3: memref<1x64xf32, #tpu.memory_space<vmem>>, %arg4: memref<64x32xbf16, #tpu.memory_space<vmem>>, %arg5: memref<1x32xf32, #tpu.memory_space<vmem>>, %arg6: memref<64x32xf32, #tpu.memory_space<vmem>>) attributes {dimension_semantics = [#tpu.dimension_semantics<parallel>], iteration_bounds = array<i64: 2>, scalar_prefetch = 0 : i64, scratch_operands = 0 : i64, tpu.core_type = #tpu.core_type<tc>, window_params = [{transform_indices = @transform_0, window_bounds = array<i64: 64, 32>}, {pipeline_mode = #tpu.pipeline_mode<synchronous>, transform_indices = @transform_1, window_bounds = array<i64: 32, 64>}, {pipeline_mode = #tpu.pipeline_mode<synchronous>, transform_indices = @transform_2, window_bounds = array<i64: 1, 64>}, {pipeline_mode = #tpu.pipeline_mode<synchronous>, transform_indices = @transform_3, window_bounds = array<i64: 64, 32>}, {pipeline_mode = #tpu.pipeline_mode<synchronous>, transform_indices = @transform_4, window_bounds = array<i64: 1, 32>}, {transform_indices = @transform_5, window_bounds = array<i64: 64, 32>}]} {
    %c0 = arith.constant 0 : index
    %c0_0 = arith.constant 0 : index
    %0 = vector.load %arg1[%c0, %c0_0] : memref<64x32xf32, #tpu.memory_space<vmem>>, vector<64x32xf32>
    %cst = arith.constant dense<0.000000e+00> : vector<64xf32>
    %1 = vector.multi_reduction <add>, %0, %cst [1] : vector<64x32xf32> to vector<64xf32>
    %2 = vector.shape_cast %1 : vector<64xf32> to vector<64x1xf32>
    %cst_1 = arith.constant 3.200000e+01 : f32
    %3 = vector.broadcast %cst_1 : f32 to vector<64x1xf32>
    %4 = arith.divf %2, %3 : vector<64x1xf32>
    %5 = vector.broadcast %4 : vector<64x1xf32> to vector<64x32xf32>
    %6 = arith.subf %0, %5 : vector<64x32xf32>
    %7 = arith.mulf %6, %6 : vector<64x32xf32>
    %cst_2 = arith.constant dense<0.000000e+00> : vector<64xf32>
    %8 = vector.multi_reduction <add>, %7, %cst_2 [1] : vector<64x32xf32> to vector<64xf32>
    %9 = vector.shape_cast %8 : vector<64xf32> to vector<64x1xf32>
    %cst_3 = arith.constant 3.200000e+01 : f32
    %10 = vector.broadcast %cst_3 : f32 to vector<64x1xf32>
    %11 = arith.divf %9, %10 : vector<64x1xf32>
    %12 = vector.broadcast %4 : vector<64x1xf32> to vector<64x32xf32>
    %13 = arith.subf %0, %12 : vector<64x32xf32>
    %cst_4 = arith.constant 9.99999974E-6 : f32
    %14 = vector.broadcast %cst_4 : f32 to vector<64x1xf32>
    %15 = arith.addf %11, %14 : vector<64x1xf32>
    %16 = math.rsqrt %15 : vector<64x1xf32>
    %17 = vector.broadcast %16 : vector<64x1xf32> to vector<64x32xf32>
    %18 = arith.mulf %13, %17 : vector<64x32xf32>
    %19 = arith.truncf %18 : vector<64x32xf32> to vector<64x32xbf16>
    %c0_5 = arith.constant 0 : index
    %c0_6 = arith.constant 0 : index
    %20 = vector.load %arg2[%c0_5, %c0_6] : memref<32x64xbf16, #tpu.memory_space<vmem>>, vector<32x64xbf16>
    %cst_7 = arith.constant dense<0.000000e+00> : vector<64x64xf32>
    %21 = tpu.matmul %19, %20, %cst_7 {dimension_numbers = #tpu.dot_dimension_numbers<[1], [0], [0], [1], [0, 0, 1, 1], [], []>} : vector<64x32xbf16>, vector<32x64xbf16>, vector<64x64xf32> -> vector<64x64xf32>
    %c0_8 = arith.constant 0 : index
    %c0_9 = arith.constant 0 : index
    %22 = vector.load %arg3[%c0_8, %c0_9] : memref<1x64xf32, #tpu.memory_space<vmem>>, vector<1x64xf32>
    %23 = vector.broadcast %22 : vector<1x64xf32> to vector<64x64xf32>
    %24 = arith.addf %21, %23 : vector<64x64xf32>
    %cst_10 = arith.constant 5.000000e-01 : f32
    %25 = vector.broadcast %cst_10 : f32 to vector<64x64xf32>
    %26 = arith.mulf %25, %24 : vector<64x64xf32>
    %cst_11 = arith.constant 0.707106769 : f32
    %27 = vector.broadcast %cst_11 : f32 to vector<64x64xf32>
    %28 = arith.mulf %24, %27 : vector<64x64xf32>
    %cst_12 = arith.constant -4.000000e+00 : f32
    %cst_13 = arith.constant 4.000000e+00 : f32
    %29 = vector.broadcast %cst_12 : f32 to vector<64x64xf32>
    %30 = arith.maximumf %29, %28 : vector<64x64xf32>
    %31 = vector.broadcast %cst_13 : f32 to vector<64x64xf32>
    %32 = arith.minimumf %31, %30 : vector<64x64xf32>
    %33 = arith.mulf %32, %32 : vector<64x64xf32>
    %cst_14 = arith.constant 2.29050653E-4 : f32
    %34 = vector.broadcast %cst_14 : f32 to vector<64x64xf32>
    %35 = arith.mulf %34, %33 : vector<64x64xf32>
    %cst_15 = arith.constant 0.00340829091 : f32
    %36 = vector.broadcast %cst_15 : f32 to vector<64x64xf32>
    %37 = arith.addf %35, %36 : vector<64x64xf32>
    %38 = arith.mulf %37, %33 : vector<64x64xf32>
    %cst_16 = arith.constant 0.0509556942 : f32
    %39 = vector.broadcast %cst_16 : f32 to vector<64x64xf32>
    %40 = arith.addf %38, %39 : vector<64x64xf32>
    %41 = arith.mulf %40, %33 : vector<64x64xf32>
    %cst_17 = arith.constant 0.185208321 : f32
    %42 = vector.broadcast %cst_17 : f32 to vector<64x64xf32>
    %43 = arith.addf %41, %42 : vector<64x64xf32>
    %44 = arith.mulf %43, %33 : vector<64x64xf32>
    %cst_18 = arith.constant 1.12837911 : f32
    %45 = vector.broadcast %cst_18 : f32 to vector<64x64xf32>
    %46 = arith.addf %44, %45 : vector<64x64xf32>
    %cst_19 = arith.constant -1.17916031E-7 : f32
    %47 = vector.broadcast %cst_19 : f32 to vector<64x64xf32>
    %48 = arith.mulf %47, %33 : vector<64x64xf32>
    %cst_20 = arith.constant 2.35479656E-5 : f32
    %49 = vector.broadcast %cst_20 : f32 to vector<64x64xf32>
    %50 = arith.addf %48, %49 : vector<64x64xf32>
    %51 = arith.mulf %50, %33 : vector<64x64xf32>
    %cst_21 = arith.constant 0.00101796258 : f32
    %52 = vector.broadcast %cst_21 : f32 to vector<64x64xf32>
    %53 = arith.addf %51, %52 : vector<64x64xf32>
    %54 = arith.mulf %53, %33 : vector<64x64xf32>
    %cst_22 = arith.constant 0.0140704699 : f32
    %55 = vector.broadcast %cst_22 : f32 to vector<64x64xf32>
    %56 = arith.addf %54, %55 : vector<64x64xf32>
    %57 = arith.mulf %56, %33 : vector<64x64xf32>
    %cst_23 = arith.constant 0.110985048 : f32
    %58 = vector.broadcast %cst_23 : f32 to vector<64x64xf32>
    %59 = arith.addf %57, %58 : vector<64x64xf32>
    %60 = arith.mulf %59, %33 : vector<64x64xf32>
    %cst_24 = arith.constant 0.497469246 : f32
    %61 = vector.broadcast %cst_24 : f32 to vector<64x64xf32>
    %62 = arith.addf %60, %61 : vector<64x64xf32>
    %63 = arith.mulf %62, %33 : vector<64x64xf32>
    %cst_25 = arith.constant 1.000000e+00 : f32
    %64 = vector.broadcast %cst_25 : f32 to vector<64x64xf32>
    %65 = arith.addf %63, %64 : vector<64x64xf32>
    %66 = arith.mulf %32, %46 : vector<64x64xf32>
    %67 = arith.divf %66, %65 : vector<64x64xf32>
    %cst_26 = arith.constant 1.000000e+00 : f32
    %68 = vector.broadcast %cst_26 : f32 to vector<64x64xf32>
    %69 = arith.addf %68, %67 : vector<64x64xf32>
    %70 = arith.mulf %26, %69 : vector<64x64xf32>
    %71 = arith.truncf %70 : vector<64x64xf32> to vector<64x64xbf16>
    %c0_27 = arith.constant 0 : index
    %c0_28 = arith.constant 0 : index
    %72 = vector.load %arg4[%c0_27, %c0_28] : memref<64x32xbf16, #tpu.memory_space<vmem>>, vector<64x32xbf16>
    %cst_29 = arith.constant dense<0.000000e+00> : vector<64x32xf32>
    %73 = tpu.matmul %71, %72, %cst_29 {dimension_numbers = #tpu.dot_dimension_numbers<[1], [0], [0], [1], [0, 0, 1, 1], [], []>} : vector<64x64xbf16>, vector<64x32xbf16>, vector<64x32xf32> -> vector<64x32xf32>
    %c0_30 = arith.constant 0 : index
    %c0_31 = arith.constant 0 : index
    %74 = vector.load %arg5[%c0_30, %c0_31] : memref<1x32xf32, #tpu.memory_space<vmem>>, vector<1x32xf32>
    %75 = vector.broadcast %74 : vector<1x32xf32> to vector<64x32xf32>
    %76 = arith.addf %73, %75 : vector<64x32xf32>
    %cst_32 = arith.constant 5.000000e-01 : f32
    %77 = vector.broadcast %cst_32 : f32 to vector<64x32xf32>
    %78 = arith.mulf %77, %76 : vector<64x32xf32>
    %cst_33 = arith.constant 0.707106769 : f32
    %79 = vector.broadcast %cst_33 : f32 to vector<64x32xf32>
    %80 = arith.mulf %76, %79 : vector<64x32xf32>
    %cst_34 = arith.constant -4.000000e+00 : f32
    %cst_35 = arith.constant 4.000000e+00 : f32
    %81 = vector.broadcast %cst_34 : f32 to vector<64x32xf32>
    %82 = arith.maximumf %81, %80 : vector<64x32xf32>
    %83 = vector.broadcast %cst_35 : f32 to vector<64x32xf32>
    %84 = arith.minimumf %83, %82 : vector<64x32xf32>
    %85 = arith.mulf %84, %84 : vector<64x32xf32>
    %cst_36 = arith.constant 2.29050653E-4 : f32
    %86 = vector.broadcast %cst_36 : f32 to vector<64x32xf32>
    %87 = arith.mulf %86, %85 : vector<64x32xf32>
    %cst_37 = arith.constant 0.00340829091 : f32
    %88 = vector.broadcast %cst_37 : f32 to vector<64x32xf32>
    %89 = arith.addf %87, %88 : vector<64x32xf32>
    %90 = arith.mulf %89, %85 : vector<64x32xf32>
    %cst_38 = arith.constant 0.0509556942 : f32
    %91 = vector.broadcast %cst_38 : f32 to vector<64x32xf32>
    %92 = arith.addf %90, %91 : vector<64x32xf32>
    %93 = arith.mulf %92, %85 : vector<64x32xf32>
    %cst_39 = arith.constant 0.185208321 : f32
    %94 = vector.broadcast %cst_39 : f32 to vector<64x32xf32>
    %95 = arith.addf %93, %94 : vector<64x32xf32>
    %96 = arith.mulf %95, %85 : vector<64x32xf32>
    %cst_40 = arith.constant 1.12837911 : f32
    %97 = vector.broadcast %cst_40 : f32 to vector<64x32xf32>
    %98 = arith.addf %96, %97 : vector<64x32xf32>
    %cst_41 = arith.constant -1.17916031E-7 : f32
    %99 = vector.broadcast %cst_41 : f32 to vector<64x32xf32>
    %100 = arith.mulf %99, %85 : vector<64x32xf32>
    %cst_42 = arith.constant 2.35479656E-5 : f32
    %101 = vector.broadcast %cst_42 : f32 to vector<64x32xf32>
    %102 = arith.addf %100, %101 : vector<64x32xf32>
    %103 = arith.mulf %102, %85 : vector<64x32xf32>
    %cst_43 = arith.constant 0.00101796258 : f32
    %104 = vector.broadcast %cst_43 : f32 to vector<64x32xf32>
    %105 = arith.addf %103, %104 : vector<64x32xf32>
    %106 = arith.mulf %105, %85 : vector<64x32xf32>
    %cst_44 = arith.constant 0.0140704699 : f32
    %107 = vector.broadcast %cst_44 : f32 to vector<64x32xf32>
    %108 = arith.addf %106, %107 : vector<64x32xf32>
    %109 = arith.mulf %108, %85 : vector<64x32xf32>
    %cst_45 = arith.constant 0.110985048 : f32
    %110 = vector.broadcast %cst_45 : f32 to vector<64x32xf32>
    %111 = arith.addf %109, %110 : vector<64x32xf32>
    %112 = arith.mulf %111, %85 : vector<64x32xf32>
    %cst_46 = arith.constant 0.497469246 : f32
    %113 = vector.broadcast %cst_46 : f32 to vector<64x32xf32>
    %114 = arith.addf %112, %113 : vector<64x32xf32>
    %115 = arith.mulf %114, %85 : vector<64x32xf32>
    %cst_47 = arith.constant 1.000000e+00 : f32
    %116 = vector.broadcast %cst_47 : f32 to vector<64x32xf32>
    %117 = arith.addf %115, %116 : vector<64x32xf32>
    %118 = arith.mulf %84, %98 : vector<64x32xf32>
    %119 = arith.divf %118, %117 : vector<64x32xf32>
    %cst_48 = arith.constant 1.000000e+00 : f32
    %120 = vector.broadcast %cst_48 : f32 to vector<64x32xf32>
    %121 = arith.addf %120, %119 : vector<64x32xf32>
    %122 = arith.mulf %78, %121 : vector<64x32xf32>
    %123 = arith.addf %0, %122 : vector<64x32xf32>
    %c0_49 = arith.constant 0 : index
    %c0_50 = arith.constant 0 : index
    %124 = vector.load %arg6[%c0_49, %c0_50] : memref<64x32xf32, #tpu.memory_space<vmem>>, vector<64x32xf32>
    tpu.vector_store %arg6[%c0_49, %c0_50], %123 {strides = array<i32>} : memref<64x32xf32, #tpu.memory_space<vmem>>, vector<64x32xf32>,
    return
  }
  func.func @transform_0(%arg0: i32) -> (i32, i32) {
    %c0_i32 = arith.constant 0 : i32
    %c0_i32_0 = arith.constant 0 : i32
    return %arg0, %c0_i32 : i32, i32
  }
  func.func @transform_1(%arg0: i32) -> (i32, i32) {
    %c0_i32 = arith.constant 0 : i32
    %c0_i32_0 = arith.constant 0 : i32
    %c0_i32_1 = arith.constant 0 : i32
    return %c0_i32, %c0_i32_0 : i32, i32
  }
  func.func @transform_2(%arg0: i32) -> (i32, i32) {
    %c0_i32 = arith.constant 0 : i32
    %c0_i32_0 = arith.constant 0 : i32
    %c0_i32_1 = arith.constant 0 : i32
    return %c0_i32, %c0_i32_0 : i32, i32
  }
  func.func @transform_3(%arg0: i32) -> (i32, i32) {
    %c0_i32 = arith.constant 0 : i32
    %c0_i32_0 = arith.constant 0 : i32
    %c0_i32_1 = arith.constant 0 : i32
    return %c0_i32, %c0_i32_0 : i32, i32
  }
  func.func @transform_4(%arg0: i32) -> (i32, i32) {
    %c0_i32 = arith.constant 0 : i32
    %c0_i32_0 = arith.constant 0 : i32
    %c0_i32_1 = arith.constant 0 : i32
    return %c0_i32, %c0_i32_0 : i32, i32
  }
  func.func @transform_5(%arg0: i32) -> (i32, i32) {
    %c0_i32 = arith.constant 0 : i32
    %c0_i32_0 = arith.constant 0 : i32
    return %arg0, %c0_i32 : i32, i32
  }
}

</mosaic_0001>

<llo_original>
// kernel: swin_layer_forward.3
$region0: #{swin_layer_forward.3}
  #allocation0 [shape = 'u32[]', space=smem, size = 0x4, offset = 0x4, fixed_abs, tag = 'smem constant byte address 0x4 - core index']
  #allocation1 [shape = 'u32[144,128]{1,0:T(1,128)}', space=vmem, size = 0x12000, scoped, tag = 'internal scratch']
  %s0 = inlined_call_operand.hbm [shape: f32[128,32], index: 0, kind: input, shape index: {}]
  %s1 = inlined_call_operand.hbm [shape: bf16[32,64], index: 1, kind: input, shape index: {}]
  %s2 = inlined_call_operand.hbm [shape: f32[1,64], index: 2, kind: input, shape index: {}]
  %s3 = inlined_call_operand.hbm [shape: bf16[64,32], index: 3, kind: input, shape index: {}]
  %s4 = inlined_call_operand.hbm [shape: f32[1,32], index: 4, kind: input, shape index: {}]
  %s5 = inlined_call_operand.hbm [shape: f32[128,32], index: 5, kind: output, shape index: {}]
  %s6 = sld [smem:[#allocation0]]
  $region73: #{swin_layer_forward.3} parent=0
    _
  %s8 = ssub.s32 1, %s6
  %s9 = scalar_select 0, %s8, %s6
  $region1: #{swin_layer_forward.3} parent=0
    #allocation2 [shape = 'u8[65536]{0}', space=vmem, size = 0x10000, scoped, tag = 'input window, operand 0']
    #allocation3 [shape = 's32[2]{0}', space=sflag, size = 0x8, scoped, tag = 'scoped memory for swin_layer_forward.3']
    #allocation4 [shape = 's32[2]{0}', space=sflag, size = 0x8, scoped, tag = 'scoped memory for swin_layer_forward.3']
    #allocation5 [shape = 'u8[8192]{0}', space=vmem, size = 0x2000, scoped, tag = 'input window, operand 1, single buffered']
    #allocation6 [shape = 's32[1]{0}', space=sflag, size = 0x4, scoped, tag = 'scoped memory for swin_layer_forward.3']
    #allocation7 [shape = 'u8[512]{0}', space=vmem, size = 0x400, scoped, tag = 'input window, operand 2, single buffered']
    #allocation8 [shape = 'u8[16384]{0}', space=vmem, size = 0x4000, scoped, tag = 'input window, operand 3, single buffered']
    #allocation9 [shape = 's32[1]{0}', space=sflag, size = 0x4, scoped, tag = 'scoped memory for swin_layer_forward.3']
    #allocation10 [shape = 'u8[512]{0}', space=vmem, size = 0x400, scoped, tag = 'input window, operand 4, single buffered']
    #allocation11 [shape = 'u8[65536]{0}', space=vmem, size = 0x10000, scoped, tag = 'output window, operand 0']
    %10 = vsyncpa [#allocation3], 0
    %s11 = scalar_lea.sflag [#allocation3], 1
    %12 = vsyncpa %s11, 0
    %13 = vsyncpa [#allocation6], 0
    %14 = vsyncpa [#allocation9], 0
    %15 = vsyncpa [#allocation4], 0
    %s16 = scalar_lea.sflag [#allocation4], 1
    %17 = vsyncpa %s16, 0
    loop: start=0, step=1, limit=4
    $region2: #{swin_layer_forward.3} parent=1 // loop_pre_header
      _
    $region3: #{swin_layer_forward.3} parent=1 // loop_header
      %s19 = sphi 0, %s23
      %p20 = scmp.ge.s32.totalorder %s19, 4
      %s29 = sphi 0, %s31
      %s32 = sphi 0, %s29
      %s33 = sphi 0, %s32
      %s49 = sphi 0, %s33
      %s53 = sphi 0, %s53
      %s55 = sphi 0, %s53
      %s56 = sphi 0, %s55
      %s70 = sphi 0, %s56
      %s74 = sphi 0, %s74
      %s76 = sphi 0, %s74
      %s77 = sphi 0, %s76
      %s91 = sphi 0, %s77
      %s95 = sphi 0, %s95
      %s97 = sphi 0, %s95
      %s98 = sphi 0, %s97
      %s112 = sphi 0, %s98
      %s116 = sphi 0, %s116
      %s118 = sphi 0, %s116
      %s119 = sphi 0, %s118
      %s133 = sphi 0, %s119
      %s139 = sphi 0, %s141
      %s142 = sphi 0, %s139
      %s143 = sphi 0, %s142
      %s159 = sphi 0, %s143
    $region4: #{swin_layer_forward.3} parent=1 // loop_header_branch
      %22 = sbr.rel (%p20) target = $region8
    $region5: #{swin_layer_forward.3} parent=1 // loop_body
      %s24 = ssub.s32 %s19, 1
      %s25 = ssub.s32 %s19, 2
      %s26 = sadd.s32 %s19, 1
      %s27 = ssub.s32 %s19, %s26
      %p28 = scmp.eq.s32.totalorder %s27, 0
      %s30 = sadd.s32 %s29, 1
      %s31 = scalar_select %p28, %s29, %s30
      %p34 = pneg %p28
      %p35 = scmp.eq.s32.totalorder %s19, 1
      %p36 = por %p34, %p35
      %p37 = scmp.ne.s32.totalorder %s29, %s32
      %p38 = scmp.eq.s32.totalorder %s19, 0
      %p39 = por %p37, %p38
      %p40 = scmp.ne.s32.totalorder %s29, %s32
      %p41 = scmp.eq.s32.totalorder %s24, 1
      %p42 = por %p40, %p41
      %p43 = scmp.ne.s32.totalorder %s32, %s33
      %p44 = scmp.eq.s32.totalorder %s24, 0
      %p45 = por %p43, %p44
      %p46 = scmp.ne.s32.totalorder %s32, %s33
      %p47 = scmp.eq.s32.totalorder %s25, 1
      %p48 = por %p46, %p47
      %p50 = scmp.ne.s32.totalorder %s33, %s49
      %p51 = scmp.eq.s32.totalorder %s25, 0
      %p52 = por %p50, %p51
      %s54 = sadd.s32 %s53, 1
      %p57 = scmp.eq.s32.totalorder %s19, 1
      %p58 = scmp.ne.s32.totalorder %s53, %s55
      %p59 = scmp.eq.s32.totalorder %s19, 0
      %p60 = por %p58, %p59
      %p61 = scmp.ne.s32.totalorder %s53, %s55
      %p62 = scmp.eq.s32.totalorder %s24, 1
      %p63 = por %p61, %p62
      %p64 = scmp.ne.s32.totalorder %s55, %s56
      %p65 = scmp.eq.s32.totalorder %s24, 0
      %p66 = por %p64, %p65
      %p67 = scmp.ne.s32.totalorder %s55, %s56
      %p68 = scmp.eq.s32.totalorder %s25, 1
      %p69 = por %p67, %p68
      %p71 = scmp.ne.s32.totalorder %s56, %s70
      %p72 = scmp.eq.s32.totalorder %s25, 0
      %p73 = por %p71, %p72
      %s75 = sadd.s32 %s74, 1
      %p78 = scmp.eq.s32.totalorder %s19, 1
      %p79 = scmp.ne.s32.totalorder %s74, %s76
      %p80 = scmp.eq.s32.totalorder %s19, 0
      %p81 = por %p79, %p80
      %p82 = scmp.ne.s32.totalorder %s74, %s76
      %p83 = scmp.eq.s32.totalorder %s24, 1
      %p84 = por %p82, %p83
      %p85 = scmp.ne.s32.totalorder %s76, %s77
      %p86 = scmp.eq.s32.totalorder %s24, 0
      %p87 = por %p85, %p86
      %p88 = scmp.ne.s32.totalorder %s76, %s77
      %p89 = scmp.eq.s32.totalorder %s25, 1
      %p90 = por %p88, %p89
      %p92 = scmp.ne.s32.totalorder %s77, %s91
      %p93 = scmp.eq.s32.totalorder %s25, 0
      %p94 = por %p92, %p93
      %s96 = sadd.s32 %s95, 1
      %p99 = scmp.eq.s32.totalorder %s19, 1
      %p100 = scmp.ne.s32.totalorder %s95, %s97
      %p101 = scmp.eq.s32.totalorder %s19, 0
      %p102 = por %p100, %p101
      %p103 = scmp.ne.s32.totalorder %s95, %s97
      %p104 = scmp.eq.s32.totalorder %s24, 1
      %p105 = por %p103, %p104
      %p106 = scmp.ne.s32.totalorder %s97, %s98
      %p107 = scmp.eq.s32.totalorder %s24, 0
      %p108 = por %p106, %p107
      %p109 = scmp.ne.s32.totalorder %s97, %s98
      %p110 = scmp.eq.s32.totalorder %s25, 1
      %p111 = por %p109, %p110
      %p113 = scmp.ne.s32.totalorder %s98, %s112
      %p114 = scmp.eq.s32.totalorder %s25, 0
      %p115 = por %p113, %p114
      %s117 = sadd.s32 %s116, 1
      %p120 = scmp.eq.s32.totalorder %s19, 1
      %p121 = scmp.ne.s32.totalorder %s116, %s118
      %p122 = scmp.eq.s32.totalorder %s19, 0
      %p123 = por %p121, %p122
      %p124 = scmp.ne.s32.totalorder %s116, %s118
      %p125 = scmp.eq.s32.totalorder %s24, 1
      %p126 = por %p124, %p125
      %p127 = scmp.ne.s32.totalorder %s118, %s119
      %p128 = scmp.eq.s32.totalorder %s24, 0
      %p129 = por %p127, %p128
      %p130 = scmp.ne.s32.totalorder %s118, %s119
      %p131 = scmp.eq.s32.totalorder %s25, 1
      %p132 = por %p130, %p131
      %p134 = scmp.ne.s32.totalorder %s119, %s133
      %p135 = scmp.eq.s32.totalorder %s25, 0
      %p136 = por %p134, %p135
      %s137 = ssub.s32 %s19, %s26
      %p138 = scmp.eq.s32.totalorder %s137, 0
      %s140 = sadd.s32 %s139, 1
      %s141 = scalar_select %p138, %s139, %s140
      %p144 = pneg %p138
      %p145 = scmp.eq.s32.totalorder %s19, 1
      %p146 = por %p144, %p145
      %p147 = scmp.ne.s32.totalorder %s139, %s142
      %p148 = scmp.eq.s32.totalorder %s19, 0
      %p149 = por %p147, %p148
      %p150 = scmp.ne.s32.totalorder %s139, %s142
      %p151 = scmp.eq.s32.totalorder %s24, 1
      %p152 = por %p150, %p151
      %p153 = scmp.ne.s32.totalorder %s142, %s143
      %p154 = scmp.eq.s32.totalorder %s24, 0
      %p155 = por %p153, %p154
      %p156 = scmp.ne.s32.totalorder %s142, %s143
      %p157 = scmp.eq.s32.totalorder %s25, 1
      %p158 = por %p156, %p157
      %p160 = scmp.ne.s32.totalorder %s143, %s159
      %p161 = scmp.eq.s32.totalorder %s25, 0
      %p162 = por %p160, %p161
      %p163 = scmp.le.s32.totalorder 1, %s19
      %p164 = scmp.lt.s32.totalorder %s19, 3
      %p165 = pnand %p163, %p164
      %p166 = pneg %p165
      // Predicated region
      $region9: #{swin_layer_forward.3} parent=5 // pred_check
        _
      $region10: #{swin_layer_forward.3} parent=5 // pred_check_branch
        %168 = sbr.rel (%p165) target = $region12
      $region11: #{swin_layer_forward.3} parent=5 // pred_region
        %s169 = ssub.s32 %s19, 1
        // Predicated region
        $region13: #{swin_layer_forward.3} parent=11 // pred_check
          %p170 = pneg %p66
        $region14: #{swin_layer_forward.3} parent=11 // pred_check_branch
          %172 = sbr.rel (%p170) target = $region16
        $region15: #{swin_layer_forward.3} parent=11 // pred_region
          %s174 = ssub.s32 256, 256
          %175 = vsyncadd [#allocation6], %s174
          %s176 = sshll.u32 [#allocation5], 4
          %s177 = int_to_ptr.vmem [resolvable:$true] %s176
          %182 = dma.hbm_to_vmem [thread:$0]  %s1, 256, %s177, [#allocation6], 64, 64, 4
        $region16: #{swin_layer_forward.3} parent=11 // pred_fallthru
          _
        // Predicated region
        $region17: #{swin_layer_forward.3} parent=11 // pred_check
          %p183 = pneg %p87
        $region18: #{swin_layer_forward.3} parent=11 // pred_check_branch
          %185 = sbr.rel (%p183) target = $region20
        $region19: #{swin_layer_forward.3} parent=11 // pred_region
          %s187 = ssub.s32 16, 16
          %188 = vsyncadd [#allocation6], %s187
          %s190 = sshll.u32 [#allocation7], 4
          %s191 = int_to_ptr.vmem [resolvable:$true] %s190
          %193 = dma.hbm_to_vmem [thread:$0]  %s2, 16, %s191, [#allocation6]
        $region20: #{swin_layer_forward.3} parent=11 // pred_fallthru
          _
        // Predicated region
        $region21: #{swin_layer_forward.3} parent=11 // pred_check
          %p194 = pneg %p108
        $region22: #{swin_layer_forward.3} parent=11 // pred_check_branch
          %196 = sbr.rel (%p194) target = $region24
        $region23: #{swin_layer_forward.3} parent=11 // pred_region
          %s198 = ssub.s32 512, 512
          %199 = vsyncadd [#allocation9], %s198
          %s200 = sshll.u32 [#allocation8], 4
          %s201 = int_to_ptr.vmem [resolvable:$true] %s200
          %206 = dma.hbm_to_vmem [thread:$0]  %s3, 512, %s201, [#allocation9], 64, 64, 4
        $region24: #{swin_layer_forward.3} parent=11 // pred_fallthru
          _
        // Predicated region
        $region25: #{swin_layer_forward.3} parent=11 // pred_check
          %p207 = pneg %p129
        $region26: #{swin_layer_forward.3} parent=11 // pred_check_branch
          %209 = sbr.rel (%p207) target = $region28
        $region27: #{swin_layer_forward.3} parent=11 // pred_region
          %s211 = ssub.s32 16, 16
          %212 = vsyncadd [#allocation9], %s211
          %s214 = sshll.u32 [#allocation10], 4
          %s215 = int_to_ptr.vmem [resolvable:$true] %s214
          %217 = dma.hbm_to_vmem [thread:$0]  %s4, 16, %s215, [#allocation9]
        $region28: #{swin_layer_forward.3} parent=11 // pred_fallthru
          _
      $region12: #{swin_layer_forward.3} parent=5 // pred_fallthru
        _
      %p218 = scmp.lt.s32.totalorder %s19, 2
      // Predicated region
      $region29: #{swin_layer_forward.3} parent=5 // pred_check
        %p219 = pneg %p218
      $region30: #{swin_layer_forward.3} parent=5 // pred_check_branch
        %221 = sbr.rel (%p219) target = $region32
      $region31: #{swin_layer_forward.3} parent=5 // pred_region
        // Predicated region
        $region33: #{swin_layer_forward.3} parent=31 // pred_check
          %p222 = pneg %p39
        $region34: #{swin_layer_forward.3} parent=31 // pred_check_branch
          %224 = sbr.rel (%p222) target = $region36
        $region35: #{swin_layer_forward.3} parent=31 // pred_region
          %s225 = sand.u32 %s29, 1
          %s226 = scalar_lea.sflag [#allocation3], %s225
          %s227 = sand.u32 %s29, 1
          %s228 = smul.addr %s227, 64
          %s229 = scalar_lea.vmem [#allocation2], %s228
          %s230 = smul.u32 8, %s19
          %s232 = ssub.s32 1024, 1024
          %233 = vsyncadd %s226, %s232
          %s234 = smul.addr %s230, 128
          %s235 = scalar_lea.hbm %s0, %s234
          %s236 = sshll.u32 %s229, 4
          %s237 = int_to_ptr.vmem [resolvable:$true] %s236
          %242 = dma.hbm_to_vmem [thread:$0]  %s235, 1024, %s237, %s226, 128, 128, 8
        $region36: #{swin_layer_forward.3} parent=31 // pred_fallthru
          _
      $region32: #{swin_layer_forward.3} parent=5 // pred_fallthru
        _
      %p243 = scmp.le.s32.totalorder 1, %s19
      %p244 = scmp.lt.s32.totalorder %s19, 3
      %p245 = pnand %p243, %p244
      %p246 = pneg %p245
      // Predicated region
      $region37: #{swin_layer_forward.3} parent=5 // pred_check
        _
      $region38: #{swin_layer_forward.3} parent=5 // pred_check_branch
        %248 = sbr.rel (%p245) target = $region40
      $region39: #{swin_layer_forward.3} parent=5 // pred_region
        %s249 = ssub.s32 %s19, 1
        %s250 = sand.u32 %s32, 1
        %s251 = scalar_lea.sflag [#allocation3], %s250
        %s252 = sand.u32 %s32, 1
        %s253 = smul.addr %s252, 64
        %s254 = scalar_lea.vmem [#allocation2], %s253
        // Predicated region
        $region41: #{swin_layer_forward.3} parent=39 // pred_check
          %p255 = pneg %p45
        $region42: #{swin_layer_forward.3} parent=39 // pred_check_branch
          %257 = sbr.rel (%p255) target = $region44
        $region43: #{swin_layer_forward.3} parent=39 // pred_region
          %258 = dma.done %s251, 1024
        $region44: #{swin_layer_forward.3} parent=39 // pred_fallthru
          _
        // Predicated region
        $region45: #{swin_layer_forward.3} parent=39 // pred_check
          %p259 = pneg %p66
        $region46: #{swin_layer_forward.3} parent=39 // pred_check_branch
          %261 = sbr.rel (%p259) target = $region48
        $region47: #{swin_layer_forward.3} parent=39 // pred_region
          %262 = dma.done [#allocation6], 256
        $region48: #{swin_layer_forward.3} parent=39 // pred_fallthru
          _
        // Predicated region
        $region49: #{swin_layer_forward.3} parent=39 // pred_check
          %p263 = pneg %p87
        $region50: #{swin_layer_forward.3} parent=39 // pred_check_branch
          %265 = sbr.rel (%p263) target = $region52
        $region51: #{swin_layer_forward.3} parent=39 // pred_region
          %266 = dma.done [#allocation6], 16
        $region52: #{swin_layer_forward.3} parent=39 // pred_fallthru
          _
        // Predicated region
        $region53: #{swin_layer_forward.3} parent=39 // pred_check
          %p267 = pneg %p108
        $region54: #{swin_layer_forward.3} parent=39 // pred_check_branch
          %269 = sbr.rel (%p267) target = $region56
        $region55: #{swin_layer_forward.3} parent=39 // pred_region
          %270 = dma.done [#allocation9], 512
        $region56: #{swin_layer_forward.3} parent=39 // pred_fallthru
          _
        // Predicated region
        $region57: #{swin_layer_forward.3} parent=39 // pred_check
          %p271 = pneg %p129
        $region58: #{swin_layer_forward.3} parent=39 // pred_check_branch
          %273 = sbr.rel (%p271) target = $region60
        $region59: #{swin_layer_forward.3} parent=39 // pred_region
          %274 = dma.done [#allocation9], 16
        $region60: #{swin_layer_forward.3} parent=39 // pred_fallthru
          _
        %s275 = sand.u32 %s32, 1
        %s276 = scalar_lea.sflag [#allocation3], %s275
        %s277 = sand.u32 %s32, 1
        %s278 = smul.addr %s277, 64
        %s279 = scalar_lea.vmem [#allocation2], %s278
        %p280 = pneg %p45
        %p281 = pneg %p42
        %p282 = pneg %p66
        %p283 = pneg %p63
        %p284 = pneg %p87
        %p285 = pneg %p84
        %p286 = pneg %p108
        %p287 = pneg %p105
        %p288 = pneg %p129
        %p289 = pneg %p126
        %p290 = pneg %p155
        %p291 = pneg %p152
        %s292 = sand.u32 %s142, 1
        %s293 = scalar_lea.sflag [#allocation4], %s292
        %s294 = sand.u32 %s142, 1
        %s295 = smul.addr %s294, 64
        %s296 = scalar_lea.vmem [#allocation11], %s295
        %s297 = smul.u32 8, %s24
        %s298 = smul.u32 8, %s24
        %v300 = vld [vmem:[%s254] sm:$0xff]
        %v301 = vld [vmem:[%s254 + $0x8] sm:$0xff]
        %v302 = vld [vmem:[%s254 + $0x10] sm:$0xff]
        %v303 = vld [vmem:[%s254 + $0x18] sm:$0xff]
        %v304 = vld [vmem:[%s254 + $0x20] sm:$0xff]
        %v305 = vld [vmem:[%s254 + $0x28] sm:$0xff]
        %v306 = vld [vmem:[%s254 + $0x30] sm:$0xff]
        %v307 = vld [vmem:[%s254 + $0x38] sm:$0xff]
        %vm308 = vcmask 261120
        %v309 = vsel %vm308, %v300, 0.0
        %310 = vadd.xlane.f32.xlu0 %v309
        %v311 = vpop.xlane.xlu0 %310
        %v312 = vsel %vm308, %v301, 0.0
        %313 = vadd.xlane.f32.xlu0 %v312
        %v314 = vpop.xlane.xlu0 %313
        %v315 = vsel %vm308, %v302, 0.0
        %316 = vadd.xlane.f32.xlu0 %v315
        %v317 = vpop.xlane.xlu0 %316
        %v318 = vsel %vm308, %v303, 0.0
        %319 = vadd.xlane.f32.xlu0 %v318
        %v320 = vpop.xlane.xlu0 %319
        %v321 = vsel %vm308, %v304, 0.0
        %322 = vadd.xlane.f32.xlu0 %v321
        %v323 = vpop.xlane.xlu0 %322
        %v324 = vsel %vm308, %v305, 0.0
        %325 = vadd.xlane.f32.xlu0 %v324
        %v326 = vpop.xlane.xlu0 %325
        %v327 = vsel %vm308, %v306, 0.0
        %328 = vadd.xlane.f32.xlu0 %v327
        %v329 = vpop.xlane.xlu0 %328
        %v330 = vsel %vm308, %v307, 0.0
        %331 = vadd.xlane.f32.xlu0 %v330
        %v332 = vpop.xlane.xlu0 %331
        %v333 = vrcp.pop 32.0
        %v334 = vmul.f32 %v311, %v333
        %v335 = vmul.f32 %v314, %v333
        %v336 = vmul.f32 %v317, %v333
        %v337 = vmul.f32 %v320, %v333
        %v338 = vmul.f32 %v323, %v333
        %v339 = vmul.f32 %v326, %v333
        %v340 = vmul.f32 %v329, %v333
        %v341 = vmul.f32 %v332, %v333
        %v342 = vsub.f32 %v300, %v334
        %v343 = vsub.f32 %v301, %v335
        %v344 = vsub.f32 %v302, %v336
        %v345 = vsub.f32 %v303, %v337
        %v346 = vsub.f32 %v304, %v338
        %v347 = vsub.f32 %v305, %v339
        %v348 = vsub.f32 %v306, %v340
        %v349 = vsub.f32 %v307, %v341
        %v350 = vmul.f32 %v342, %v342
        %v351 = vmul.f32 %v343, %v343
        %v352 = vmul.f32 %v344, %v344
        %v353 = vmul.f32 %v345, %v345
        %v354 = vmul.f32 %v346, %v346
        %v355 = vmul.f32 %v347, %v347
        %v356 = vmul.f32 %v348, %v348
        %v357 = vmul.f32 %v349, %v349
        %v358 = vsel %vm308, %v350, 0.0
        %359 = vadd.xlane.f32.xlu0 %v358
        %v360 = vpop.xlane.xlu0 %359
        %v361 = vsel %vm308, %v351, 0.0
        %362 = vadd.xlane.f32.xlu0 %v361
        %v363 = vpop.xlane.xlu0 %362
        %v364 = vsel %vm308, %v352, 0.0
        %365 = vadd.xlane.f32.xlu0 %v364
        %v366 = vpop.xlane.xlu0 %365
        %v367 = vsel %vm308, %v353, 0.0
        %368 = vadd.xlane.f32.xlu0 %v367
        %v369 = vpop.xlane.xlu0 %368
        %v370 = vsel %vm308, %v354, 0.0
        %371 = vadd.xlane.f32.xlu0 %v370
        %v372 = vpop.xlane.xlu0 %371
        %v373 = vsel %vm308, %v355, 0.0
        %374 = vadd.xlane.f32.xlu0 %v373
        %v375 = vpop.xlane.xlu0 %374
        %v376 = vsel %vm308, %v356, 0.0
        %377 = vadd.xlane.f32.xlu0 %v376
        %v378 = vpop.xlane.xlu0 %377
        %v379 = vsel %vm308, %v357, 0.0
        %380 = vadd.xlane.f32.xlu0 %v379
        %v381 = vpop.xlane.xlu0 %380
        %v382 = vmul.f32 %v360, %v333
        %v383 = vmul.f32 %v363, %v333
        %v384 = vmul.f32 %v366, %v333
        %v385 = vmul.f32 %v369, %v333
        %v386 = vmul.f32 %v372, %v333
        %v387 = vmul.f32 %v375, %v333
        %v388 = vmul.f32 %v378, %v333
        %v389 = vmul.f32 %v381, %v333
        %v390 = vadd.f32 %v382, 1e-05
        %v391 = vadd.f32 %v383, 1e-05
        %v392 = vadd.f32 %v384, 1e-05
        %v393 = vadd.f32 %v385, 1e-05
        %v394 = vadd.f32 %v386, 1e-05
        %v395 = vadd.f32 %v387, 1e-05
        %v396 = vadd.f32 %v388, 1e-05
        %v397 = vadd.f32 %v389, 1e-05
        %v398 = vrsqrt.pop %v390
        %v399 = vrsqrt.pop %v391
        %v400 = vrsqrt.pop %v392
        %v401 = vrsqrt.pop %v393
        %v402 = vrsqrt.pop %v394
        %v403 = vrsqrt.pop %v395
        %v404 = vrsqrt.pop %v396
        %v405 = vrsqrt.pop %v397
        %v406 = vmul.f32 %v342, %v398
        %v407 = vmul.f32 %v343, %v399
        %v408 = vmul.f32 %v344, %v400
        %v409 = vmul.f32 %v345, %v401
        %v410 = vmul.f32 %v346, %v402
        %v411 = vmul.f32 %v347, %v403
        %v412 = vmul.f32 %v348, %v404
        %v413 = vmul.f32 %v349, %v405
        %v414 = vpack.c.bf16 %v407, %v406
        %v415 = vpack.c.bf16 %v409, %v408
        %v416 = vpack.c.bf16 %v411, %v410
        %v417 = vpack.c.bf16 %v413, %v412
        %v418 = vld [vmem:[#allocation5] sm:$0xf]
        %v419 = vld [vmem:[#allocation5 + $0x4] sm:$0xf]
        %v420 = vld [vmem:[#allocation5 + $0x8] sm:$0xf]
        %v421 = vld [vmem:[#allocation5 + $0xc] sm:$0xf]
        %v422 = vld [vmem:[#allocation7] sm:$0x1]
        %v424 = vlaneseq
        %v425 = vshrl.u32 %v424, 7
        %v426 = vsub.s32 0, %v425
        %v427 = vrot.slane %v422, %v426
        %v433 = vunpack.c.l.b16 %v418
        %v434 = vunpack.c.l.b16 %v419
        %v435 = vunpack.c.l.b16 %v420
        %v436 = vunpack.c.l.b16 %v421
        %v437 = vpack.c.b16 %v434, %v433
        %v438 = vpack.c.b16 %v436, %v435
        %v442 = vsel %vm308, %v414, 0
        %v445 = vsel %vm308, %v415, 0
        %v448 = vsel %vm308, %v416, 0
        %v451 = vsel %vm308, %v417, 0
        %453 = vmatprep.subr.bf16.mxu0 0
        %454 = vmatpush1.bf16.msra.mxu0 %v437
        %455 = vmatprep.subr.bf16.mxu0 0
        %456 = vmatpush1.bf16.msra.mxu0 %v438
        %457 = vmatprep.subr.bf16.mxu0 0
        %458 = vmatpush1.bf16.msra.mxu0 0
        %459 = vmatprep.subr.bf16.mxu0 0
        %460 = vmatpush1.bf16.msra.mxu0 0
        %461 = vmatprep.subr.bf16.mxu0 0
        %462 = vmatpush1.bf16.msra.mxu0 0
        %463 = vmatprep.subr.bf16.mxu0 0
        %464 = vmatpush1.bf16.msra.mxu0 0
        %465 = vmatprep.subr.bf16.mxu0 0
        %466 = vmatpush1.bf16.msra.mxu0 0
        %467 = vmatprep.subr.bf16.mxu0 0
        %468 = vmatpush1.bf16.msra.mxu0 0
        %469 = vmatprep.subr.bf16.mxu0 0
        %470 = vmatpush1.bf16.msra.mxu0 0
        %471 = vmatprep.subr.bf16.mxu0 0
        %472 = vmatpush1.bf16.msra.mxu0 0
        %473 = vmatprep.subr.bf16.mxu0 0
        %474 = vmatpush1.bf16.msra.mxu0 0
        %475 = vmatprep.subr.bf16.mxu0 0
        %476 = vmatpush1.bf16.msra.mxu0 0
        %477 = vmatprep.subr.bf16.mxu0 0
        %478 = vmatpush1.bf16.msra.mxu0 0
        %479 = vmatprep.subr.bf16.mxu0 0
        %480 = vmatpush1.bf16.msra.mxu0 0
        %481 = vmatprep.subr.bf16.mxu0 0
        %482 = vmatpush1.bf16.msra.mxu0 0
        %483 = vmatprep.subr.bf16.mxu0 0
        %484 = vmatpush1.bf16.msra.mxu0 0
        %485 = vmatprep.mubr.bf16.mxu0 0
        %486 = vmatmul.mubr.bf16.gmra.mrb[0].mxu0 %v442
        %v487 = vpop.f32.mrb[0].mxu0
        %v488 = vadd.f32 %v427, %v487
        %v489 = vpop.f32.mrb[0].mxu0
        %v490 = vpop.f32.mrb[0].mxu0
        %v491 = vadd.f32 %v427, %v490
        %v492 = vpop.f32.mrb[0].mxu0
        %493 = vmatprep.mubr.bf16.mxu0 0
        %494 = vmatmul.mubr.bf16.gmra.mrb[0].mxu0 %v445
        %v495 = vpop.f32.mrb[0].mxu0
        %v496 = vadd.f32 %v427, %v495
        %v497 = vpop.f32.mrb[0].mxu0
        %v498 = vpop.f32.mrb[0].mxu0
        %v499 = vadd.f32 %v427, %v498
        %v500 = vpop.f32.mrb[0].mxu0
        %501 = vmatprep.mubr.bf16.mxu0 0
        %502 = vmatmul.mubr.bf16.gmra.mrb[0].mxu0 %v448
        %v503 = vpop.f32.mrb[0].mxu0
        %v504 = vadd.f32 %v427, %v503
        %v505 = vpop.f32.mrb[0].mxu0
        %v506 = vpop.f32.mrb[0].mxu0
        %v507 = vadd.f32 %v427, %v506
        %v508 = vpop.f32.mrb[0].mxu0
        %509 = vmatprep.mubr.bf16.mxu0 0
        %510 = vmatmul.mubr.bf16.gmra.mrb[0].mxu0 %v451
        %v511 = vpop.f32.mrb[0].mxu0
        %v512 = vadd.f32 %v427, %v511
        %v513 = vpop.f32.mrb[0].mxu0
        %v514 = vpop.f32.mrb[0].mxu0
        %v515 = vadd.f32 %v427, %v514
        %v516 = vpop.f32.mrb[0].mxu0
        %517 = vdwg.mxu0
        %v518 = vmul.f32 %v488, 0.5
        %v519 = vmul.f32 %v491, 0.5
        %v520 = vmul.f32 %v496, 0.5
        %v521 = vmul.f32 %v499, 0.5
        %v522 = vmul.f32 %v504, 0.5
        %v523 = vmul.f32 %v507, 0.5
        %v524 = vmul.f32 %v512, 0.5
        %v525 = vmul.f32 %v515, 0.5
        %v526 = vmul.f32 %v488, 0.70710677
        %v527 = vmul.f32 %v491, 0.70710677
        %v528 = vmul.f32 %v496, 0.70710677
        %v529 = vmul.f32 %v499, 0.70710677
        %v530 = vmul.f32 %v504, 0.70710677
        %v531 = vmul.f32 %v507, 0.70710677
        %v532 = vmul.f32 %v512, 0.70710677
        %v533 = vmul.f32 %v515, 0.70710677
        %v534 = vmax.f32 %v526, -4.0
        %v535 = vmax.f32 %v527, -4.0
        %v536 = vmax.f32 %v528, -4.0
        %v537 = vmax.f32 %v529, -4.0
        %v538 = vmax.f32 %v530, -4.0
        %v539 = vmax.f32 %v531, -4.0
        %v540 = vmax.f32 %v532, -4.0
        %v541 = vmax.f32 %v533, -4.0
        %v542 = vmin.f32 %v534, 4.0
        %v543 = vmin.f32 %v535, 4.0
        %v544 = vmin.f32 %v536, 4.0
        %v545 = vmin.f32 %v537, 4.0
        %v546 = vmin.f32 %v538, 4.0
        %v547 = vmin.f32 %v539, 4.0
        %v548 = vmin.f32 %v540, 4.0
        %v549 = vmin.f32 %v541, 4.0
        %v550 = vmul.f32 %v542, %v542
        %v551 = vmul.f32 %v543, %v543
        %v552 = vmul.f32 %v544, %v544
        %v553 = vmul.f32 %v545, %v545
        %v554 = vmul.f32 %v546, %v546
        %v555 = vmul.f32 %v547, %v547
        %v556 = vmul.f32 %v548, %v548
        %v557 = vmul.f32 %v549, %v549
        %v558 = vmul.f32 %v550, 0.00022905065
        %v559 = vmul.f32 %v551, 0.00022905065
        %v560 = vmul.f32 %v552, 0.00022905065
        %v561 = vmul.f32 %v553, 0.00022905065
        %v562 = vmul.f32 %v554, 0.00022905065
        %v563 = vmul.f32 %v555, 0.00022905065
        %v564 = vmul.f32 %v556, 0.00022905065
        %v565 = vmul.f32 %v557, 0.00022905065
        %v566 = vadd.f32 %v558, 0.003408291
        %v567 = vadd.f32 %v559, 0.003408291
        %v568 = vadd.f32 %v560, 0.003408291
        %v569 = vadd.f32 %v561, 0.003408291
        %v570 = vadd.f32 %v562, 0.003408291
        %v571 = vadd.f32 %v563, 0.003408291
        %v572 = vadd.f32 %v564, 0.003408291
        %v573 = vadd.f32 %v565, 0.003408291
        %v574 = vmul.f32 %v566, %v550
        %v575 = vmul.f32 %v567, %v551
        %v576 = vmul.f32 %v568, %v552
        %v577 = vmul.f32 %v569, %v553
        %v578 = vmul.f32 %v570, %v554
        %v579 = vmul.f32 %v571, %v555
        %v580 = vmul.f32 %v572, %v556
        %v581 = vmul.f32 %v573, %v557
        %v582 = vadd.f32 %v574, 0.050955694
        %v583 = vadd.f32 %v575, 0.050955694
        %v584 = vadd.f32 %v576, 0.050955694
        %v585 = vadd.f32 %v577, 0.050955694
        %v586 = vadd.f32 %v578, 0.050955694
        %v587 = vadd.f32 %v579, 0.050955694
        %v588 = vadd.f32 %v580, 0.050955694
        %v589 = vadd.f32 %v581, 0.050955694
        %v590 = vmul.f32 %v582, %v550
        %v591 = vmul.f32 %v583, %v551
        %v592 = vmul.f32 %v584, %v552
        %v593 = vmul.f32 %v585, %v553
        %v594 = vmul.f32 %v586, %v554
        %v595 = vmul.f32 %v587, %v555
        %v596 = vmul.f32 %v588, %v556
        %v597 = vmul.f32 %v589, %v557
        %v598 = vadd.f32 %v590, 0.18520832
        %v599 = vadd.f32 %v591, 0.18520832
        %v600 = vadd.f32 %v592, 0.18520832
        %v601 = vadd.f32 %v593, 0.18520832
        %v602 = vadd.f32 %v594, 0.18520832
        %v603 = vadd.f32 %v595, 0.18520832
        %v604 = vadd.f32 %v596, 0.18520832
        %v605 = vadd.f32 %v597, 0.18520832
        %v606 = vmul.f32 %v598, %v550
        %v607 = vmul.f32 %v599, %v551
        %v608 = vmul.f32 %v600, %v552
        %v609 = vmul.f32 %v601, %v553
        %v610 = vmul.f32 %v602, %v554
        %v611 = vmul.f32 %v603, %v555
        %v612 = vmul.f32 %v604, %v556
        %v613 = vmul.f32 %v605, %v557
        %v614 = vadd.f32 %v606, 1.1283791
        %v615 = vadd.f32 %v607, 1.1283791
        %v616 = vadd.f32 %v608, 1.1283791
        %v617 = vadd.f32 %v609, 1.1283791
        %v618 = vadd.f32 %v610, 1.1283791
        %v619 = vadd.f32 %v611, 1.1283791
        %v620 = vadd.f32 %v612, 1.1283791
        %v621 = vadd.f32 %v613, 1.1283791
        %v622 = vmul.f32 %v550, -1.1791603e-07
        %v623 = vmul.f32 %v551, -1.1791603e-07
        %v624 = vmul.f32 %v552, -1.1791603e-07
        %v625 = vmul.f32 %v553, -1.1791603e-07
        %v626 = vmul.f32 %v554, -1.1791603e-07
        %v627 = vmul.f32 %v555, -1.1791603e-07
        %v628 = vmul.f32 %v556, -1.1791603e-07
        %v629 = vmul.f32 %v557, -1.1791603e-07
        %v630 = vadd.f32 %v622, 2.3547966e-05
        %v631 = vadd.f32 %v623, 2.3547966e-05
        %v632 = vadd.f32 %v624, 2.3547966e-05
        %v633 = vadd.f32 %v625, 2.3547966e-05
        %v634 = vadd.f32 %v626, 2.3547966e-05
        %v635 = vadd.f32 %v627, 2.3547966e-05
        %v636 = vadd.f32 %v628, 2.3547966e-05
        %v637 = vadd.f32 %v629, 2.3547966e-05
        %v638 = vmul.f32 %v630, %v550
        %v639 = vmul.f32 %v631, %v551
        %v640 = vmul.f32 %v632, %v552
        %v641 = vmul.f32 %v633, %v553
        %v642 = vmul.f32 %v634, %v554
        %v643 = vmul.f32 %v635, %v555
        %v644 = vmul.f32 %v636, %v556
        %v645 = vmul.f32 %v637, %v557
        %v646 = vadd.f32 %v638, 0.0010179626
        %v647 = vadd.f32 %v639, 0.0010179626
        %v648 = vadd.f32 %v640, 0.0010179626
        %v649 = vadd.f32 %v641, 0.0010179626
        %v650 = vadd.f32 %v642, 0.0010179626
        %v651 = vadd.f32 %v643, 0.0010179626
        %v652 = vadd.f32 %v644, 0.0010179626
        %v653 = vadd.f32 %v645, 0.0010179626
        %v654 = vmul.f32 %v646, %v550
        %v655 = vmul.f32 %v647, %v551
        %v656 = vmul.f32 %v648, %v552
        %v657 = vmul.f32 %v649, %v553
        %v658 = vmul.f32 %v650, %v554
        %v659 = vmul.f32 %v651, %v555
        %v660 = vmul.f32 %v652, %v556
        %v661 = vmul.f32 %v653, %v557
        %v662 = vadd.f32 %v654, 0.01407047
        %v663 = vadd.f32 %v655, 0.01407047
        %v664 = vadd.f32 %v656, 0.01407047
        %v665 = vadd.f32 %v657, 0.01407047
        %v666 = vadd.f32 %v658, 0.01407047
        %v667 = vadd.f32 %v659, 0.01407047
        %v668 = vadd.f32 %v660, 0.01407047
        %v669 = vadd.f32 %v661, 0.01407047
        %v670 = vmul.f32 %v662, %v550
        %v671 = vmul.f32 %v663, %v551
        %v672 = vmul.f32 %v664, %v552
        %v673 = vmul.f32 %v665, %v553
        %v674 = vmul.f32 %v666, %v554
        %v675 = vmul.f32 %v667, %v555
        %v676 = vmul.f32 %v668, %v556
        %v677 = vmul.f32 %v669, %v557
        %v678 = vadd.f32 %v670, 0.11098505
        %v679 = vadd.f32 %v671, 0.11098505
        %v680 = vadd.f32 %v672, 0.11098505
        %v681 = vadd.f32 %v673, 0.11098505
        %v682 = vadd.f32 %v674, 0.11098505
        %v683 = vadd.f32 %v675, 0.11098505
        %v684 = vadd.f32 %v676, 0.11098505
        %v685 = vadd.f32 %v677, 0.11098505
        %v686 = vmul.f32 %v678, %v550
        %v687 = vmul.f32 %v679, %v551
        %v688 = vmul.f32 %v680, %v552
        %v689 = vmul.f32 %v681, %v553
        %v690 = vmul.f32 %v682, %v554
        %v691 = vmul.f32 %v683, %v555
        %v692 = vmul.f32 %v684, %v556
        %v693 = vmul.f32 %v685, %v557
        %v694 = vadd.f32 %v686, 0.49746925
        %v695 = vadd.f32 %v687, 0.49746925
        %v696 = vadd.f32 %v688, 0.49746925
        %v697 = vadd.f32 %v689, 0.49746925
        %v698 = vadd.f32 %v690, 0.49746925
        %v699 = vadd.f32 %v691, 0.49746925
        %v700 = vadd.f32 %v692, 0.49746925
        %v701 = vadd.f32 %v693, 0.49746925
        %v702 = vmul.f32 %v694, %v550
        %v703 = vmul.f32 %v695, %v551
        %v704 = vmul.f32 %v696, %v552
        %v705 = vmul.f32 %v697, %v553
        %v706 = vmul.f32 %v698, %v554
        %v707 = vmul.f32 %v699, %v555
        %v708 = vmul.f32 %v700, %v556
        %v709 = vmul.f32 %v701, %v557
        %v710 = vadd.f32 %v702, 1.0
        %v711 = vadd.f32 %v703, 1.0
        %v712 = vadd.f32 %v704, 1.0
        %v713 = vadd.f32 %v705, 1.0
        %v714 = vadd.f32 %v706, 1.0
        %v715 = vadd.f32 %v707, 1.0
        %v716 = vadd.f32 %v708, 1.0
        %v717 = vadd.f32 %v709, 1.0
        %v718 = vmul.f32 %v542, %v614
        %v719 = vmul.f32 %v543, %v615
        %v720 = vmul.f32 %v544, %v616
        %v721 = vmul.f32 %v545, %v617
        %v722 = vmul.f32 %v546, %v618
        %v723 = vmul.f32 %v547, %v619
        %v724 = vmul.f32 %v548, %v620
        %v725 = vmul.f32 %v549, %v621
        %v726 = vrcp.pop %v710
        %v727 = vmul.f32 %v718, %v726
        %v728 = vrcp.pop %v711
        %v729 = vmul.f32 %v719, %v728
        %v730 = vrcp.pop %v712
        %v731 = vmul.f32 %v720, %v730
        %v732 = vrcp.pop %v713
        %v733 = vmul.f32 %v721, %v732
        %v734 = vrcp.pop %v714
        %v735 = vmul.f32 %v722, %v734
        %v736 = vrcp.pop %v715
        %v737 = vmul.f32 %v723, %v736
        %v738 = vrcp.pop %v716
        %v739 = vmul.f32 %v724, %v738
        %v740 = vrcp.pop %v717
        %v741 = vmul.f32 %v725, %v740
        %v742 = vadd.f32 %v727, 1.0
        %v743 = vadd.f32 %v729, 1.0
        %v744 = vadd.f32 %v731, 1.0
        %v745 = vadd.f32 %v733, 1.0
        %v746 = vadd.f32 %v735, 1.0
        %v747 = vadd.f32 %v737, 1.0
        %v748 = vadd.f32 %v739, 1.0
        %v749 = vadd.f32 %v741, 1.0
        %v750 = vmul.f32 %v518, %v742
        %v751 = vmul.f32 %v519, %v743
        %v752 = vmul.f32 %v520, %v744
        %v753 = vmul.f32 %v521, %v745
        %v754 = vmul.f32 %v522, %v746
        %v755 = vmul.f32 %v523, %v747
        %v756 = vmul.f32 %v524, %v748
        %v757 = vmul.f32 %v525, %v749
        %v758 = vpack.c.bf16 %v751, %v750
        %v759 = vpack.c.bf16 %v753, %v752
        %v760 = vpack.c.bf16 %v755, %v754
        %v761 = vpack.c.bf16 %v757, %v756
        %v762 = vld [vmem:[#allocation8] sm:$0xf]
        %v763 = vld [vmem:[#allocation8 + $0x4] sm:$0xf]
        %v764 = vld [vmem:[#allocation8 + $0x8] sm:$0xf]
        %v765 = vld [vmem:[#allocation8 + $0xc] sm:$0xf]
        %v766 = vld [vmem:[#allocation8 + $0x10] sm:$0xf]
        %v767 = vld [vmem:[#allocation8 + $0x14] sm:$0xf]
        %v768 = vld [vmem:[#allocation8 + $0x18] sm:$0xf]
        %v769 = vld [vmem:[#allocation8 + $0x1c] sm:$0xf]
        %v770 = vld [vmem:[#allocation10] sm:$0x1]
        %v772 = vlaneseq
        %v773 = vshrl.u32 %v772, 7
        %v774 = vsub.s32 0, %v773
        %v775 = vrot.slane %v770, %v774
        %v785 = vunpack.c.l.b16 %v762
        %v786 = vunpack.c.l.b16 %v763
        %v787 = vunpack.c.l.b16 %v764
        %v788 = vunpack.c.l.b16 %v765
        %v789 = vunpack.c.l.b16 %v766
        %v790 = vunpack.c.l.b16 %v767
        %v791 = vunpack.c.l.b16 %v768
        %v792 = vunpack.c.l.b16 %v769
        %v793 = vpack.c.b16 %v786, %v785
        %v794 = vpack.c.b16 %v788, %v787
        %v795 = vpack.c.b16 %v790, %v789
        %v796 = vpack.c.b16 %v792, %v791
        %vm801 = vcmask 523264
        %v803 = vsel %vm801, %v758, 0
        %v806 = vsel %vm801, %v759, 0
        %v809 = vsel %vm801, %v760, 0
        %v812 = vsel %vm801, %v761, 0
        %814 = vmatprep.subr.bf16.mxu0 0
        %815 = vmatpush1.bf16.msra.mxu0 %v793
        %816 = vmatprep.subr.bf16.mxu0 0
        %817 = vmatpush1.bf16.msra.mxu0 %v794
        %818 = vmatprep.subr.bf16.mxu0 0
        %819 = vmatpush1.bf16.msra.mxu0 %v795
        %820 = vmatprep.subr.bf16.mxu0 0
        %821 = vmatpush1.bf16.msra.mxu0 %v796
        %822 = vmatprep.subr.bf16.mxu0 0
        %823 = vmatpush1.bf16.msra.mxu0 0
        %824 = vmatprep.subr.bf16.mxu0 0
        %825 = vmatpush1.bf16.msra.mxu0 0
        %826 = vmatprep.subr.bf16.mxu0 0
        %827 = vmatpush1.bf16.msra.mxu0 0
        %828 = vmatprep.subr.bf16.mxu0 0
        %829 = vmatpush1.bf16.msra.mxu0 0
        %830 = vmatprep.subr.bf16.mxu0 0
        %831 = vmatpush1.bf16.msra.mxu0 0
        %832 = vmatprep.subr.bf16.mxu0 0
        %833 = vmatpush1.bf16.msra.mxu0 0
        %834 = vmatprep.subr.bf16.mxu0 0
        %835 = vmatpush1.bf16.msra.mxu0 0
        %836 = vmatprep.subr.bf16.mxu0 0
        %837 = vmatpush1.bf16.msra.mxu0 0
        %838 = vmatprep.subr.bf16.mxu0 0
        %839 = vmatpush1.bf16.msra.mxu0 0
        %840 = vmatprep.subr.bf16.mxu0 0
        %841 = vmatpush1.bf16.msra.mxu0 0
        %842 = vmatprep.subr.bf16.mxu0 0
        %843 = vmatpush1.bf16.msra.mxu0 0
        %844 = vmatprep.subr.bf16.mxu0 0
        %845 = vmatpush1.bf16.msra.mxu0 0
        %846 = vmatprep.mubr.bf16.mxu0 0
        %847 = vmatmul.mubr.bf16.gmra.mrb[0].mxu0 %v803
        %v848 = vpop.f32.mrb[0].mxu0
        %v849 = vadd.f32 %v775, %v848
        %v850 = vpop.f32.mrb[0].mxu0
        %v851 = vpop.f32.mrb[0].mxu0
        %v852 = vadd.f32 %v775, %v851
        %v853 = vpop.f32.mrb[0].mxu0
        %854 = vmatprep.mubr.bf16.mxu0 0
        %855 = vmatmul.mubr.bf16.gmra.mrb[0].mxu0 %v806
        %v856 = vpop.f32.mrb[0].mxu0
        %v857 = vadd.f32 %v775, %v856
        %v858 = vpop.f32.mrb[0].mxu0
        %v859 = vpop.f32.mrb[0].mxu0
        %v860 = vadd.f32 %v775, %v859
        %v861 = vpop.f32.mrb[0].mxu0
        %862 = vmatprep.mubr.bf16.mxu0 0
        %863 = vmatmul.mubr.bf16.gmra.mrb[0].mxu0 %v809
        %v864 = vpop.f32.mrb[0].mxu0
        %v865 = vadd.f32 %v775, %v864
        %v866 = vpop.f32.mrb[0].mxu0
        %v867 = vpop.f32.mrb[0].mxu0
        %v868 = vadd.f32 %v775, %v867
        %v869 = vpop.f32.mrb[0].mxu0
        %870 = vmatprep.mubr.bf16.mxu0 0
        %871 = vmatmul.mubr.bf16.gmra.mrb[0].mxu0 %v812
        %v872 = vpop.f32.mrb[0].mxu0
        %v873 = vadd.f32 %v775, %v872
        %v874 = vpop.f32.mrb[0].mxu0
        %v875 = vpop.f32.mrb[0].mxu0
        %v876 = vadd.f32 %v775, %v875
        %v877 = vpop.f32.mrb[0].mxu0
        %878 = vdwg.mxu0
        %v879 = vmul.f32 %v849, 0.5
        %v880 = vmul.f32 %v852, 0.5
        %v881 = vmul.f32 %v857, 0.5
        %v882 = vmul.f32 %v860, 0.5
        %v883 = vmul.f32 %v865, 0.5
        %v884 = vmul.f32 %v868, 0.5
        %v885 = vmul.f32 %v873, 0.5
        %v886 = vmul.f32 %v876, 0.5
        %v887 = vmul.f32 %v849, 0.70710677
        %v888 = vmul.f32 %v852, 0.70710677
        %v889 = vmul.f32 %v857, 0.70710677
        %v890 = vmul.f32 %v860, 0.70710677
        %v891 = vmul.f32 %v865, 0.70710677
        %v892 = vmul.f32 %v868, 0.70710677
        %v893 = vmul.f32 %v873, 0.70710677
        %v894 = vmul.f32 %v876, 0.70710677
        %v895 = vmax.f32 %v887, -4.0
        %v896 = vmax.f32 %v888, -4.0
        %v897 = vmax.f32 %v889, -4.0
        %v898 = vmax.f32 %v890, -4.0
        %v899 = vmax.f32 %v891, -4.0
        %v900 = vmax.f32 %v892, -4.0
        %v901 = vmax.f32 %v893, -4.0
        %v902 = vmax.f32 %v894, -4.0
        %v903 = vmin.f32 %v895, 4.0
        %v904 = vmin.f32 %v896, 4.0
        %v905 = vmin.f32 %v897, 4.0
        %v906 = vmin.f32 %v898, 4.0
        %v907 = vmin.f32 %v899, 4.0
        %v908 = vmin.f32 %v900, 4.0
        %v909 = vmin.f32 %v901, 4.0
        %v910 = vmin.f32 %v902, 4.0
        %v911 = vmul.f32 %v903, %v903
        %v912 = vmul.f32 %v904, %v904
        %v913 = vmul.f32 %v905, %v905
        %v914 = vmul.f32 %v906, %v906
        %v915 = vmul.f32 %v907, %v907
        %v916 = vmul.f32 %v908, %v908
        %v917 = vmul.f32 %v909, %v909
        %v918 = vmul.f32 %v910, %v910
        %v919 = vmul.f32 %v911, 0.00022905065
        %v920 = vmul.f32 %v912, 0.00022905065
        %v921 = vmul.f32 %v913, 0.00022905065
        %v922 = vmul.f32 %v914, 0.00022905065
        %v923 = vmul.f32 %v915, 0.00022905065
        %v924 = vmul.f32 %v916, 0.00022905065
        %v925 = vmul.f32 %v917, 0.00022905065
        %v926 = vmul.f32 %v918, 0.00022905065
        %v927 = vadd.f32 %v919, 0.003408291
        %v928 = vadd.f32 %v920, 0.003408291
        %v929 = vadd.f32 %v921, 0.003408291
        %v930 = vadd.f32 %v922, 0.003408291
        %v931 = vadd.f32 %v923, 0.003408291
        %v932 = vadd.f32 %v924, 0.003408291
        %v933 = vadd.f32 %v925, 0.003408291
        %v934 = vadd.f32 %v926, 0.003408291
        %v935 = vmul.f32 %v927, %v911
        %v936 = vmul.f32 %v928, %v912
        %v937 = vmul.f32 %v929, %v913
        %v938 = vmul.f32 %v930, %v914
        %v939 = vmul.f32 %v931, %v915
        %v940 = vmul.f32 %v932, %v916
        %v941 = vmul.f32 %v933, %v917
        %v942 = vmul.f32 %v934, %v918
        %v943 = vadd.f32 %v935, 0.050955694
        %v944 = vadd.f32 %v936, 0.050955694
        %v945 = vadd.f32 %v937, 0.050955694
        %v946 = vadd.f32 %v938, 0.050955694
        %v947 = vadd.f32 %v939, 0.050955694
        %v948 = vadd.f32 %v940, 0.050955694
        %v949 = vadd.f32 %v941, 0.050955694
        %v950 = vadd.f32 %v942, 0.050955694
        %v951 = vmul.f32 %v943, %v911
        %v952 = vmul.f32 %v944, %v912
        %v953 = vmul.f32 %v945, %v913
        %v954 = vmul.f32 %v946, %v914
        %v955 = vmul.f32 %v947, %v915
        %v956 = vmul.f32 %v948, %v916
        %v957 = vmul.f32 %v949, %v917
        %v958 = vmul.f32 %v950, %v918
        %v959 = vadd.f32 %v951, 0.18520832
        %v960 = vadd.f32 %v952, 0.18520832
        %v961 = vadd.f32 %v953, 0.18520832
        %v962 = vadd.f32 %v954, 0.18520832
        %v963 = vadd.f32 %v955, 0.18520832
        %v964 = vadd.f32 %v956, 0.18520832
        %v965 = vadd.f32 %v957, 0.18520832
        %v966 = vadd.f32 %v958, 0.18520832
        %v967 = vmul.f32 %v959, %v911
        %v968 = vmul.f32 %v960, %v912
        %v969 = vmul.f32 %v961, %v913
        %v970 = vmul.f32 %v962, %v914
        %v971 = vmul.f32 %v963, %v915
        %v972 = vmul.f32 %v964, %v916
        %v973 = vmul.f32 %v965, %v917
        %v974 = vmul.f32 %v966, %v918
        %v975 = vadd.f32 %v967, 1.1283791
        %v976 = vadd.f32 %v968, 1.1283791
        %v977 = vadd.f32 %v969, 1.1283791
        %v978 = vadd.f32 %v970, 1.1283791
        %v979 = vadd.f32 %v971, 1.1283791
        %v980 = vadd.f32 %v972, 1.1283791
        %v981 = vadd.f32 %v973, 1.1283791
        %v982 = vadd.f32 %v974, 1.1283791
        %v983 = vmul.f32 %v911, -1.1791603e-07
        %v984 = vmul.f32 %v912, -1.1791603e-07
        %v985 = vmul.f32 %v913, -1.1791603e-07
        %v986 = vmul.f32 %v914, -1.1791603e-07
        %v987 = vmul.f32 %v915, -1.1791603e-07
        %v988 = vmul.f32 %v916, -1.1791603e-07
        %v989 = vmul.f32 %v917, -1.1791603e-07
        %v990 = vmul.f32 %v918, -1.1791603e-07
        %v991 = vadd.f32 %v983, 2.3547966e-05
        %v992 = vadd.f32 %v984, 2.3547966e-05
        %v993 = vadd.f32 %v985, 2.3547966e-05
        %v994 = vadd.f32 %v986, 2.3547966e-05
        %v995 = vadd.f32 %v987, 2.3547966e-05
        %v996 = vadd.f32 %v988, 2.3547966e-05
        %v997 = vadd.f32 %v989, 2.3547966e-05
        %v998 = vadd.f32 %v990, 2.3547966e-05
        %v999 = vmul.f32 %v991, %v911
        %v1000 = vmul.f32 %v992, %v912
        %v1001 = vmul.f32 %v993, %v913
        %v1002 = vmul.f32 %v994, %v914
        %v1003 = vmul.f32 %v995, %v915
        %v1004 = vmul.f32 %v996, %v916
        %v1005 = vmul.f32 %v997, %v917
        %v1006 = vmul.f32 %v998, %v918
        %v1007 = vadd.f32 %v999, 0.0010179626
        %v1008 = vadd.f32 %v1000, 0.0010179626
        %v1009 = vadd.f32 %v1001, 0.0010179626
        %v1010 = vadd.f32 %v1002, 0.0010179626
        %v1011 = vadd.f32 %v1003, 0.0010179626
        %v1012 = vadd.f32 %v1004, 0.0010179626
        %v1013 = vadd.f32 %v1005, 0.0010179626
        %v1014 = vadd.f32 %v1006, 0.0010179626
        %v1015 = vmul.f32 %v1007, %v911
        %v1016 = vmul.f32 %v1008, %v912
        %v1017 = vmul.f32 %v1009, %v913
        %v1018 = vmul.f32 %v1010, %v914
        %v1019 = vmul.f32 %v1011, %v915
        %v1020 = vmul.f32 %v1012, %v916
        %v1021 = vmul.f32 %v1013, %v917
        %v1022 = vmul.f32 %v1014, %v918
        %v1023 = vadd.f32 %v1015, 0.01407047
        %v1024 = vadd.f32 %v1016, 0.01407047
        %v1025 = vadd.f32 %v1017, 0.01407047
        %v1026 = vadd.f32 %v1018, 0.01407047
        %v1027 = vadd.f32 %v1019, 0.01407047
        %v1028 = vadd.f32 %v1020, 0.01407047
        %v1029 = vadd.f32 %v1021, 0.01407047
        %v1030 = vadd.f32 %v1022, 0.01407047
        %v1031 = vmul.f32 %v1023, %v911
        %v1032 = vmul.f32 %v1024, %v912
        %v1033 = vmul.f32 %v1025, %v913
        %v1034 = vmul.f32 %v1026, %v914
        %v1035 = vmul.f32 %v1027, %v915
        %v1036 = vmul.f32 %v1028, %v916
        %v1037 = vmul.f32 %v1029, %v917
        %v1038 = vmul.f32 %v1030, %v918
        %v1039 = vadd.f32 %v1031, 0.11098505
        %v1040 = vadd.f32 %v1032, 0.11098505
        %v1041 = vadd.f32 %v1033, 0.11098505
        %v1042 = vadd.f32 %v1034, 0.11098505
        %v1043 = vadd.f32 %v1035, 0.11098505
        %v1044 = vadd.f32 %v1036, 0.11098505
        %v1045 = vadd.f32 %v1037, 0.11098505
        %v1046 = vadd.f32 %v1038, 0.11098505
        %v1047 = vmul.f32 %v1039, %v911
        %v1048 = vmul.f32 %v1040, %v912
        %v1049 = vmul.f32 %v1041, %v913
        %v1050 = vmul.f32 %v1042, %v914
        %v1051 = vmul.f32 %v1043, %v915
        %v1052 = vmul.f32 %v1044, %v916
        %v1053 = vmul.f32 %v1045, %v917
        %v1054 = vmul.f32 %v1046, %v918
        %v1055 = vadd.f32 %v1047, 0.49746925
        %v1056 = vadd.f32 %v1048, 0.49746925
        %v1057 = vadd.f32 %v1049, 0.49746925
        %v1058 = vadd.f32 %v1050, 0.49746925
        %v1059 = vadd.f32 %v1051, 0.49746925
        %v1060 = vadd.f32 %v1052, 0.49746925
        %v1061 = vadd.f32 %v1053, 0.49746925
        %v1062 = vadd.f32 %v1054, 0.49746925
        %v1063 = vmul.f32 %v1055, %v911
        %v1064 = vmul.f32 %v1056, %v912
        %v1065 = vmul.f32 %v1057, %v913
        %v1066 = vmul.f32 %v1058, %v914
        %v1067 = vmul.f32 %v1059, %v915
        %v1068 = vmul.f32 %v1060, %v916
        %v1069 = vmul.f32 %v1061, %v917
        %v1070 = vmul.f32 %v1062, %v918
        %v1071 = vadd.f32 %v1063, 1.0
        %v1072 = vadd.f32 %v1064, 1.0
        %v1073 = vadd.f32 %v1065, 1.0
        %v1074 = vadd.f32 %v1066, 1.0
        %v1075 = vadd.f32 %v1067, 1.0
        %v1076 = vadd.f32 %v1068, 1.0
        %v1077 = vadd.f32 %v1069, 1.0
        %v1078 = vadd.f32 %v1070, 1.0
        %v1079 = vmul.f32 %v903, %v975
        %v1080 = vmul.f32 %v904, %v976
        %v1081 = vmul.f32 %v905, %v977
        %v1082 = vmul.f32 %v906, %v978
        %v1083 = vmul.f32 %v907, %v979
        %v1084 = vmul.f32 %v908, %v980
        %v1085 = vmul.f32 %v909, %v981
        %v1086 = vmul.f32 %v910, %v982
        %v1087 = vrcp.pop %v1071
        %v1088 = vmul.f32 %v1079, %v1087
        %v1089 = vrcp.pop %v1072
        %v1090 = vmul.f32 %v1080, %v1089
        %v1091 = vrcp.pop %v1073
        %v1092 = vmul.f32 %v1081, %v1091
        %v1093 = vrcp.pop %v1074
        %v1094 = vmul.f32 %v1082, %v1093
        %v1095 = vrcp.pop %v1075
        %v1096 = vmul.f32 %v1083, %v1095
        %v1097 = vrcp.pop %v1076
        %v1098 = vmul.f32 %v1084, %v1097
        %v1099 = vrcp.pop %v1077
        %v1100 = vmul.f32 %v1085, %v1099
        %v1101 = vrcp.pop %v1078
        %v1102 = vmul.f32 %v1086, %v1101
        %v1103 = vadd.f32 %v1088, 1.0
        %v1104 = vadd.f32 %v1090, 1.0
        %v1105 = vadd.f32 %v1092, 1.0
        %v1106 = vadd.f32 %v1094, 1.0
        %v1107 = vadd.f32 %v1096, 1.0
        %v1108 = vadd.f32 %v1098, 1.0
        %v1109 = vadd.f32 %v1100, 1.0
        %v1110 = vadd.f32 %v1102, 1.0
        %v1111 = vmul.f32 %v879, %v1103
        %v1112 = vmul.f32 %v880, %v1104
        %v1113 = vmul.f32 %v881, %v1105
        %v1114 = vmul.f32 %v882, %v1106
        %v1115 = vmul.f32 %v883, %v1107
        %v1116 = vmul.f32 %v884, %v1108
        %v1117 = vmul.f32 %v885, %v1109
        %v1118 = vmul.f32 %v886, %v1110
        %v1119 = vadd.f32 %v300, %v1111
        %v1120 = vadd.f32 %v301, %v1112
        %v1121 = vadd.f32 %v302, %v1113
        %v1122 = vadd.f32 %v303, %v1114
        %v1123 = vadd.f32 %v304, %v1115
        %v1124 = vadd.f32 %v305, %v1116
        %v1125 = vadd.f32 %v306, %v1117
        %v1126 = vadd.f32 %v307, %v1118
        %1127 = vst.msk [vmem:[%s296] sm:$0xff] %vm308, %v1119
        %1128 = vst.msk [vmem:[%s296 + $0x8] sm:$0xff] %vm308, %v1120
        %1129 = vst.msk [vmem:[%s296 + $0x10] sm:$0xff] %vm308, %v1121
        %1130 = vst.msk [vmem:[%s296 + $0x18] sm:$0xff] %vm308, %v1122
        %1131 = vst.msk [vmem:[%s296 + $0x20] sm:$0xff] %vm308, %v1123
        %1132 = vst.msk [vmem:[%s296 + $0x28] sm:$0xff] %vm308, %v1124
        %1133 = vst.msk [vmem:[%s296 + $0x30] sm:$0xff] %vm308, %v1125
        %1134 = vst.msk [vmem:[%s296 + $0x38] sm:$0xff] %vm308, %v1126
        %s1135 = sand.u32 %s142, 1
        %s1136 = scalar_lea.sflag [#allocation4], %s1135
        %s1137 = sand.u32 %s142, 1
        %s1138 = smul.addr %s1137, 64
        %s1139 = scalar_lea.vmem [#allocation11], %s1138
        // Predicated region
        $region61: #{swin_layer_forward.3} parent=39 // pred_check
          %p1140 = pneg %p152
        $region62: #{swin_layer_forward.3} parent=39 // pred_check_branch
          %1142 = sbr.rel (%p1140) target = $region64
        $region63: #{swin_layer_forward.3} parent=39 // pred_region
          %s1143 = smul.u32 8, %s24
          %s1145 = ssub.s32 1024, 1024
          %1146 = vsyncadd %s1136, %s1145
          %s1147 = smul.addr %s1143, 128
          %s1148 = scalar_lea.hbm %s5, %s1147
          %s1149 = sshll.u32 %s1139, 4
          %s1150 = int_to_ptr.vmem [resolvable:$true] %s1149
          %1155 = dma.vmem_to_hbm [thread:$0]  %s1150, 1024, %s1148, %s1136, 128, 128, 8
        $region64: #{swin_layer_forward.3} parent=39 // pred_fallthru
          _
      $region40: #{swin_layer_forward.3} parent=5 // pred_fallthru
        _
      %p1156 = scmp.le.s32.totalorder 2, %s19
      // Predicated region
      $region65: #{swin_layer_forward.3} parent=5 // pred_check
        %p1157 = pneg %p1156
      $region66: #{swin_layer_forward.3} parent=5 // pred_check_branch
        %1159 = sbr.rel (%p1157) target = $region68
      $region67: #{swin_layer_forward.3} parent=5 // pred_region
        %s1160 = ssub.s32 %s19, 2
        // Predicated region
        $region69: #{swin_layer_forward.3} parent=67 // pred_check
          %p1161 = pneg %p158
        $region70: #{swin_layer_forward.3} parent=67 // pred_check_branch
          %1163 = sbr.rel (%p1161) target = $region72
        $region71: #{swin_layer_forward.3} parent=67 // pred_region
          %s1164 = sand.u32 %s143, 1
          %s1165 = scalar_lea.sflag [#allocation4], %s1164
          %s1166 = sand.u32 %s143, 1
          %s1167 = smul.addr %s1166, 64
          %s1168 = scalar_lea.vmem [#allocation11], %s1167
          %1169 = dma.done %s1165, 1024
        $region72: #{swin_layer_forward.3} parent=67 // pred_fallthru
          _
      $region68: #{swin_layer_forward.3} parent=5 // pred_fallthru
        _
    $region6: #{swin_layer_forward.3} parent=1 // loop_footer
      %s23 = sadd.s32 1, %s19
    $region7: #{swin_layer_forward.3} parent=1 // loop_footer_branch
      %18 = sbr.rel target = $region3
    $region8: #{swin_layer_forward.3} parent=1 // loop_exit
      _
    %1170 = vsyncpa [#allocation3], 1
    %s1171 = scalar_lea.sflag [#allocation3], 1
    %1172 = vsyncpa %s1171, 1
    %1173 = vsyncpa [#allocation6], 1
    %1174 = vsyncpa [#allocation9], 1
    %1175 = vsyncpa [#allocation4], 1
    %s1176 = scalar_lea.sflag [#allocation4], 1
    %1177 = vsyncpa %s1176, 1

// kernel: swin_layer_forward.2
$region0: #{swin_layer_forward.2}
  #allocation0 [shape = 'u32[]', space=smem, size = 0x4, offset = 0x4, fixed_abs, tag = 'smem constant byte address 0x4 - core index']
  #allocation1 [shape = 'u32[144,128]{1,0:T(1,128)}', space=vmem, size = 0x12000, scoped, tag = 'internal scratch']
  %s0 = inlined_call_operand.hbm [shape: f32[10,16,32], index: 0, kind: input, shape index: {}]
  %s1 = inlined_call_operand.hbm [shape: bf16[32,96], index: 1, kind: input, shape index: {}]
  %s2 = inlined_call_operand.hbm [shape: f32[1,96], index: 2, kind: input, shape index: {}]
  %s3 = inlined_call_operand.hbm [shape: bf16[32,32], index: 3, kind: input, shape index: {}]
  %s4 = inlined_call_operand.hbm [shape: f32[1,32], index: 4, kind: input, shape index: {}]
  %s5 = inlined_call_operand.hbm [shape: f32[1,4,16,16], index: 5, kind: input, shape index: {}]
  %s6 = inlined_call_operand.hbm [shape: f32[10,16,32], index: 6, kind: output, shape index: {}]
  %s7 = sld [smem:[#allocation0]]
  $region81: #{swin_layer_forward.2} parent=0
    _
  %s9 = ssub.s32 1, %s7
  %s10 = scalar_select 0, %s9, %s7
  $region1: #{swin_layer_forward.2} parent=0
    #allocation2 [shape = 'u8[81920]{0}', space=vmem, size = 0x14000, scoped, tag = 'input window, operand 0']
    #allocation3 [shape = 's32[2]{0}', space=sflag, size = 0x8, scoped, tag = 'scoped memory for swin_layer_forward.2']
    #allocation4 [shape = 's32[2]{0}', space=sflag, size = 0x8, scoped, tag = 'scoped memory for swin_layer_forward.2']
    #allocation5 [shape = 'u8[8192]{0}', space=vmem, size = 0x2000, scoped, tag = 'input window, operand 1, single buffered']
    #allocation6 [shape = 's32[1]{0}', space=sflag, size = 0x4, scoped, tag = 'scoped memory for swin_layer_forward.2']
    #allocation7 [shape = 'u8[512]{0}', space=vmem, size = 0x400, scoped, tag = 'input window, operand 2, single buffered']
    #allocation8 [shape = 'u8[8192]{0}', space=vmem, size = 0x2000, scoped, tag = 'input window, operand 3, single buffered']
    #allocation9 [shape = 's32[1]{0}', space=sflag, size = 0x4, scoped, tag = 'scoped memory for swin_layer_forward.2']
    #allocation10 [shape = 'u8[512]{0}', space=vmem, size = 0x400, scoped, tag = 'input window, operand 4, single buffered']
    #allocation11 [shape = 'u8[32768]{0}', space=vmem, size = 0x8000, scoped, tag = 'input window, operand 5, single buffered']
    #allocation12 [shape = 's32[1]{0}', space=sflag, size = 0x4, scoped, tag = 'scoped memory for swin_layer_forward.2']
    #allocation13 [shape = 'u8[81920]{0}', space=vmem, size = 0x14000, scoped, tag = 'output window, operand 0']
    %11 = vsyncpa [#allocation3], 0
    %s12 = scalar_lea.sflag [#allocation3], 1
    %13 = vsyncpa %s12, 0
    %14 = vsyncpa [#allocation6], 0
    %15 = vsyncpa [#allocation9], 0
    %16 = vsyncpa [#allocation12], 0
    %17 = vsyncpa [#allocation4], 0
    %s18 = scalar_lea.sflag [#allocation4], 1
    %19 = vsyncpa %s18, 0
    loop: start=0, step=1, limit=4
    $region2: #{swin_layer_forward.2} parent=1 // loop_pre_header
      _
    $region3: #{swin_layer_forward.2} parent=1 // loop_header
      %s21 = sphi 0, %s25
      %p22 = scmp.ge.s32.totalorder %s21, 4
      %s31 = sphi 0, %s33
      %s34 = sphi 0, %s31
      %s35 = sphi 0, %s34
      %s51 = sphi 0, %s35
      %s55 = sphi 0, %s55
      %s57 = sphi 0, %s55
      %s58 = sphi 0, %s57
      %s72 = sphi 0, %s58
      %s76 = sphi 0, %s76
      %s78 = sphi 0, %s76
      %s79 = sphi 0, %s78
      %s93 = sphi 0, %s79
      %s97 = sphi 0, %s97
      %s99 = sphi 0, %s97
      %s100 = sphi 0, %s99
      %s114 = sphi 0, %s100
      %s118 = sphi 0, %s118
      %s120 = sphi 0, %s118
      %s121 = sphi 0, %s120
      %s135 = sphi 0, %s121
      %s139 = sphi 0, %s139
      %s141 = sphi 0, %s139
      %s142 = sphi 0, %s141
      %s156 = sphi 0, %s142
      %s162 = sphi 0, %s164
      %s165 = sphi 0, %s162
      %s166 = sphi 0, %s165
      %s182 = sphi 0, %s166
    $region4: #{swin_layer_forward.2} parent=1 // loop_header_branch
      %24 = sbr.rel (%p22) target = $region8
    $region5: #{swin_layer_forward.2} parent=1 // loop_body
      %s26 = ssub.s32 %s21, 1
      %s27 = ssub.s32 %s21, 2
      %s28 = sadd.s32 %s21, 1
      %s29 = ssub.s32 %s21, %s28
      %p30 = scmp.eq.s32.totalorder %s29, 0
      %s32 = sadd.s32 %s31, 1
      %s33 = scalar_select %p30, %s31, %s32
      %p36 = pneg %p30
      %p37 = scmp.eq.s32.totalorder %s21, 1
      %p38 = por %p36, %p37
      %p39 = scmp.ne.s32.totalorder %s31, %s34
      %p40 = scmp.eq.s32.totalorder %s21, 0
      %p41 = por %p39, %p40
      %p42 = scmp.ne.s32.totalorder %s31, %s34
      %p43 = scmp.eq.s32.totalorder %s26, 1
      %p44 = por %p42, %p43
      %p45 = scmp.ne.s32.totalorder %s34, %s35
      %p46 = scmp.eq.s32.totalorder %s26, 0
      %p47 = por %p45, %p46
      %p48 = scmp.ne.s32.totalorder %s34, %s35
      %p49 = scmp.eq.s32.totalorder %s27, 1
      %p50 = por %p48, %p49
      %p52 = scmp.ne.s32.totalorder %s35, %s51
      %p53 = scmp.eq.s32.totalorder %s27, 0
      %p54 = por %p52, %p53
      %s56 = sadd.s32 %s55, 1
      %p59 = scmp.eq.s32.totalorder %s21, 1
      %p60 = scmp.ne.s32.totalorder %s55, %s57
      %p61 = scmp.eq.s32.totalorder %s21, 0
      %p62 = por %p60, %p61
      %p63 = scmp.ne.s32.totalorder %s55, %s57
      %p64 = scmp.eq.s32.totalorder %s26, 1
      %p65 = por %p63, %p64
      %p66 = scmp.ne.s32.totalorder %s57, %s58
      %p67 = scmp.eq.s32.totalorder %s26, 0
      %p68 = por %p66, %p67
      %p69 = scmp.ne.s32.totalorder %s57, %s58
      %p70 = scmp.eq.s32.totalorder %s27, 1
      %p71 = por %p69, %p70
      %p73 = scmp.ne.s32.totalorder %s58, %s72
      %p74 = scmp.eq.s32.totalorder %s27, 0
      %p75 = por %p73, %p74
      %s77 = sadd.s32 %s76, 1
      %p80 = scmp.eq.s32.totalorder %s21, 1
      %p81 = scmp.ne.s32.totalorder %s76, %s78
      %p82 = scmp.eq.s32.totalorder %s21, 0
      %p83 = por %p81, %p82
      %p84 = scmp.ne.s32.totalorder %s76, %s78
      %p85 = scmp.eq.s32.totalorder %s26, 1
      %p86 = por %p84, %p85
      %p87 = scmp.ne.s32.totalorder %s78, %s79
      %p88 = scmp.eq.s32.totalorder %s26, 0
      %p89 = por %p87, %p88
      %p90 = scmp.ne.s32.totalorder %s78, %s79
      %p91 = scmp.eq.s32.totalorder %s27, 1
      %p92 = por %p90, %p91
      %p94 = scmp.ne.s32.totalorder %s79, %s93
      %p95 = scmp.eq.s32.totalorder %s27, 0
      %p96 = por %p94, %p95
      %s98 = sadd.s32 %s97, 1
      %p101 = scmp.eq.s32.totalorder %s21, 1
      %p102 = scmp.ne.s32.totalorder %s97, %s99
      %p103 = scmp.eq.s32.totalorder %s21, 0
      %p104 = por %p102, %p103
      %p105 = scmp.ne.s32.totalorder %s97, %s99
      %p106 = scmp.eq.s32.totalorder %s26, 1
      %p107 = por %p105, %p106
      %p108 = scmp.ne.s32.totalorder %s99, %s100
      %p109 = scmp.eq.s32.totalorder %s26, 0
      %p110 = por %p108, %p109
      %p111 = scmp.ne.s32.totalorder %s99, %s100
      %p112 = scmp.eq.s32.totalorder %s27, 1
      %p113 = por %p111, %p112
      %p115 = scmp.ne.s32.totalorder %s100, %s114
      %p116 = scmp.eq.s32.totalorder %s27, 0
      %p117 = por %p115, %p116
      %s119 = sadd.s32 %s118, 1
      %p122 = scmp.eq.s32.totalorder %s21, 1
      %p123 = scmp.ne.s32.totalorder %s118, %s120
      %p124 = scmp.eq.s32.totalorder %s21, 0
      %p125 = por %p123, %p124
      %p126 = scmp.ne.s32.totalorder %s118, %s120
      %p127 = scmp.eq.s32.totalorder %s26, 1
      %p128 = por %p126, %p127
      %p129 = scmp.ne.s32.totalorder %s120, %s121
      %p130 = scmp.eq.s32.totalorder %s26, 0
      %p131 = por %p129, %p130
      %p132 = scmp.ne.s32.totalorder %s120, %s121
      %p133 = scmp.eq.s32.totalorder %s27, 1
      %p134 = por %p132, %p133
      %p136 = scmp.ne.s32.totalorder %s121, %s135
      %p137 = scmp.eq.s32.totalorder %s27, 0
      %p138 = por %p136, %p137
      %s140 = sadd.s32 %s139, 1
      %p143 = scmp.eq.s32.totalorder %s21, 1
      %p144 = scmp.ne.s32.totalorder %s139, %s141
      %p145 = scmp.eq.s32.totalorder %s21, 0
      %p146 = por %p144, %p145
      %p147 = scmp.ne.s32.totalorder %s139, %s141
      %p148 = scmp.eq.s32.totalorder %s26, 1
      %p149 = por %p147, %p148
      %p150 = scmp.ne.s32.totalorder %s141, %s142
      %p151 = scmp.eq.s32.totalorder %s26, 0
      %p152 = por %p150, %p151
      %p153 = scmp.ne.s32.totalorder %s141, %s142
      %p154 = scmp.eq.s32.totalorder %s27, 1
      %p155 = por %p153, %p154
      %p157 = scmp.ne.s32.totalorder %s142, %s156
      %p158 = scmp.eq.s32.totalorder %s27, 0
      %p159 = por %p157, %p158
      %s160 = ssub.s32 %s21, %s28
      %p161 = scmp.eq.s32.totalorder %s160, 0
      %s163 = sadd.s32 %s162, 1
      %s164 = scalar_select %p161, %s162, %s163
      %p167 = pneg %p161
      %p168 = scmp.eq.s32.totalorder %s21, 1
      %p169 = por %p167, %p168
      %p170 = scmp.ne.s32.totalorder %s162, %s165
      %p171 = scmp.eq.s32.totalorder %s21, 0
      %p172 = por %p170, %p171
      %p173 = scmp.ne.s32.totalorder %s162, %s165
      %p174 = scmp.eq.s32.totalorder %s26, 1
      %p175 = por %p173, %p174
      %p176 = scmp.ne.s32.totalorder %s165, %s166
      %p177 = scmp.eq.s32.totalorder %s26, 0
      %p178 = por %p176, %p177
      %p179 = scmp.ne.s32.totalorder %s165, %s166
      %p180 = scmp.eq.s32.totalorder %s27, 1
      %p181 = por %p179, %p180
      %p183 = scmp.ne.s32.totalorder %s166, %s182
      %p184 = scmp.eq.s32.totalorder %s27, 0
      %p185 = por %p183, %p184
      %p186 = scmp.le.s32.totalorder 1, %s21
      %p187 = scmp.lt.s32.totalorder %s21, 3
      %p188 = pnand %p186, %p187
      %p189 = pneg %p188
      // Predicated region
      $region9: #{swin_layer_forward.2} parent=5 // pred_check
        _
      $region10: #{swin_layer_forward.2} parent=5 // pred_check_branch
        %191 = sbr.rel (%p188) target = $region12
      $region11: #{swin_layer_forward.2} parent=5 // pred_region
        %s192 = ssub.s32 %s21, 1
        // Predicated region
        $region13: #{swin_layer_forward.2} parent=11 // pred_check
          %p193 = pneg %p68
        $region14: #{swin_layer_forward.2} parent=11 // pred_check_branch
          %195 = sbr.rel (%p193) target = $region16
        $region15: #{swin_layer_forward.2} parent=11 // pred_region
          %s197 = ssub.s32 256, 256
          %198 = vsyncadd [#allocation6], %s197
          %s199 = sshll.u32 [#allocation5], 4
          %s200 = int_to_ptr.vmem [resolvable:$true] %s199
          %205 = dma.hbm_to_vmem [thread:$0]  %s1, 256, %s200, [#allocation6], 64, 64, 4
        $region16: #{swin_layer_forward.2} parent=11 // pred_fallthru
          _
        // Predicated region
        $region17: #{swin_layer_forward.2} parent=11 // pred_check
          %p206 = pneg %p89
        $region18: #{swin_layer_forward.2} parent=11 // pred_check_branch
          %208 = sbr.rel (%p206) target = $region20
        $region19: #{swin_layer_forward.2} parent=11 // pred_region
          %s210 = ssub.s32 16, 16
          %211 = vsyncadd [#allocation6], %s210
          %s213 = sshll.u32 [#allocation7], 4
          %s214 = int_to_ptr.vmem [resolvable:$true] %s213
          %216 = dma.hbm_to_vmem [thread:$0]  %s2, 16, %s214, [#allocation6]
        $region20: #{swin_layer_forward.2} parent=11 // pred_fallthru
          _
        // Predicated region
        $region21: #{swin_layer_forward.2} parent=11 // pred_check
          %p217 = pneg %p110
        $region22: #{swin_layer_forward.2} parent=11 // pred_check_branch
          %219 = sbr.rel (%p217) target = $region24
        $region23: #{swin_layer_forward.2} parent=11 // pred_region
          %s221 = ssub.s32 256, 256
          %222 = vsyncadd [#allocation9], %s221
          %s223 = sshll.u32 [#allocation8], 4
          %s224 = int_to_ptr.vmem [resolvable:$true] %s223
          %229 = dma.hbm_to_vmem [thread:$0]  %s3, 256, %s224, [#allocation9], 64, 64, 4
        $region24: #{swin_layer_forward.2} parent=11 // pred_fallthru
          _
        // Predicated region
        $region25: #{swin_layer_forward.2} parent=11 // pred_check
          %p230 = pneg %p131
        $region26: #{swin_layer_forward.2} parent=11 // pred_check_branch
          %232 = sbr.rel (%p230) target = $region28
        $region27: #{swin_layer_forward.2} parent=11 // pred_region
          %s234 = ssub.s32 16, 16
          %235 = vsyncadd [#allocation9], %s234
          %s237 = sshll.u32 [#allocation10], 4
          %s238 = int_to_ptr.vmem [resolvable:$true] %s237
          %240 = dma.hbm_to_vmem [thread:$0]  %s4, 16, %s238, [#allocation9]
        $region28: #{swin_layer_forward.2} parent=11 // pred_fallthru
          _
        // Predicated region
        $region29: #{swin_layer_forward.2} parent=11 // pred_check
          %p241 = pneg %p152
        $region30: #{swin_layer_forward.2} parent=11 // pred_check_branch
          %243 = sbr.rel (%p241) target = $region32
        $region31: #{swin_layer_forward.2} parent=11 // pred_region
          %s245 = ssub.s32 1024, 1024
          %246 = vsyncadd [#allocation12], %s245
          %s247 = sshll.u32 [#allocation11], 4
          %s248 = int_to_ptr.vmem [resolvable:$true] %s247
          %253 = dma.hbm_to_vmem [thread:$0]  %s5, 1024, %s248, [#allocation12], 128, 128, 8
        $region32: #{swin_layer_forward.2} parent=11 // pred_fallthru
          _
      $region12: #{swin_layer_forward.2} parent=5 // pred_fallthru
        _
      %p254 = scmp.lt.s32.totalorder %s21, 2
      // Predicated region
      $region33: #{swin_layer_forward.2} parent=5 // pred_check
        %p255 = pneg %p254
      $region34: #{swin_layer_forward.2} parent=5 // pred_check_branch
        %257 = sbr.rel (%p255) target = $region36
      $region35: #{swin_layer_forward.2} parent=5 // pred_region
        // Predicated region
        $region37: #{swin_layer_forward.2} parent=35 // pred_check
          %p258 = pneg %p41
        $region38: #{swin_layer_forward.2} parent=35 // pred_check_branch
          %260 = sbr.rel (%p258) target = $region40
        $region39: #{swin_layer_forward.2} parent=35 // pred_region
          %s261 = sand.u32 %s31, 1
          %s262 = scalar_lea.sflag [#allocation3], %s261
          %s263 = sand.u32 %s31, 1
          %s264 = smul.addr %s263, 80
          %s265 = scalar_lea.vmem [#allocation2], %s264
          %s266 = smul.u32 5, %s21
          %s268 = ssub.s32 1280, 1280
          %269 = vsyncadd %s262, %s268
          %s270 = smul.addr %s266, 2
          %s271 = smul.addr %s270, 128
          %s272 = scalar_lea.hbm %s0, %s271
          %s273 = sshll.u32 %s265, 4
          %s274 = int_to_ptr.vmem [resolvable:$true] %s273
          %279 = dma.hbm_to_vmem [thread:$0]  %s272, 1280, %s274, %s262, 128, 128, 8
        $region40: #{swin_layer_forward.2} parent=35 // pred_fallthru
          _
      $region36: #{swin_layer_forward.2} parent=5 // pred_fallthru
        _
      %p280 = scmp.le.s32.totalorder 1, %s21
      %p281 = scmp.lt.s32.totalorder %s21, 3
      %p282 = pnand %p280, %p281
      %p283 = pneg %p282
      // Predicated region
      $region41: #{swin_layer_forward.2} parent=5 // pred_check
        _
      $region42: #{swin_layer_forward.2} parent=5 // pred_check_branch
        %285 = sbr.rel (%p282) target = $region44
      $region43: #{swin_layer_forward.2} parent=5 // pred_region
        %s286 = ssub.s32 %s21, 1
        %s287 = sand.u32 %s34, 1
        %s288 = scalar_lea.sflag [#allocation3], %s287
        %s289 = sand.u32 %s34, 1
        %s290 = smul.addr %s289, 80
        %s291 = scalar_lea.vmem [#allocation2], %s290
        // Predicated region
        $region45: #{swin_layer_forward.2} parent=43 // pred_check
          %p292 = pneg %p47
        $region46: #{swin_layer_forward.2} parent=43 // pred_check_branch
          %294 = sbr.rel (%p292) target = $region48
        $region47: #{swin_layer_forward.2} parent=43 // pred_region
          %295 = dma.done %s288, 1280
        $region48: #{swin_layer_forward.2} parent=43 // pred_fallthru
          _
        // Predicated region
        $region49: #{swin_layer_forward.2} parent=43 // pred_check
          %p296 = pneg %p68
        $region50: #{swin_layer_forward.2} parent=43 // pred_check_branch
          %298 = sbr.rel (%p296) target = $region52
        $region51: #{swin_layer_forward.2} parent=43 // pred_region
          %299 = dma.done [#allocation6], 256
        $region52: #{swin_layer_forward.2} parent=43 // pred_fallthru
          _
        // Predicated region
        $region53: #{swin_layer_forward.2} parent=43 // pred_check
          %p300 = pneg %p89
        $region54: #{swin_layer_forward.2} parent=43 // pred_check_branch
          %302 = sbr.rel (%p300) target = $region56
        $region55: #{swin_layer_forward.2} parent=43 // pred_region
          %303 = dma.done [#allocation6], 16
        $region56: #{swin_layer_forward.2} parent=43 // pred_fallthru
          _
        // Predicated region
        $region57: #{swin_layer_forward.2} parent=43 // pred_check
          %p304 = pneg %p110
        $region58: #{swin_layer_forward.2} parent=43 // pred_check_branch
          %306 = sbr.rel (%p304) target = $region60
        $region59: #{swin_layer_forward.2} parent=43 // pred_region
          %307 = dma.done [#allocation9], 256
        $region60: #{swin_layer_forward.2} parent=43 // pred_fallthru
          _
        // Predicated region
        $region61: #{swin_layer_forward.2} parent=43 // pred_check
          %p308 = pneg %p131
        $region62: #{swin_layer_forward.2} parent=43 // pred_check_branch
          %310 = sbr.rel (%p308) target = $region64
        $region63: #{swin_layer_forward.2} parent=43 // pred_region
          %311 = dma.done [#allocation9], 16
        $region64: #{swin_layer_forward.2} parent=43 // pred_fallthru
          _
        // Predicated region
        $region65: #{swin_layer_forward.2} parent=43 // pred_check
          %p312 = pneg %p152
        $region66: #{swin_layer_forward.2} parent=43 // pred_check_branch
          %314 = sbr.rel (%p312) target = $region68
        $region67: #{swin_layer_forward.2} parent=43 // pred_region
          %315 = dma.done [#allocation12], 1024
        $region68: #{swin_layer_forward.2} parent=43 // pred_fallthru
          _
        %s316 = sand.u32 %s34, 1
        %s317 = scalar_lea.sflag [#allocation3], %s316
        %s318 = sand.u32 %s34, 1
        %s319 = smul.addr %s318, 80
        %s320 = scalar_lea.vmem [#allocation2], %s319
        %p321 = pneg %p47
        %p322 = pneg %p44
        %p323 = pneg %p68
        %p324 = pneg %p65
        %p325 = pneg %p89
        %p326 = pneg %p86
        %p327 = pneg %p110
        %p328 = pneg %p107
        %p329 = pneg %p131
        %p330 = pneg %p128
        %p331 = pneg %p152
        %p332 = pneg %p149
        %p333 = pneg %p178
        %p334 = pneg %p175
        %s335 = sand.u32 %s165, 1
        %s336 = scalar_lea.sflag [#allocation4], %s335
        %s337 = sand.u32 %s165, 1
        %s338 = smul.addr %s337, 80
        %s339 = scalar_lea.vmem [#allocation13], %s338
        %s340 = smul.u32 5, %s26
        %s341 = smul.u32 5, %s26
        %v343 = vld [vmem:[%s291] sm:$0xff]
        %v344 = vld [vmem:[%s291 + $0x8] sm:$0xff]
        %v345 = vld [vmem:[%s291 + $0x10] sm:$0xff]
        %v346 = vld [vmem:[%s291 + $0x18] sm:$0xff]
        %v347 = vld [vmem:[%s291 + $0x20] sm:$0xff]
        %v348 = vld [vmem:[%s291 + $0x28] sm:$0xff]
        %v349 = vld [vmem:[%s291 + $0x30] sm:$0xff]
        %v350 = vld [vmem:[%s291 + $0x38] sm:$0xff]
        %v351 = vld [vmem:[%s291 + $0x40] sm:$0xff]
        %v352 = vld [vmem:[%s291 + $0x48] sm:$0xff]
        %vm353 = vcmask 261120
        %v354 = vsel %vm353, %v343, 0.0
        %355 = vadd.xlane.f32.xlu0 %v354
        %v356 = vpop.xlane.xlu0 %355
        %v357 = vsel %vm353, %v344, 0.0
        %358 = vadd.xlane.f32.xlu0 %v357
        %v359 = vpop.xlane.xlu0 %358
        %v360 = vsel %vm353, %v345, 0.0
        %361 = vadd.xlane.f32.xlu0 %v360
        %v362 = vpop.xlane.xlu0 %361
        %v363 = vsel %vm353, %v346, 0.0
        %364 = vadd.xlane.f32.xlu0 %v363
        %v365 = vpop.xlane.xlu0 %364
        %v366 = vsel %vm353, %v347, 0.0
        %367 = vadd.xlane.f32.xlu0 %v366
        %v368 = vpop.xlane.xlu0 %367
        %v369 = vsel %vm353, %v348, 0.0
        %370 = vadd.xlane.f32.xlu0 %v369
        %v371 = vpop.xlane.xlu0 %370
        %v372 = vsel %vm353, %v349, 0.0
        %373 = vadd.xlane.f32.xlu0 %v372
        %v374 = vpop.xlane.xlu0 %373
        %v375 = vsel %vm353, %v350, 0.0
        %376 = vadd.xlane.f32.xlu0 %v375
        %v377 = vpop.xlane.xlu0 %376
        %v378 = vsel %vm353, %v351, 0.0
        %379 = vadd.xlane.f32.xlu0 %v378
        %v380 = vpop.xlane.xlu0 %379
        %v381 = vsel %vm353, %v352, 0.0
        %382 = vadd.xlane.f32.xlu0 %v381
        %v383 = vpop.xlane.xlu0 %382
        %v384 = vrcp.pop 32.0
        %v385 = vmul.f32 %v356, %v384
        %v386 = vmul.f32 %v359, %v384
        %v387 = vmul.f32 %v362, %v384
        %v388 = vmul.f32 %v365, %v384
        %v389 = vmul.f32 %v368, %v384
        %v390 = vmul.f32 %v371, %v384
        %v391 = vmul.f32 %v374, %v384
        %v392 = vmul.f32 %v377, %v384
        %v393 = vmul.f32 %v380, %v384
        %v394 = vmul.f32 %v383, %v384
        %v395 = vsub.f32 %v343, %v385
        %v396 = vsub.f32 %v344, %v386
        %v397 = vsub.f32 %v345, %v387
        %v398 = vsub.f32 %v346, %v388
        %v399 = vsub.f32 %v347, %v389
        %v400 = vsub.f32 %v348, %v390
        %v401 = vsub.f32 %v349, %v391
        %v402 = vsub.f32 %v350, %v392
        %v403 = vsub.f32 %v351, %v393
        %v404 = vsub.f32 %v352, %v394
        %v405 = vmul.f32 %v395, %v395
        %v406 = vmul.f32 %v396, %v396
        %v407 = vmul.f32 %v397, %v397
        %v408 = vmul.f32 %v398, %v398
        %v409 = vmul.f32 %v399, %v399
        %v410 = vmul.f32 %v400, %v400
        %v411 = vmul.f32 %v401, %v401
        %v412 = vmul.f32 %v402, %v402
        %v413 = vmul.f32 %v403, %v403
        %v414 = vmul.f32 %v404, %v404
        %v415 = vsel %vm353, %v405, 0.0
        %416 = vadd.xlane.f32.xlu0 %v415
        %v417 = vpop.xlane.xlu0 %416
        %v418 = vsel %vm353, %v406, 0.0
        %419 = vadd.xlane.f32.xlu0 %v418
        %v420 = vpop.xlane.xlu0 %419
        %v421 = vsel %vm353, %v407, 0.0
        %422 = vadd.xlane.f32.xlu0 %v421
        %v423 = vpop.xlane.xlu0 %422
        %v424 = vsel %vm353, %v408, 0.0
        %425 = vadd.xlane.f32.xlu0 %v424
        %v426 = vpop.xlane.xlu0 %425
        %v427 = vsel %vm353, %v409, 0.0
        %428 = vadd.xlane.f32.xlu0 %v427
        %v429 = vpop.xlane.xlu0 %428
        %v430 = vsel %vm353, %v410, 0.0
        %431 = vadd.xlane.f32.xlu0 %v430
        %v432 = vpop.xlane.xlu0 %431
        %v433 = vsel %vm353, %v411, 0.0
        %434 = vadd.xlane.f32.xlu0 %v433
        %v435 = vpop.xlane.xlu0 %434
        %v436 = vsel %vm353, %v412, 0.0
        %437 = vadd.xlane.f32.xlu0 %v436
        %v438 = vpop.xlane.xlu0 %437
        %v439 = vsel %vm353, %v413, 0.0
        %440 = vadd.xlane.f32.xlu0 %v439
        %v441 = vpop.xlane.xlu0 %440
        %v442 = vsel %vm353, %v414, 0.0
        %443 = vadd.xlane.f32.xlu0 %v442
        %v444 = vpop.xlane.xlu0 %443
        %v445 = vmul.f32 %v417, %v384
        %v446 = vmul.f32 %v420, %v384
        %v447 = vmul.f32 %v423, %v384
        %v448 = vmul.f32 %v426, %v384
        %v449 = vmul.f32 %v429, %v384
        %v450 = vmul.f32 %v432, %v384
        %v451 = vmul.f32 %v435, %v384
        %v452 = vmul.f32 %v438, %v384
        %v453 = vmul.f32 %v441, %v384
        %v454 = vmul.f32 %v444, %v384
        %v455 = vadd.f32 %v445, 1e-05
        %v456 = vadd.f32 %v446, 1e-05
        %v457 = vadd.f32 %v447, 1e-05
        %v458 = vadd.f32 %v448, 1e-05
        %v459 = vadd.f32 %v449, 1e-05
        %v460 = vadd.f32 %v450, 1e-05
        %v461 = vadd.f32 %v451, 1e-05
        %v462 = vadd.f32 %v452, 1e-05
        %v463 = vadd.f32 %v453, 1e-05
        %v464 = vadd.f32 %v454, 1e-05
        %v465 = vrsqrt.pop %v455
        %v466 = vrsqrt.pop %v456
        %v467 = vrsqrt.pop %v457
        %v468 = vrsqrt.pop %v458
        %v469 = vrsqrt.pop %v459
        %v470 = vrsqrt.pop %v460
        %v471 = vrsqrt.pop %v461
        %v472 = vrsqrt.pop %v462
        %v473 = vrsqrt.pop %v463
        %v474 = vrsqrt.pop %v464
        %v475 = vmul.f32 %v395, %v465
        %v476 = vmul.f32 %v396, %v466
        %v477 = vmul.f32 %v397, %v467
        %v478 = vmul.f32 %v398, %v468
        %v479 = vmul.f32 %v399, %v469
        %v480 = vmul.f32 %v400, %v470
        %v481 = vmul.f32 %v401, %v471
        %v482 = vmul.f32 %v402, %v472
        %v483 = vmul.f32 %v403, %v473
        %v484 = vmul.f32 %v404, %v474
        %v485 = vpack.c.bf16 %v476, %v475
        %v486 = vpack.c.bf16 %v478, %v477
        %v487 = vpack.c.bf16 %v480, %v479
        %v488 = vpack.c.bf16 %v482, %v481
        %v489 = vpack.c.bf16 %v484, %v483
        %v490 = vld [vmem:[#allocation5] sm:$0xf]
        %v491 = vld [vmem:[#allocation5 + $0x4] sm:$0xf]
        %v492 = vld [vmem:[#allocation5 + $0x8] sm:$0xf]
        %v493 = vld [vmem:[#allocation5 + $0xc] sm:$0xf]
        %v494 = vld [vmem:[#allocation7] sm:$0x1]
        %v496 = vlaneseq
        %v497 = vshrl.u32 %v496, 7
        %v498 = vsub.s32 0, %v497
        %v499 = vrot.slane %v494, %v498
        %v505 = vunpack.c.l.b16 %v490
        %v506 = vunpack.c.l.b16 %v491
        %v507 = vunpack.c.l.b16 %v492
        %v508 = vunpack.c.l.b16 %v493
        %v509 = vpack.c.b16 %v506, %v505
        %v510 = vpack.c.b16 %v508, %v507
        %v514 = vsel %vm353, %v485, 0
        %v517 = vsel %vm353, %v486, 0
        %v520 = vsel %vm353, %v487, 0
        %v523 = vsel %vm353, %v488, 0
        %v526 = vsel %vm353, %v489, 0
        %528 = vmatprep.subr.bf16.mxu0 0
        %529 = vmatpush1.bf16.msra.mxu0 %v509
        %530 = vmatprep.subr.bf16.mxu0 0
        %531 = vmatpush1.bf16.msra.mxu0 %v510
        %532 = vmatprep.subr.bf16.mxu0 0
        %533 = vmatpush1.bf16.msra.mxu0 0
        %534 = vmatprep.subr.bf16.mxu0 0
        %535 = vmatpush1.bf16.msra.mxu0 0
        %536 = vmatprep.subr.bf16.mxu0 0
        %537 = vmatpush1.bf16.msra.mxu0 0
        %538 = vmatprep.subr.bf16.mxu0 0
        %539 = vmatpush1.bf16.msra.mxu0 0
        %540 = vmatprep.subr.bf16.mxu0 0
        %541 = vmatpush1.bf16.msra.mxu0 0
        %542 = vmatprep.subr.bf16.mxu0 0
        %543 = vmatpush1.bf16.msra.mxu0 0
        %544 = vmatprep.subr.bf16.mxu0 0
        %545 = vmatpush1.bf16.msra.mxu0 0
        %546 = vmatprep.subr.bf16.mxu0 0
        %547 = vmatpush1.bf16.msra.mxu0 0
        %548 = vmatprep.subr.bf16.mxu0 0
        %549 = vmatpush1.bf16.msra.mxu0 0
        %550 = vmatprep.subr.bf16.mxu0 0
        %551 = vmatpush1.bf16.msra.mxu0 0
        %552 = vmatprep.subr.bf16.mxu0 0
        %553 = vmatpush1.bf16.msra.mxu0 0
        %554 = vmatprep.subr.bf16.mxu0 0
        %555 = vmatpush1.bf16.msra.mxu0 0
        %556 = vmatprep.subr.bf16.mxu0 0
        %557 = vmatpush1.bf16.msra.mxu0 0
        %558 = vmatprep.subr.bf16.mxu0 0
        %559 = vmatpush1.bf16.msra.mxu0 0
        %560 = vmatprep.mubr.bf16.mxu0 0
        %561 = vmatmul.mubr.bf16.gmra.mrb[0].mxu0 %v514
        %v562 = vpop.f32.mrb[0].mxu0
        %v563 = vadd.f32 %v499, %v562
        %v564 = vpop.f32.mrb[0].mxu0
        %v565 = vpop.f32.mrb[0].mxu0
        %v566 = vadd.f32 %v499, %v565
        %v567 = vpop.f32.mrb[0].mxu0
        %568 = vmatprep.mubr.bf16.mxu0 0
        %569 = vmatmul.mubr.bf16.gmra.mrb[0].mxu0 %v517
        %v570 = vpop.f32.mrb[0].mxu0
        %v571 = vadd.f32 %v499, %v570
        %v572 = vpop.f32.mrb[0].mxu0
        %v573 = vpop.f32.mrb[0].mxu0
        %v574 = vadd.f32 %v499, %v573
        %v575 = vpop.f32.mrb[0].mxu0
        %576 = vmatprep.mubr.bf16.mxu0 0
        %577 = vmatmul.mubr.bf16.gmra.mrb[0].mxu0 %v520
        %v578 = vpop.f32.mrb[0].mxu0
        %v579 = vadd.f32 %v499, %v578
        %v580 = vpop.f32.mrb[0].mxu0
        %v581 = vpop.f32.mrb[0].mxu0
        %v582 = vadd.f32 %v499, %v581
        %v583 = vpop.f32.mrb[0].mxu0
        %584 = vmatprep.mubr.bf16.mxu0 0
        %585 = vmatmul.mubr.bf16.gmra.mrb[0].mxu0 %v523
        %v586 = vpop.f32.mrb[0].mxu0
        %v587 = vadd.f32 %v499, %v586
        %v588 = vpop.f32.mrb[0].mxu0
        %v589 = vpop.f32.mrb[0].mxu0
        %v590 = vadd.f32 %v499, %v589
        %v591 = vpop.f32.mrb[0].mxu0
        %592 = vmatprep.mubr.bf16.mxu0 0
        %593 = vmatmul.mubr.bf16.gmra.mrb[0].mxu0 %v526
        %v594 = vpop.f32.mrb[0].mxu0
        %v595 = vadd.f32 %v499, %v594
        %v596 = vpop.f32.mrb[0].mxu0
        %v597 = vpop.f32.mrb[0].mxu0
        %v598 = vadd.f32 %v499, %v597
        %v599 = vpop.f32.mrb[0].mxu0
        %600 = vdwg.mxu0
        %v601 = vld [vmem:[#allocation11] sm:$0xff]
        %v602 = vld [vmem:[#allocation11 + $0x8] sm:$0xff]
        %v603 = vld [vmem:[#allocation11 + $0x10] sm:$0xff]
        %v604 = vld [vmem:[#allocation11 + $0x18] sm:$0xff]
        %v605 = vld [vmem:[#allocation11 + $0x20] sm:$0xff]
        %v606 = vld [vmem:[#allocation11 + $0x28] sm:$0xff]
        %v607 = vld [vmem:[#allocation11 + $0x30] sm:$0xff]
        %v608 = vld [vmem:[#allocation11 + $0x38] sm:$0xff]
        %v609 = vpack.c.bf16 %v566, %v563
        %v610 = vpack.c.bf16 %v574, %v571
        %v611 = vpack.c.bf16 %v582, %v579
        %v612 = vpack.c.bf16 %v590, %v587
        %v613 = vpack.c.bf16 %v598, %v595
        %615 = vrot.lane.b32.xlu0 %v609, 96
        %v616 = vpop.permute.xlu0 %615
        %vm617 = vcmask 64512
        %v619 = vsel %vm617, %v609, 0
        %v622 = vsel %vm617, %v616, 0
        %624 = vmatprep.subr.bf16.mxu0 0
        %625 = vmatpush1.bf16.xpose.msra.mxu0 %v622
        %626 = vmatprep.subr.bf16.mxu0 0
        %627 = vmatpush1.bf16.xpose.msra.mxu0 0
        %628 = vmatprep.subr.bf16.mxu0 0
        %629 = vmatpush1.bf16.xpose.msra.mxu0 0
        %630 = vmatprep.subr.bf16.mxu0 0
        %631 = vmatpush1.bf16.xpose.msra.mxu0 0
        %632 = vmatprep.subr.bf16.mxu0 0
        %633 = vmatpush1.bf16.xpose.msra.mxu0 0
        %634 = vmatprep.subr.bf16.mxu0 0
        %635 = vmatpush1.bf16.xpose.msra.mxu0 0
        %636 = vmatprep.subr.bf16.mxu0 0
        %637 = vmatpush1.bf16.xpose.msra.mxu0 0
        %638 = vmatprep.subr.bf16.mxu0 0
        %639 = vmatpush1.bf16.xpose.msra.mxu0 0
        %640 = vmatprep.subr.bf16.mxu0 0
        %641 = vmatpush1.bf16.xpose.msra.mxu0 0
        %642 = vmatprep.subr.bf16.mxu0 0
        %643 = vmatpush1.bf16.xpose.msra.mxu0 0
        %644 = vmatprep.subr.bf16.mxu0 0
        %645 = vmatpush1.bf16.xpose.msra.mxu0 0
        %646 = vmatprep.subr.bf16.mxu0 0
        %647 = vmatpush1.bf16.xpose.msra.mxu0 0
        %648 = vmatprep.subr.bf16.mxu0 0
        %649 = vmatpush1.bf16.xpose.msra.mxu0 0
        %650 = vmatprep.subr.bf16.mxu0 0
        %651 = vmatpush1.bf16.xpose.msra.mxu0 0
        %652 = vmatprep.subr.bf16.mxu0 0
        %653 = vmatpush1.bf16.xpose.msra.mxu0 0
        %654 = vmatprep.subr.bf16.mxu0 0
        %655 = vmatpush1.bf16.xpose.msra.mxu0 0
        %656 = vmatprep.mubr.bf16.mxu0 0
        %657 = vmatmul.mubr.bf16.gmra.mrb[0].mxu0 %v619
        %v658 = vpop.f32.mrb[0].mxu0
        %v659 = vadd.f32 %v601, %v658
        %v660 = vpop.f32.mrb[0].mxu0
        %v661 = vpop.f32.mrb[0].mxu0
        %v662 = vadd.f32 %v602, %v661
        %v663 = vpop.f32.mrb[0].mxu0
        %664 = vdwg.mxu0
        %666 = vrot.lane.b32.xlu0 %v610, 96
        %v667 = vpop.permute.xlu0 %666
        %v669 = vsel %vm617, %v610, 0
        %v672 = vsel %vm617, %v667, 0
        %674 = vmatprep.subr.bf16.mxu0 0
        %675 = vmatpush1.bf16.xpose.msra.mxu0 %v672
        %676 = vmatprep.subr.bf16.mxu0 0
        %677 = vmatpush1.bf16.xpose.msra.mxu0 0
        %678 = vmatprep.subr.bf16.mxu0 0
        %679 = vmatpush1.bf16.xpose.msra.mxu0 0
        %680 = vmatprep.subr.bf16.mxu0 0
        %681 = vmatpush1.bf16.xpose.msra.mxu0 0
        %682 = vmatprep.subr.bf16.mxu0 0
        %683 = vmatpush1.bf16.xpose.msra.mxu0 0
        %684 = vmatprep.subr.bf16.mxu0 0
        %685 = vmatpush1.bf16.xpose.msra.mxu0 0
        %686 = vmatprep.subr.bf16.mxu0 0
        %687 = vmatpush1.bf16.xpose.msra.mxu0 0
        %688 = vmatprep.subr.bf16.mxu0 0
        %689 = vmatpush1.bf16.xpose.msra.mxu0 0
        %690 = vmatprep.subr.bf16.mxu0 0
        %691 = vmatpush1.bf16.xpose.msra.mxu0 0
        %692 = vmatprep.subr.bf16.mxu0 0
        %693 = vmatpush1.bf16.xpose.msra.mxu0 0
        %694 = vmatprep.subr.bf16.mxu0 0
        %695 = vmatpush1.bf16.xpose.msra.mxu0 0
        %696 = vmatprep.subr.bf16.mxu0 0
        %697 = vmatpush1.bf16.xpose.msra.mxu0 0
        %698 = vmatprep.subr.bf16.mxu0 0
        %699 = vmatpush1.bf16.xpose.msra.mxu0 0
        %700 = vmatprep.subr.bf16.mxu0 0
        %701 = vmatpush1.bf16.xpose.msra.mxu0 0
        %702 = vmatprep.subr.bf16.mxu0 0
        %703 = vmatpush1.bf16.xpose.msra.mxu0 0
        %704 = vmatprep.subr.bf16.mxu0 0
        %705 = vmatpush1.bf16.xpose.msra.mxu0 0
        %706 = vmatprep.mubr.bf16.mxu0 0
        %707 = vmatmul.mubr.bf16.gmra.mrb[0].mxu0 %v669
        %v708 = vpop.f32.mrb[0].mxu0
        %v709 = vadd.f32 %v601, %v708
        %v710 = vpop.f32.mrb[0].mxu0
        %v711 = vpop.f32.mrb[0].mxu0
        %v712 = vadd.f32 %v602, %v711
        %v713 = vpop.f32.mrb[0].mxu0
        %714 = vdwg.mxu0
        %716 = vrot.lane.b32.xlu0 %v611, 96
        %v717 = vpop.permute.xlu0 %716
        %v719 = vsel %vm617, %v611, 0
        %v722 = vsel %vm617, %v717, 0
        %724 = vmatprep.subr.bf16.mxu0 0
        %725 = vmatpush1.bf16.xpose.msra.mxu0 %v722
        %726 = vmatprep.subr.bf16.mxu0 0
        %727 = vmatpush1.bf16.xpose.msra.mxu0 0
        %728 = vmatprep.subr.bf16.mxu0 0
        %729 = vmatpush1.bf16.xpose.msra.mxu0 0
        %730 = vmatprep.subr.bf16.mxu0 0
        %731 = vmatpush1.bf16.xpose.msra.mxu0 0
        %732 = vmatprep.subr.bf16.mxu0 0
        %733 = vmatpush1.bf16.xpose.msra.mxu0 0
        %734 = vmatprep.subr.bf16.mxu0 0
        %735 = vmatpush1.bf16.xpose.msra.mxu0 0
        %736 = vmatprep.subr.bf16.mxu0 0
        %737 = vmatpush1.bf16.xpose.msra.mxu0 0
        %738 = vmatprep.subr.bf16.mxu0 0
        %739 = vmatpush1.bf16.xpose.msra.mxu0 0
        %740 = vmatprep.subr.bf16.mxu0 0
        %741 = vmatpush1.bf16.xpose.msra.mxu0 0
        %742 = vmatprep.subr.bf16.mxu0 0
        %743 = vmatpush1.bf16.xpose.msra.mxu0 0
        %744 = vmatprep.subr.bf16.mxu0 0
        %745 = vmatpush1.bf16.xpose.msra.mxu0 0
        %746 = vmatprep.subr.bf16.mxu0 0
        %747 = vmatpush1.bf16.xpose.msra.mxu0 0
        %748 = vmatprep.subr.bf16.mxu0 0
        %749 = vmatpush1.bf16.xpose.msra.mxu0 0
        %750 = vmatprep.subr.bf16.mxu0 0
        %751 = vmatpush1.bf16.xpose.msra.mxu0 0
        %752 = vmatprep.subr.bf16.mxu0 0
        %753 = vmatpush1.bf16.xpose.msra.mxu0 0
        %754 = vmatprep.subr.bf16.mxu0 0
        %755 = vmatpush1.bf16.xpose.msra.mxu0 0
        %756 = vmatprep.mubr.bf16.mxu0 0
        %757 = vmatmul.mubr.bf16.gmra.mrb[0].mxu0 %v719
        %v758 = vpop.f32.mrb[0].mxu0
        %v759 = vadd.f32 %v601, %v758
        %v760 = vpop.f32.mrb[0].mxu0
        %v761 = vpop.f32.mrb[0].mxu0
        %v762 = vadd.f32 %v602, %v761
        %v763 = vpop.f32.mrb[0].mxu0
        %764 = vdwg.mxu0
        %766 = vrot.lane.b32.xlu0 %v612, 96
        %v767 = vpop.permute.xlu0 %766
        %v769 = vsel %vm617, %v612, 0
        %v772 = vsel %vm617, %v767, 0
        %774 = vmatprep.subr.bf16.mxu0 0
        %775 = vmatpush1.bf16.xpose.msra.mxu0 %v772
        %776 = vmatprep.subr.bf16.mxu0 0
        %777 = vmatpush1.bf16.xpose.msra.mxu0 0
        %778 = vmatprep.subr.bf16.mxu0 0
        %779 = vmatpush1.bf16.xpose.msra.mxu0 0
        %780 = vmatprep.subr.bf16.mxu0 0
        %781 = vmatpush1.bf16.xpose.msra.mxu0 0
        %782 = vmatprep.subr.bf16.mxu0 0
        %783 = vmatpush1.bf16.xpose.msra.mxu0 0
        %784 = vmatprep.subr.bf16.mxu0 0
        %785 = vmatpush1.bf16.xpose.msra.mxu0 0
        %786 = vmatprep.subr.bf16.mxu0 0
        %787 = vmatpush1.bf16.xpose.msra.mxu0 0
        %788 = vmatprep.subr.bf16.mxu0 0
        %789 = vmatpush1.bf16.xpose.msra.mxu0 0
        %790 = vmatprep.subr.bf16.mxu0 0
        %791 = vmatpush1.bf16.xpose.msra.mxu0 0
        %792 = vmatprep.subr.bf16.mxu0 0
        %793 = vmatpush1.bf16.xpose.msra.mxu0 0
        %794 = vmatprep.subr.bf16.mxu0 0
        %795 = vmatpush1.bf16.xpose.msra.mxu0 0
        %796 = vmatprep.subr.bf16.mxu0 0
        %797 = vmatpush1.bf16.xpose.msra.mxu0 0
        %798 = vmatprep.subr.bf16.mxu0 0
        %799 = vmatpush1.bf16.xpose.msra.mxu0 0
        %800 = vmatprep.subr.bf16.mxu0 0
        %801 = vmatpush1.bf16.xpose.msra.mxu0 0
        %802 = vmatprep.subr.bf16.mxu0 0
        %803 = vmatpush1.bf16.xpose.msra.mxu0 0
        %804 = vmatprep.subr.bf16.mxu0 0
        %805 = vmatpush1.bf16.xpose.msra.mxu0 0
        %806 = vmatprep.mubr.bf16.mxu0 0
        %807 = vmatmul.mubr.bf16.gmra.mrb[0].mxu0 %v769
        %v808 = vpop.f32.mrb[0].mxu0
        %v809 = vadd.f32 %v601, %v808
        %v810 = vpop.f32.mrb[0].mxu0
        %v811 = vpop.f32.mrb[0].mxu0
        %v812 = vadd.f32 %v602, %v811
        %v813 = vpop.f32.mrb[0].mxu0
        %814 = vdwg.mxu0
        %816 = vrot.lane.b32.xlu0 %v613, 96
        %v817 = vpop.permute.xlu0 %816
        %v819 = vsel %vm617, %v613, 0
        %v822 = vsel %vm617, %v817, 0
        %824 = vmatprep.subr.bf16.mxu0 0
        %825 = vmatpush1.bf16.xpose.msra.mxu0 %v822
        %826 = vmatprep.subr.bf16.mxu0 0
        %827 = vmatpush1.bf16.xpose.msra.mxu0 0
        %828 = vmatprep.subr.bf16.mxu0 0
        %829 = vmatpush1.bf16.xpose.msra.mxu0 0
        %830 = vmatprep.subr.bf16.mxu0 0
        %831 = vmatpush1.bf16.xpose.msra.mxu0 0
        %832 = vmatprep.subr.bf16.mxu0 0
        %833 = vmatpush1.bf16.xpose.msra.mxu0 0
        %834 = vmatprep.subr.bf16.mxu0 0
        %835 = vmatpush1.bf16.xpose.msra.mxu0 0
        %836 = vmatprep.subr.bf16.mxu0 0
        %837 = vmatpush1.bf16.xpose.msra.mxu0 0
        %838 = vmatprep.subr.bf16.mxu0 0
        %839 = vmatpush1.bf16.xpose.msra.mxu0 0
        %840 = vmatprep.subr.bf16.mxu0 0
        %841 = vmatpush1.bf16.xpose.msra.mxu0 0
        %842 = vmatprep.subr.bf16.mxu0 0
        %843 = vmatpush1.bf16.xpose.msra.mxu0 0
        %844 = vmatprep.subr.bf16.mxu0 0
        %845 = vmatpush1.bf16.xpose.msra.mxu0 0
        %846 = vmatprep.subr.bf16.mxu0 0
        %847 = vmatpush1.bf16.xpose.msra.mxu0 0
        %848 = vmatprep.subr.bf16.mxu0 0
        %849 = vmatpush1.bf16.xpose.msra.mxu0 0
        %850 = vmatprep.subr.bf16.mxu0 0
        %851 = vmatpush1.bf16.xpose.msra.mxu0 0
        %852 = vmatprep.subr.bf16.mxu0 0
        %853 = vmatpush1.bf16.xpose.msra.mxu0 0
        %854 = vmatprep.subr.bf16.mxu0 0
        %855 = vmatpush1.bf16.xpose.msra.mxu0 0
        %856 = vmatprep.mubr.bf16.mxu0 0
        %857 = vmatmul.mubr.bf16.gmra.mrb[0].mxu0 %v819
        %v858 = vpop.f32.mrb[0].mxu0
        %v859 = vadd.f32 %v601, %v858
        %v860 = vpop.f32.mrb[0].mxu0
        %v861 = vpop.f32.mrb[0].mxu0
        %v862 = vadd.f32 %v602, %v861
        %v863 = vpop.f32.mrb[0].mxu0
        %864 = vdwg.mxu0
        %vm865 = vcmask 130048
        %v866 = vsel %vm865, %v659, -inf
        %867 = vmax.xlane.f32.xlu0 %v866
        %v868 = vpop.xlane.xlu0 %867
        %v869 = vsel %vm865, %v662, -inf
        %870 = vmax.xlane.f32.xlu0 %v869
        %v871 = vpop.xlane.xlu0 %870
        %v872 = vsel %vm865, %v709, -inf
        %873 = vmax.xlane.f32.xlu0 %v872
        %v874 = vpop.xlane.xlu0 %873
        %v875 = vsel %vm865, %v712, -inf
        %876 = vmax.xlane.f32.xlu0 %v875
        %v877 = vpop.xlane.xlu0 %876
        %v878 = vsel %vm865, %v759, -inf
        %879 = vmax.xlane.f32.xlu0 %v878
        %v880 = vpop.xlane.xlu0 %879
        %v881 = vsel %vm865, %v762, -inf
        %882 = vmax.xlane.f32.xlu0 %v881
        %v883 = vpop.xlane.xlu0 %882
        %v884 = vsel %vm865, %v809, -inf
        %885 = vmax.xlane.f32.xlu0 %v884
        %v886 = vpop.xlane.xlu0 %885
        %v887 = vsel %vm865, %v812, -inf
        %888 = vmax.xlane.f32.xlu0 %v887
        %v889 = vpop.xlane.xlu0 %888
        %v890 = vsel %vm865, %v859, -inf
        %891 = vmax.xlane.f32.xlu0 %v890
        %v892 = vpop.xlane.xlu0 %891
        %v893 = vsel %vm865, %v862, -inf
        %894 = vmax.xlane.f32.xlu0 %v893
        %v895 = vpop.xlane.xlu0 %894
        %v896 = vsub.f32 %v659, %v868
        %v897 = vsub.f32 %v662, %v871
        %v898 = vsub.f32 %v709, %v874
        %v899 = vsub.f32 %v712, %v877
        %v900 = vsub.f32 %v759, %v880
        %v901 = vsub.f32 %v762, %v883
        %v902 = vsub.f32 %v809, %v886
        %v903 = vsub.f32 %v812, %v889
        %v904 = vsub.f32 %v859, %v892
        %v905 = vsub.f32 %v862, %v895
        %v906 = vmul.f32 %v896, 1.442695
        %v907 = vpow.pop %v906
        %v908 = vmul.f32 %v897, 1.442695
        %v909 = vpow.pop %v908
        %v910 = vmul.f32 %v898, 1.442695
        %v911 = vpow.pop %v910
        %v912 = vmul.f32 %v899, 1.442695
        %v913 = vpow.pop %v912
        %v914 = vmul.f32 %v900, 1.442695
        %v915 = vpow.pop %v914
        %v916 = vmul.f32 %v901, 1.442695
        %v917 = vpow.pop %v916
        %v918 = vmul.f32 %v902, 1.442695
        %v919 = vpow.pop %v918
        %v920 = vmul.f32 %v903, 1.442695
        %v921 = vpow.pop %v920
        %v922 = vmul.f32 %v904, 1.442695
        %v923 = vpow.pop %v922
        %v924 = vmul.f32 %v905, 1.442695
        %v925 = vpow.pop %v924
        %v926 = vsel %vm865, %v907, 0.0
        %927 = vadd.xlane.f32.xlu0 %v926
        %v928 = vpop.xlane.xlu0 %927
        %v929 = vsel %vm865, %v909, 0.0
        %930 = vadd.xlane.f32.xlu0 %v929
        %v931 = vpop.xlane.xlu0 %930
        %v932 = vsel %vm865, %v911, 0.0
        %933 = vadd.xlane.f32.xlu0 %v932
        %v934 = vpop.xlane.xlu0 %933
        %v935 = vsel %vm865, %v913, 0.0
        %936 = vadd.xlane.f32.xlu0 %v935
        %v937 = vpop.xlane.xlu0 %936
        %v938 = vsel %vm865, %v915, 0.0
        %939 = vadd.xlane.f32.xlu0 %v938
        %v940 = vpop.xlane.xlu0 %939
        %v941 = vsel %vm865, %v917, 0.0
        %942 = vadd.xlane.f32.xlu0 %v941
        %v943 = vpop.xlane.xlu0 %942
        %v944 = vsel %vm865, %v919, 0.0
        %945 = vadd.xlane.f32.xlu0 %v944
        %v946 = vpop.xlane.xlu0 %945
        %v947 = vsel %vm865, %v921, 0.0
        %948 = vadd.xlane.f32.xlu0 %v947
        %v949 = vpop.xlane.xlu0 %948
        %v950 = vsel %vm865, %v923, 0.0
        %951 = vadd.xlane.f32.xlu0 %v950
        %v952 = vpop.xlane.xlu0 %951
        %v953 = vsel %vm865, %v925, 0.0
        %954 = vadd.xlane.f32.xlu0 %v953
        %v955 = vpop.xlane.xlu0 %954
        %v956 = vrcp.pop %v928
        %v957 = vrcp.pop %v931
        %v958 = vrcp.pop %v934
        %v959 = vrcp.pop %v937
        %v960 = vrcp.pop %v940
        %v961 = vrcp.pop %v943
        %v962 = vrcp.pop %v946
        %v963 = vrcp.pop %v949
        %v964 = vrcp.pop %v952
        %v965 = vrcp.pop %v955
        %v966 = vmul.f32 %v907, %v956
        %v967 = vmul.f32 %v909, %v957
        %v968 = vmul.f32 %v911, %v958
        %v969 = vmul.f32 %v913, %v959
        %v970 = vmul.f32 %v915, %v960
        %v971 = vmul.f32 %v917, %v961
        %v972 = vmul.f32 %v919, %v962
        %v973 = vmul.f32 %v921, %v963
        %v974 = vmul.f32 %v923, %v964
        %v975 = vmul.f32 %v925, %v965
        %v976 = vpack.c.bf16 %v967, %v966
        %v977 = vpack.c.bf16 %v969, %v968
        %v978 = vpack.c.bf16 %v971, %v970
        %v979 = vpack.c.bf16 %v973, %v972
        %v980 = vpack.c.bf16 %v975, %v974
        %981 = vrot.lane.b32.xlu0 %v609, 64
        %v982 = vpop.permute.xlu0 %981
        %v985 = vsel %vm865, %v976, 0
        %987 = vmatprep.subr.bf16.mxu0 0
        %988 = vmatpush1.bf16.msra.mxu0 %v982
        %989 = vmatprep.subr.bf16.mxu0 0
        %990 = vmatpush1.bf16.msra.mxu0 0
        %991 = vmatprep.subr.bf16.mxu0 0
        %992 = vmatpush1.bf16.msra.mxu0 0
        %993 = vmatprep.subr.bf16.mxu0 0
        %994 = vmatpush1.bf16.msra.mxu0 0
        %995 = vmatprep.subr.bf16.mxu0 0
        %996 = vmatpush1.bf16.msra.mxu0 0
        %997 = vmatprep.subr.bf16.mxu0 0
        %998 = vmatpush1.bf16.msra.mxu0 0
        %999 = vmatprep.subr.bf16.mxu0 0
        %1000 = vmatpush1.bf16.msra.mxu0 0
        %1001 = vmatprep.subr.bf16.mxu0 0
        %1002 = vmatpush1.bf16.msra.mxu0 0
        %1003 = vmatprep.subr.bf16.mxu0 0
        %1004 = vmatpush1.bf16.msra.mxu0 0
        %1005 = vmatprep.subr.bf16.mxu0 0
        %1006 = vmatpush1.bf16.msra.mxu0 0
        %1007 = vmatprep.subr.bf16.mxu0 0
        %1008 = vmatpush1.bf16.msra.mxu0 0
        %1009 = vmatprep.subr.bf16.mxu0 0
        %1010 = vmatpush1.bf16.msra.mxu0 0
        %1011 = vmatprep.subr.bf16.mxu0 0
        %1012 = vmatpush1.bf16.msra.mxu0 0
        %1013 = vmatprep.subr.bf16.mxu0 0
        %1014 = vmatpush1.bf16.msra.mxu0 0
        %1015 = vmatprep.subr.bf16.mxu0 0
        %1016 = vmatpush1.bf16.msra.mxu0 0
        %1017 = vmatprep.subr.bf16.mxu0 0
        %1018 = vmatpush1.bf16.msra.mxu0 0
        %1019 = vmatprep.mubr.bf16.mxu0 0
        %1020 = vmatmul.mubr.bf16.gmra.mrb[0].mxu0 %v985
        %v1021 = vpop.f32.mrb[0].mxu0
        %v1022 = vadd.f32 0.0, %v1021
        %v1023 = vpop.f32.mrb[0].mxu0
        %v1024 = vpop.f32.mrb[0].mxu0
        %v1025 = vadd.f32 0.0, %v1024
        %v1026 = vpop.f32.mrb[0].mxu0
        %1027 = vdwg.mxu0
        %1028 = vrot.lane.b32.xlu0 %v610, 64
        %v1029 = vpop.permute.xlu0 %1028
        %v1032 = vsel %vm865, %v977, 0
        %1034 = vmatprep.subr.bf16.mxu0 0
        %1035 = vmatpush1.bf16.msra.mxu0 %v1029
        %1036 = vmatprep.subr.bf16.mxu0 0
        %1037 = vmatpush1.bf16.msra.mxu0 0
        %1038 = vmatprep.subr.bf16.mxu0 0
        %1039 = vmatpush1.bf16.msra.mxu0 0
        %1040 = vmatprep.subr.bf16.mxu0 0
        %1041 = vmatpush1.bf16.msra.mxu0 0
        %1042 = vmatprep.subr.bf16.mxu0 0
        %1043 = vmatpush1.bf16.msra.mxu0 0
        %1044 = vmatprep.subr.bf16.mxu0 0
        %1045 = vmatpush1.bf16.msra.mxu0 0
        %1046 = vmatprep.subr.bf16.mxu0 0
        %1047 = vmatpush1.bf16.msra.mxu0 0
        %1048 = vmatprep.subr.bf16.mxu0 0
        %1049 = vmatpush1.bf16.msra.mxu0 0
        %1050 = vmatprep.subr.bf16.mxu0 0
        %1051 = vmatpush1.bf16.msra.mxu0 0
        %1052 = vmatprep.subr.bf16.mxu0 0
        %1053 = vmatpush1.bf16.msra.mxu0 0
        %1054 = vmatprep.subr.bf16.mxu0 0
        %1055 = vmatpush1.bf16.msra.mxu0 0
        %1056 = vmatprep.subr.bf16.mxu0 0
        %1057 = vmatpush1.bf16.msra.mxu0 0
        %1058 = vmatprep.subr.bf16.mxu0 0
        %1059 = vmatpush1.bf16.msra.mxu0 0
        %1060 = vmatprep.subr.bf16.mxu0 0
        %1061 = vmatpush1.bf16.msra.mxu0 0
        %1062 = vmatprep.subr.bf16.mxu0 0
        %1063 = vmatpush1.bf16.msra.mxu0 0
        %1064 = vmatprep.subr.bf16.mxu0 0
        %1065 = vmatpush1.bf16.msra.mxu0 0
        %1066 = vmatprep.mubr.bf16.mxu0 0
        %1067 = vmatmul.mubr.bf16.gmra.mrb[0].mxu0 %v1032
        %v1068 = vpop.f32.mrb[0].mxu0
        %v1069 = vadd.f32 0.0, %v1068
        %v1070 = vpop.f32.mrb[0].mxu0
        %v1071 = vpop.f32.mrb[0].mxu0
        %v1072 = vadd.f32 0.0, %v1071
        %v1073 = vpop.f32.mrb[0].mxu0
        %1074 = vdwg.mxu0
        %1075 = vrot.lane.b32.xlu0 %v611, 64
        %v1076 = vpop.permute.xlu0 %1075
        %v1079 = vsel %vm865, %v978, 0
        %1081 = vmatprep.subr.bf16.mxu0 0
        %1082 = vmatpush1.bf16.msra.mxu0 %v1076
        %1083 = vmatprep.subr.bf16.mxu0 0
        %1084 = vmatpush1.bf16.msra.mxu0 0
        %1085 = vmatprep.subr.bf16.mxu0 0
        %1086 = vmatpush1.bf16.msra.mxu0 0
        %1087 = vmatprep.subr.bf16.mxu0 0
        %1088 = vmatpush1.bf16.msra.mxu0 0
        %1089 = vmatprep.subr.bf16.mxu0 0
        %1090 = vmatpush1.bf16.msra.mxu0 0
        %1091 = vmatprep.subr.bf16.mxu0 0
        %1092 = vmatpush1.bf16.msra.mxu0 0
        %1093 = vmatprep.subr.bf16.mxu0 0
        %1094 = vmatpush1.bf16.msra.mxu0 0
        %1095 = vmatprep.subr.bf16.mxu0 0
        %1096 = vmatpush1.bf16.msra.mxu0 0
        %1097 = vmatprep.subr.bf16.mxu0 0
        %1098 = vmatpush1.bf16.msra.mxu0 0
        %1099 = vmatprep.subr.bf16.mxu0 0
        %1100 = vmatpush1.bf16.msra.mxu0 0
        %1101 = vmatprep.subr.bf16.mxu0 0
        %1102 = vmatpush1.bf16.msra.mxu0 0
        %1103 = vmatprep.subr.bf16.mxu0 0
        %1104 = vmatpush1.bf16.msra.mxu0 0
        %1105 = vmatprep.subr.bf16.mxu0 0
        %1106 = vmatpush1.bf16.msra.mxu0 0
        %1107 = vmatprep.subr.bf16.mxu0 0
        %1108 = vmatpush1.bf16.msra.mxu0 0
        %1109 = vmatprep.subr.bf16.mxu0 0
        %1110 = vmatpush1.bf16.msra.mxu0 0
        %1111 = vmatprep.subr.bf16.mxu0 0
        %1112 = vmatpush1.bf16.msra.mxu0 0
        %1113 = vmatprep.mubr.bf16.mxu0 0
        %1114 = vmatmul.mubr.bf16.gmra.mrb[0].mxu0 %v1079
        %v1115 = vpop.f32.mrb[0].mxu0
        %v1116 = vadd.f32 0.0, %v1115
        %v1117 = vpop.f32.mrb[0].mxu0
        %v1118 = vpop.f32.mrb[0].mxu0
        %v1119 = vadd.f32 0.0, %v1118
        %v1120 = vpop.f32.mrb[0].mxu0
        %1121 = vdwg.mxu0
        %1122 = vrot.lane.b32.xlu0 %v612, 64
        %v1123 = vpop.permute.xlu0 %1122
        %v1126 = vsel %vm865, %v979, 0
        %1128 = vmatprep.subr.bf16.mxu0 0
        %1129 = vmatpush1.bf16.msra.mxu0 %v1123
        %1130 = vmatprep.subr.bf16.mxu0 0
        %1131 = vmatpush1.bf16.msra.mxu0 0
        %1132 = vmatprep.subr.bf16.mxu0 0
        %1133 = vmatpush1.bf16.msra.mxu0 0
        %1134 = vmatprep.subr.bf16.mxu0 0
        %1135 = vmatpush1.bf16.msra.mxu0 0
        %1136 = vmatprep.subr.bf16.mxu0 0
        %1137 = vmatpush1.bf16.msra.mxu0 0
        %1138 = vmatprep.subr.bf16.mxu0 0
        %1139 = vmatpush1.bf16.msra.mxu0 0
        %1140 = vmatprep.subr.bf16.mxu0 0
        %1141 = vmatpush1.bf16.msra.mxu0 0
        %1142 = vmatprep.subr.bf16.mxu0 0
        %1143 = vmatpush1.bf16.msra.mxu0 0
        %1144 = vmatprep.subr.bf16.mxu0 0
        %1145 = vmatpush1.bf16.msra.mxu0 0
        %1146 = vmatprep.subr.bf16.mxu0 0
        %1147 = vmatpush1.bf16.msra.mxu0 0
        %1148 = vmatprep.subr.bf16.mxu0 0
        %1149 = vmatpush1.bf16.msra.mxu0 0
        %1150 = vmatprep.subr.bf16.mxu0 0
        %1151 = vmatpush1.bf16.msra.mxu0 0
        %1152 = vmatprep.subr.bf16.mxu0 0
        %1153 = vmatpush1.bf16.msra.mxu0 0
        %1154 = vmatprep.subr.bf16.mxu0 0
        %1155 = vmatpush1.bf16.msra.mxu0 0
        %1156 = vmatprep.subr.bf16.mxu0 0
        %1157 = vmatpush1.bf16.msra.mxu0 0
        %1158 = vmatprep.subr.bf16.mxu0 0
        %1159 = vmatpush1.bf16.msra.mxu0 0
        %1160 = vmatprep.mubr.bf16.mxu0 0
        %1161 = vmatmul.mubr.bf16.gmra.mrb[0].mxu0 %v1126
        %v1162 = vpop.f32.mrb[0].mxu0
        %v1163 = vadd.f32 0.0, %v1162
        %v1164 = vpop.f32.mrb[0].mxu0
        %v1165 = vpop.f32.mrb[0].mxu0
        %v1166 = vadd.f32 0.0, %v1165
        %v1167 = vpop.f32.mrb[0].mxu0
        %1168 = vdwg.mxu0
        %1169 = vrot.lane.b32.xlu0 %v613, 64
        %v1170 = vpop.permute.xlu0 %1169
        %v1173 = vsel %vm865, %v980, 0
        %1175 = vmatprep.subr.bf16.mxu0 0
        %1176 = vmatpush1.bf16.msra.mxu0 %v1170
        %1177 = vmatprep.subr.bf16.mxu0 0
        %1178 = vmatpush1.bf16.msra.mxu0 0
        %1179 = vmatprep.subr.bf16.mxu0 0
        %1180 = vmatpush1.bf16.msra.mxu0 0
        %1181 = vmatprep.subr.bf16.mxu0 0
        %1182 = vmatpush1.bf16.msra.mxu0 0
        %1183 = vmatprep.subr.bf16.mxu0 0
        %1184 = vmatpush1.bf16.msra.mxu0 0
        %1185 = vmatprep.subr.bf16.mxu0 0
        %1186 = vmatpush1.bf16.msra.mxu0 0
        %1187 = vmatprep.subr.bf16.mxu0 0
        %1188 = vmatpush1.bf16.msra.mxu0 0
        %1189 = vmatprep.subr.bf16.mxu0 0
        %1190 = vmatpush1.bf16.msra.mxu0 0
        %1191 = vmatprep.subr.bf16.mxu0 0
        %1192 = vmatpush1.bf16.msra.mxu0 0
        %1193 = vmatprep.subr.bf16.mxu0 0
        %1194 = vmatpush1.bf16.msra.mxu0 0
        %1195 = vmatprep.subr.bf16.mxu0 0
        %1196 = vmatpush1.bf16.msra.mxu0 0
        %1197 = vmatprep.subr.bf16.mxu0 0
        %1198 = vmatpush1.bf16.msra.mxu0 0
        %1199 = vmatprep.subr.bf16.mxu0 0
        %1200 = vmatpush1.bf16.msra.mxu0 0
        %1201 = vmatprep.subr.bf16.mxu0 0
        %1202 = vmatpush1.bf16.msra.mxu0 0
        %1203 = vmatprep.subr.bf16.mxu0 0
        %1204 = vmatpush1.bf16.msra.mxu0 0
        %1205 = vmatprep.subr.bf16.mxu0 0
        %1206 = vmatpush1.bf16.msra.mxu0 0
        %1207 = vmatprep.mubr.bf16.mxu0 0
        %1208 = vmatmul.mubr.bf16.gmra.mrb[0].mxu0 %v1173
        %v1209 = vpop.f32.mrb[0].mxu0
        %v1210 = vadd.f32 0.0, %v1209
        %v1211 = vpop.f32.mrb[0].mxu0
        %v1212 = vpop.f32.mrb[0].mxu0
        %v1213 = vadd.f32 0.0, %v1212
        %v1214 = vpop.f32.mrb[0].mxu0
        %1215 = vdwg.mxu0
        %1216 = vrot.lane.b32.xlu0 %v609, 120
        %v1217 = vpop.permute.xlu0 %1216
        %1218 = vrot.lane.b32.xlu0 %v609, 88
        %v1219 = vpop.permute.xlu0 %1218
        %v1221 = vsel %vm617, %v1217, 0
        %v1224 = vsel %vm617, %v1219, 0
        %1226 = vmatprep.subr.bf16.mxu0 0
        %1227 = vmatpush1.bf16.xpose.msra.mxu0 %v1224
        %1228 = vmatprep.subr.bf16.mxu0 0
        %1229 = vmatpush1.bf16.xpose.msra.mxu0 0
        %1230 = vmatprep.subr.bf16.mxu0 0
        %1231 = vmatpush1.bf16.xpose.msra.mxu0 0
        %1232 = vmatprep.subr.bf16.mxu0 0
        %1233 = vmatpush1.bf16.xpose.msra.mxu0 0
        %1234 = vmatprep.subr.bf16.mxu0 0
        %1235 = vmatpush1.bf16.xpose.msra.mxu0 0
        %1236 = vmatprep.subr.bf16.mxu0 0
        %1237 = vmatpush1.bf16.xpose.msra.mxu0 0
        %1238 = vmatprep.subr.bf16.mxu0 0
        %1239 = vmatpush1.bf16.xpose.msra.mxu0 0
        %1240 = vmatprep.subr.bf16.mxu0 0
        %1241 = vmatpush1.bf16.xpose.msra.mxu0 0
        %1242 = vmatprep.subr.bf16.mxu0 0
        %1243 = vmatpush1.bf16.xpose.msra.mxu0 0
        %1244 = vmatprep.subr.bf16.mxu0 0
        %1245 = vmatpush1.bf16.xpose.msra.mxu0 0
        %1246 = vmatprep.subr.bf16.mxu0 0
        %1247 = vmatpush1.bf16.xpose.msra.mxu0 0
        %1248 = vmatprep.subr.bf16.mxu0 0
        %1249 = vmatpush1.bf16.xpose.msra.mxu0 0
        %1250 = vmatprep.subr.bf16.mxu0 0
        %1251 = vmatpush1.bf16.xpose.msra.mxu0 0
        %1252 = vmatprep.subr.bf16.mxu0 0
        %1253 = vmatpush1.bf16.xpose.msra.mxu0 0
        %1254 = vmatprep.subr.bf16.mxu0 0
        %1255 = vmatpush1.bf16.xpose.msra.mxu0 0
        %1256 = vmatprep.subr.bf16.mxu0 0
        %1257 = vmatpush1.bf16.xpose.msra.mxu0 0
        %1258 = vmatprep.mubr.bf16.mxu0 0
        %1259 = vmatmul.mubr.bf16.gmra.mrb[0].mxu0 %v1221
        %v1260 = vpop.f32.mrb[0].mxu0
        %v1261 = vadd.f32 %v603, %v1260
        %v1262 = vpop.f32.mrb[0].mxu0
        %v1263 = vpop.f32.mrb[0].mxu0
        %v1264 = vadd.f32 %v604, %v1263
        %v1265 = vpop.f32.mrb[0].mxu0
        %1266 = vdwg.mxu0
        %1267 = vrot.lane.b32.xlu0 %v610, 120
        %v1268 = vpop.permute.xlu0 %1267
        %1269 = vrot.lane.b32.xlu0 %v610, 88
        %v1270 = vpop.permute.xlu0 %1269
        %v1272 = vsel %vm617, %v1268, 0
        %v1275 = vsel %vm617, %v1270, 0
        %1277 = vmatprep.subr.bf16.mxu0 0
        %1278 = vmatpush1.bf16.xpose.msra.mxu0 %v1275
        %1279 = vmatprep.subr.bf16.mxu0 0
        %1280 = vmatpush1.bf16.xpose.msra.mxu0 0
        %1281 = vmatprep.subr.bf16.mxu0 0
        %1282 = vmatpush1.bf16.xpose.msra.mxu0 0
        %1283 = vmatprep.subr.bf16.mxu0 0
        %1284 = vmatpush1.bf16.xpose.msra.mxu0 0
        %1285 = vmatprep.subr.bf16.mxu0 0
        %1286 = vmatpush1.bf16.xpose.msra.mxu0 0
        %1287 = vmatprep.subr.bf16.mxu0 0
        %1288 = vmatpush1.bf16.xpose.msra.mxu0 0
        %1289 = vmatprep.subr.bf16.mxu0 0
        %1290 = vmatpush1.bf16.xpose.msra.mxu0 0
        %1291 = vmatprep.subr.bf16.mxu0 0
        %1292 = vmatpush1.bf16.xpose.msra.mxu0 0
        %1293 = vmatprep.subr.bf16.mxu0 0
        %1294 = vmatpush1.bf16.xpose.msra.mxu0 0
        %1295 = vmatprep.subr.bf16.mxu0 0
        %1296 = vmatpush1.bf16.xpose.msra.mxu0 0
        %1297 = vmatprep.subr.bf16.mxu0 0
        %1298 = vmatpush1.bf16.xpose.msra.mxu0 0
        %1299 = vmatprep.subr.bf16.mxu0 0
        %1300 = vmatpush1.bf16.xpose.msra.mxu0 0
        %1301 = vmatprep.subr.bf16.mxu0 0
        %1302 = vmatpush1.bf16.xpose.msra.mxu0 0
        %1303 = vmatprep.subr.bf16.mxu0 0
        %1304 = vmatpush1.bf16.xpose.msra.mxu0 0
        %1305 = vmatprep.subr.bf16.mxu0 0
        %1306 = vmatpush1.bf16.xpose.msra.mxu0 0
        %1307 = vmatprep.subr.bf16.mxu0 0
        %1308 = vmatpush1.bf16.xpose.msra.mxu0 0
        %1309 = vmatprep.mubr.bf16.mxu0 0
        %1310 = vmatmul.mubr.bf16.gmra.mrb[0].mxu0 %v1272
        %v1311 = vpop.f32.mrb[0].mxu0
        %v1312 = vadd.f32 %v603, %v1311
        %v1313 = vpop.f32.mrb[0].mxu0
        %v1314 = vpop.f32.mrb[0].mxu0
        %v1315 = vadd.f32 %v604, %v1314
        %v1316 = vpop.f32.mrb[0].mxu0
        %1317 = vdwg.mxu0
        %1318 = vrot.lane.b32.xlu0 %v611, 120
        %v1319 = vpop.permute.xlu0 %1318
        %1320 = vrot.lane.b32.xlu0 %v611, 88
        %v1321 = vpop.permute.xlu0 %1320
        %v1323 = vsel %vm617, %v1319, 0
        %v1326 = vsel %vm617, %v1321, 0
        %1328 = vmatprep.subr.bf16.mxu0 0
        %1329 = vmatpush1.bf16.xpose.msra.mxu0 %v1326
        %1330 = vmatprep.subr.bf16.mxu0 0
        %1331 = vmatpush1.bf16.xpose.msra.mxu0 0
        %1332 = vmatprep.subr.bf16.mxu0 0
        %1333 = vmatpush1.bf16.xpose.msra.mxu0 0
        %1334 = vmatprep.subr.bf16.mxu0 0
        %1335 = vmatpush1.bf16.xpose.msra.mxu0 0
        %1336 = vmatprep.subr.bf16.mxu0 0
        %1337 = vmatpush1.bf16.xpose.msra.mxu0 0
        %1338 = vmatprep.subr.bf16.mxu0 0
        %1339 = vmatpush1.bf16.xpose.msra.mxu0 0
        %1340 = vmatprep.subr.bf16.mxu0 0
        %1341 = vmatpush1.bf16.xpose.msra.mxu0 0
        %1342 = vmatprep.subr.bf16.mxu0 0
        %1343 = vmatpush1.bf16.xpose.msra.mxu0 0
        %1344 = vmatprep.subr.bf16.mxu0 0
        %1345 = vmatpush1.bf16.xpose.msra.mxu0 0
        %1346 = vmatprep.subr.bf16.mxu0 0
        %1347 = vmatpush1.bf16.xpose.msra.mxu0 0
        %1348 = vmatprep.subr.bf16.mxu0 0
        %1349 = vmatpush1.bf16.xpose.msra.mxu0 0
        %1350 = vmatprep.subr.bf16.mxu0 0
        %1351 = vmatpush1.bf16.xpose.msra.mxu0 0
        %1352 = vmatprep.subr.bf16.mxu0 0
        %1353 = vmatpush1.bf16.xpose.msra.mxu0 0
        %1354 = vmatprep.subr.bf16.mxu0 0
        %1355 = vmatpush1.bf16.xpose.msra.mxu0 0
        %1356 = vmatprep.subr.bf16.mxu0 0
        %1357 = vmatpush1.bf16.xpose.msra.mxu0 0
        %1358 = vmatprep.subr.bf16.mxu0 0
        %1359 = vmatpush1.bf16.xpose.msra.mxu0 0
        %1360 = vmatprep.mubr.bf16.mxu0 0
        %1361 = vmatmul.mubr.bf16.gmra.mrb[0].mxu0 %v1323
        %v1362 = vpop.f32.mrb[0].mxu0
        %v1363 = vadd.f32 %v603, %v1362
        %v1364 = vpop.f32.mrb[0].mxu0
        %v1365 = vpop.f32.mrb[0].mxu0
        %v1366 = vadd.f32 %v604, %v1365
        %v1367 = vpop.f32.mrb[0].mxu0
        %1368 = vdwg.mxu0
        %1369 = vrot.lane.b32.xlu0 %v612, 120
        %v1370 = vpop.permute.xlu0 %1369
        %1371 = vrot.lane.b32.xlu0 %v612, 88
        %v1372 = vpop.permute.xlu0 %1371
        %v1374 = vsel %vm617, %v1370, 0
        %v1377 = vsel %vm617, %v1372, 0
        %1379 = vmatprep.subr.bf16.mxu0 0
        %1380 = vmatpush1.bf16.xpose.msra.mxu0 %v1377
        %1381 = vmatprep.subr.bf16.mxu0 0
        %1382 = vmatpush1.bf16.xpose.msra.mxu0 0
        %1383 = vmatprep.subr.bf16.mxu0 0
        %1384 = vmatpush1.bf16.xpose.msra.mxu0 0
        %1385 = vmatprep.subr.bf16.mxu0 0
        %1386 = vmatpush1.bf16.xpose.msra.mxu0 0
        %1387 = vmatprep.subr.bf16.mxu0 0
        %1388 = vmatpush1.bf16.xpose.msra.mxu0 0
        %1389 = vmatprep.subr.bf16.mxu0 0
        %1390 = vmatpush1.bf16.xpose.msra.mxu0 0
        %1391 = vmatprep.subr.bf16.mxu0 0
        %1392 = vmatpush1.bf16.xpose.msra.mxu0 0
        %1393 = vmatprep.subr.bf16.mxu0 0
        %1394 = vmatpush1.bf16.xpose.msra.mxu0 0
        %1395 = vmatprep.subr.bf16.mxu0 0
        %1396 = vmatpush1.bf16.xpose.msra.mxu0 0
        %1397 = vmatprep.subr.bf16.mxu0 0
        %1398 = vmatpush1.bf16.xpose.msra.mxu0 0
        %1399 = vmatprep.subr.bf16.mxu0 0
        %1400 = vmatpush1.bf16.xpose.msra.mxu0 0
        %1401 = vmatprep.subr.bf16.mxu0 0
        %1402 = vmatpush1.bf16.xpose.msra.mxu0 0
        %1403 = vmatprep.subr.bf16.mxu0 0
        %1404 = vmatpush1.bf16.xpose.msra.mxu0 0
        %1405 = vmatprep.subr.bf16.mxu0 0
        %1406 = vmatpush1.bf16.xpose.msra.mxu0 0
        %1407 = vmatprep.subr.bf16.mxu0 0
        %1408 = vmatpush1.bf16.xpose.msra.mxu0 0
        %1409 = vmatprep.subr.bf16.mxu0 0
        %1410 = vmatpush1.bf16.xpose.msra.mxu0 0
        %1411 = vmatprep.mubr.bf16.mxu0 0
        %1412 = vmatmul.mubr.bf16.gmra.mrb[0].mxu0 %v1374
        %v1413 = vpop.f32.mrb[0].mxu0
        %v1414 = vadd.f32 %v603, %v1413
        %v1415 = vpop.f32.mrb[0].mxu0
        %v1416 = vpop.f32.mrb[0].mxu0
        %v1417 = vadd.f32 %v604, %v1416
        %v1418 = vpop.f32.mrb[0].mxu0
        %1419 = vdwg.mxu0
        %1420 = vrot.lane.b32.xlu0 %v613, 120
        %v1421 = vpop.permute.xlu0 %1420
        %1422 = vrot.lane.b32.xlu0 %v613, 88
        %v1423 = vpop.permute.xlu0 %1422
        %v1425 = vsel %vm617, %v1421, 0
        %v1428 = vsel %vm617, %v1423, 0
        %1430 = vmatprep.subr.bf16.mxu0 0
        %1431 = vmatpush1.bf16.xpose.msra.mxu0 %v1428
        %1432 = vmatprep.subr.bf16.mxu0 0
        %1433 = vmatpush1.bf16.xpose.msra.mxu0 0
        %1434 = vmatprep.subr.bf16.mxu0 0
        %1435 = vmatpush1.bf16.xpose.msra.mxu0 0
        %1436 = vmatprep.subr.bf16.mxu0 0
        %1437 = vmatpush1.bf16.xpose.msra.mxu0 0
        %1438 = vmatprep.subr.bf16.mxu0 0
        %1439 = vmatpush1.bf16.xpose.msra.mxu0 0
        %1440 = vmatprep.subr.bf16.mxu0 0
        %1441 = vmatpush1.bf16.xpose.msra.mxu0 0
        %1442 = vmatprep.subr.bf16.mxu0 0
        %1443 = vmatpush1.bf16.xpose.msra.mxu0 0
        %1444 = vmatprep.subr.bf16.mxu0 0
        %1445 = vmatpush1.bf16.xpose.msra.mxu0 0
        %1446 = vmatprep.subr.bf16.mxu0 0
        %1447 = vmatpush1.bf16.xpose.msra.mxu0 0
        %1448 = vmatprep.subr.bf16.mxu0 0
        %1449 = vmatpush1.bf16.xpose.msra.mxu0 0
        %1450 = vmatprep.subr.bf16.mxu0 0
        %1451 = vmatpush1.bf16.xpose.msra.mxu0 0
        %1452 = vmatprep.subr.bf16.mxu0 0
        %1453 = vmatpush1.bf16.xpose.msra.mxu0 0
        %1454 = vmatprep.subr.bf16.mxu0 0
        %1455 = vmatpush1.bf16.xpose.msra.mxu0 0
        %1456 = vmatprep.subr.bf16.mxu0 0
        %1457 = vmatpush1.bf16.xpose.msra.mxu0 0
        %1458 = vmatprep.subr.bf16.mxu0 0
        %1459 = vmatpush1.bf16.xpose.msra.mxu0 0
        %1460 = vmatprep.subr.bf16.mxu0 0
        %1461 = vmatpush1.bf16.xpose.msra.mxu0 0
        %1462 = vmatprep.mubr.bf16.mxu0 0
        %1463 = vmatmul.mubr.bf16.gmra.mrb[0].mxu0 %v1425
        %v1464 = vpop.f32.mrb[0].mxu0
        %v1465 = vadd.f32 %v603, %v1464
        %v1466 = vpop.f32.mrb[0].mxu0
        %v1467 = vpop.f32.mrb[0].mxu0
        %v1468 = vadd.f32 %v604, %v1467
        %v1469 = vpop.f32.mrb[0].mxu0
        %1470 = vdwg.mxu0
        %v1471 = vsel %vm865, %v1261, -inf
        %1472 = vmax.xlane.f32.xlu0 %v1471
        %v1473 = vpop.xlane.xlu0 %1472
        %v1474 = vsel %vm865, %v1264, -inf
        %1475 = vmax.xlane.f32.xlu0 %v1474
        %v1476 = vpop.xlane.xlu0 %1475
        %v1477 = vsel %vm865, %v1312, -inf
        %1478 = vmax.xlane.f32.xlu0 %v1477
        %v1479 = vpop.xlane.xlu0 %1478
        %v1480 = vsel %vm865, %v1315, -inf
        %1481 = vmax.xlane.f32.xlu0 %v1480
        %v1482 = vpop.xlane.xlu0 %1481
        %v1483 = vsel %vm865, %v1363, -inf
        %1484 = vmax.xlane.f32.xlu0 %v1483
        %v1485 = vpop.xlane.xlu0 %1484
        %v1486 = vsel %vm865, %v1366, -inf
        %1487 = vmax.xlane.f32.xlu0 %v1486
        %v1488 = vpop.xlane.xlu0 %1487
        %v1489 = vsel %vm865, %v1414, -inf
        %1490 = vmax.xlane.f32.xlu0 %v1489
        %v1491 = vpop.xlane.xlu0 %1490
        %v1492 = vsel %vm865, %v1417, -inf
        %1493 = vmax.xlane.f32.xlu0 %v1492
        %v1494 = vpop.xlane.xlu0 %1493
        %v1495 = vsel %vm865, %v1465, -inf
        %1496 = vmax.xlane.f32.xlu0 %v1495
        %v1497 = vpop.xlane.xlu0 %1496
        %v1498 = vsel %vm865, %v1468, -inf
        %1499 = vmax.xlane.f32.xlu0 %v1498
        %v1500 = vpop.xlane.xlu0 %1499
        %v1501 = vsub.f32 %v1261, %v1473
        %v1502 = vsub.f32 %v1264, %v1476
        %v1503 = vsub.f32 %v1312, %v1479
        %v1504 = vsub.f32 %v1315, %v1482
        %v1505 = vsub.f32 %v1363, %v1485
        %v1506 = vsub.f32 %v1366, %v1488
        %v1507 = vsub.f32 %v1414, %v1491
        %v1508 = vsub.f32 %v1417, %v1494
        %v1509 = vsub.f32 %v1465, %v1497
        %v1510 = vsub.f32 %v1468, %v1500
        %v1511 = vmul.f32 %v1501, 1.442695
        %v1512 = vpow.pop %v1511
        %v1513 = vmul.f32 %v1502, 1.442695
        %v1514 = vpow.pop %v1513
        %v1515 = vmul.f32 %v1503, 1.442695
        %v1516 = vpow.pop %v1515
        %v1517 = vmul.f32 %v1504, 1.442695
        %v1518 = vpow.pop %v1517
        %v1519 = vmul.f32 %v1505, 1.442695
        %v1520 = vpow.pop %v1519
        %v1521 = vmul.f32 %v1506, 1.442695
        %v1522 = vpow.pop %v1521
        %v1523 = vmul.f32 %v1507, 1.442695
        %v1524 = vpow.pop %v1523
        %v1525 = vmul.f32 %v1508, 1.442695
        %v1526 = vpow.pop %v1525
        %v1527 = vmul.f32 %v1509, 1.442695
        %v1528 = vpow.pop %v1527
        %v1529 = vmul.f32 %v1510, 1.442695
        %v1530 = vpow.pop %v1529
        %v1531 = vsel %vm865, %v1512, 0.0
        %1532 = vadd.xlane.f32.xlu0 %v1531
        %v1533 = vpop.xlane.xlu0 %1532
        %v1534 = vsel %vm865, %v1514, 0.0
        %1535 = vadd.xlane.f32.xlu0 %v1534
        %v1536 = vpop.xlane.xlu0 %1535
        %v1537 = vsel %vm865, %v1516, 0.0
        %1538 = vadd.xlane.f32.xlu0 %v1537
        %v1539 = vpop.xlane.xlu0 %1538
        %v1540 = vsel %vm865, %v1518, 0.0
        %1541 = vadd.xlane.f32.xlu0 %v1540
        %v1542 = vpop.xlane.xlu0 %1541
        %v1543 = vsel %vm865, %v1520, 0.0
        %1544 = vadd.xlane.f32.xlu0 %v1543
        %v1545 = vpop.xlane.xlu0 %1544
        %v1546 = vsel %vm865, %v1522, 0.0
        %1547 = vadd.xlane.f32.xlu0 %v1546
        %v1548 = vpop.xlane.xlu0 %1547
        %v1549 = vsel %vm865, %v1524, 0.0
        %1550 = vadd.xlane.f32.xlu0 %v1549
        %v1551 = vpop.xlane.xlu0 %1550
        %v1552 = vsel %vm865, %v1526, 0.0
        %1553 = vadd.xlane.f32.xlu0 %v1552
        %v1554 = vpop.xlane.xlu0 %1553
        %v1555 = vsel %vm865, %v1528, 0.0
        %1556 = vadd.xlane.f32.xlu0 %v1555
        %v1557 = vpop.xlane.xlu0 %1556
        %v1558 = vsel %vm865, %v1530, 0.0
        %1559 = vadd.xlane.f32.xlu0 %v1558
        %v1560 = vpop.xlane.xlu0 %1559
        %v1561 = vrcp.pop %v1533
        %v1562 = vrcp.pop %v1536
        %v1563 = vrcp.pop %v1539
        %v1564 = vrcp.pop %v1542
        %v1565 = vrcp.pop %v1545
        %v1566 = vrcp.pop %v1548
        %v1567 = vrcp.pop %v1551
        %v1568 = vrcp.pop %v1554
        %v1569 = vrcp.pop %v1557
        %v1570 = vrcp.pop %v1560
        %v1571 = vmul.f32 %v1512, %v1561
        %v1572 = vmul.f32 %v1514, %v1562
        %v1573 = vmul.f32 %v1516, %v1563
        %v1574 = vmul.f32 %v1518, %v1564
        %v1575 = vmul.f32 %v1520, %v1565
        %v1576 = vmul.f32 %v1522, %v1566
        %v1577 = vmul.f32 %v1524, %v1567
        %v1578 = vmul.f32 %v1526, %v1568
        %v1579 = vmul.f32 %v1528, %v1569
        %v1580 = vmul.f32 %v1530, %v1570
        %v1581 = vpack.c.bf16 %v1572, %v1571
        %v1582 = vpack.c.bf16 %v1574, %v1573
        %v1583 = vpack.c.bf16 %v1576, %v1575
        %v1584 = vpack.c.bf16 %v1578, %v1577
        %v1585 = vpack.c.bf16 %v1580, %v1579
        %1586 = vrot.lane.b32.xlu0 %v609, 56
        %v1587 = vpop.permute.xlu0 %1586
        %v1590 = vsel %vm865, %v1581, 0
        %1592 = vmatprep.subr.bf16.mxu0 0
        %1593 = vmatpush1.bf16.msra.mxu0 %v1587
        %1594 = vmatprep.subr.bf16.mxu0 0
        %1595 = vmatpush1.bf16.msra.mxu0 0
        %1596 = vmatprep.subr.bf16.mxu0 0
        %1597 = vmatpush1.bf16.msra.mxu0 0
        %1598 = vmatprep.subr.bf16.mxu0 0
        %1599 = vmatpush1.bf16.msra.mxu0 0
        %1600 = vmatprep.subr.bf16.mxu0 0
        %1601 = vmatpush1.bf16.msra.mxu0 0
        %1602 = vmatprep.subr.bf16.mxu0 0
        %1603 = vmatpush1.bf16.msra.mxu0 0
        %1604 = vmatprep.subr.bf16.mxu0 0
        %1605 = vmatpush1.bf16.msra.mxu0 0
        %1606 = vmatprep.subr.bf16.mxu0 0
        %1607 = vmatpush1.bf16.msra.mxu0 0
        %1608 = vmatprep.subr.bf16.mxu0 0
        %1609 = vmatpush1.bf16.msra.mxu0 0
        %1610 = vmatprep.subr.bf16.mxu0 0
        %1611 = vmatpush1.bf16.msra.mxu0 0
        %1612 = vmatprep.subr.bf16.mxu0 0
        %1613 = vmatpush1.bf16.msra.mxu0 0
        %1614 = vmatprep.subr.bf16.mxu0 0
        %1615 = vmatpush1.bf16.msra.mxu0 0
        %1616 = vmatprep.subr.bf16.mxu0 0
        %1617 = vmatpush1.bf16.msra.mxu0 0
        %1618 = vmatprep.subr.bf16.mxu0 0
        %1619 = vmatpush1.bf16.msra.mxu0 0
        %1620 = vmatprep.subr.bf16.mxu0 0
        %1621 = vmatpush1.bf16.msra.mxu0 0
        %1622 = vmatprep.subr.bf16.mxu0 0
        %1623 = vmatpush1.bf16.msra.mxu0 0
        %1624 = vmatprep.mubr.bf16.mxu0 0
        %1625 = vmatmul.mubr.bf16.gmra.mrb[0].mxu0 %v1590
        %v1626 = vpop.f32.mrb[0].mxu0
        %v1627 = vadd.f32 0.0, %v1626
        %v1628 = vpop.f32.mrb[0].mxu0
        %v1629 = vpop.f32.mrb[0].mxu0
        %v1630 = vadd.f32 0.0, %v1629
        %v1631 = vpop.f32.mrb[0].mxu0
        %1632 = vdwg.mxu0
        %1633 = vrot.lane.b32.xlu0 %v610, 56
        %v1634 = vpop.permute.xlu0 %1633
        %v1637 = vsel %vm865, %v1582, 0
        %1639 = vmatprep.subr.bf16.mxu0 0
        %1640 = vmatpush1.bf16.msra.mxu0 %v1634
        %1641 = vmatprep.subr.bf16.mxu0 0
        %1642 = vmatpush1.bf16.msra.mxu0 0
        %1643 = vmatprep.subr.bf16.mxu0 0
        %1644 = vmatpush1.bf16.msra.mxu0 0
        %1645 = vmatprep.subr.bf16.mxu0 0
        %1646 = vmatpush1.bf16.msra.mxu0 0
        %1647 = vmatprep.subr.bf16.mxu0 0
        %1648 = vmatpush1.bf16.msra.mxu0 0
        %1649 = vmatprep.subr.bf16.mxu0 0
        %1650 = vmatpush1.bf16.msra.mxu0 0
        %1651 = vmatprep.subr.bf16.mxu0 0
        %1652 = vmatpush1.bf16.msra.mxu0 0
        %1653 = vmatprep.subr.bf16.mxu0 0
        %1654 = vmatpush1.bf16.msra.mxu0 0
        %1655 = vmatprep.subr.bf16.mxu0 0
        %1656 = vmatpush1.bf16.msra.mxu0 0
        %1657 = vmatprep.subr.bf16.mxu0 0
        %1658 = vmatpush1.bf16.msra.mxu0 0
        %1659 = vmatprep.subr.bf16.mxu0 0
        %1660 = vmatpush1.bf16.msra.mxu0 0
        %1661 = vmatprep.subr.bf16.mxu0 0
        %1662 = vmatpush1.bf16.msra.mxu0 0
        %1663 = vmatprep.subr.bf16.mxu0 0
        %1664 = vmatpush1.bf16.msra.mxu0 0
        %1665 = vmatprep.subr.bf16.mxu0 0
        %1666 = vmatpush1.bf16.msra.mxu0 0
        %1667 = vmatprep.subr.bf16.mxu0 0
        %1668 = vmatpush1.bf16.msra.mxu0 0
        %1669 = vmatprep.subr.bf16.mxu0 0
        %1670 = vmatpush1.bf16.msra.mxu0 0
        %1671 = vmatprep.mubr.bf16.mxu0 0
        %1672 = vmatmul.mubr.bf16.gmra.mrb[0].mxu0 %v1637
        %v1673 = vpop.f32.mrb[0].mxu0
        %v1674 = vadd.f32 0.0, %v1673
        %v1675 = vpop.f32.mrb[0].mxu0
        %v1676 = vpop.f32.mrb[0].mxu0
        %v1677 = vadd.f32 0.0, %v1676
        %v1678 = vpop.f32.mrb[0].mxu0
        %1679 = vdwg.mxu0
        %1680 = vrot.lane.b32.xlu0 %v611, 56
        %v1681 = vpop.permute.xlu0 %1680
        %v1684 = vsel %vm865, %v1583, 0
        %1686 = vmatprep.subr.bf16.mxu0 0
        %1687 = vmatpush1.bf16.msra.mxu0 %v1681
        %1688 = vmatprep.subr.bf16.mxu0 0
        %1689 = vmatpush1.bf16.msra.mxu0 0
        %1690 = vmatprep.subr.bf16.mxu0 0
        %1691 = vmatpush1.bf16.msra.mxu0 0
        %1692 = vmatprep.subr.bf16.mxu0 0
        %1693 = vmatpush1.bf16.msra.mxu0 0
        %1694 = vmatprep.subr.bf16.mxu0 0
        %1695 = vmatpush1.bf16.msra.mxu0 0
        %1696 = vmatprep.subr.bf16.mxu0 0
        %1697 = vmatpush1.bf16.msra.mxu0 0
        %1698 = vmatprep.subr.bf16.mxu0 0
        %1699 = vmatpush1.bf16.msra.mxu0 0
        %1700 = vmatprep.subr.bf16.mxu0 0
        %1701 = vmatpush1.bf16.msra.mxu0 0
        %1702 = vmatprep.subr.bf16.mxu0 0
        %1703 = vmatpush1.bf16.msra.mxu0 0
        %1704 = vmatprep.subr.bf16.mxu0 0
        %1705 = vmatpush1.bf16.msra.mxu0 0
        %1706 = vmatprep.subr.bf16.mxu0 0
        %1707 = vmatpush1.bf16.msra.mxu0 0
        %1708 = vmatprep.subr.bf16.mxu0 0
        %1709 = vmatpush1.bf16.msra.mxu0 0
        %1710 = vmatprep.subr.bf16.mxu0 0
        %1711 = vmatpush1.bf16.msra.mxu0 0
        %1712 = vmatprep.subr.bf16.mxu0 0
        %1713 = vmatpush1.bf16.msra.mxu0 0
        %1714 = vmatprep.subr.bf16.mxu0 0
        %1715 = vmatpush1.bf16.msra.mxu0 0
        %1716 = vmatprep.subr.bf16.mxu0 0
        %1717 = vmatpush1.bf16.msra.mxu0 0
        %1718 = vmatprep.mubr.bf16.mxu0 0
        %1719 = vmatmul.mubr.bf16.gmra.mrb[0].mxu0 %v1684
        %v1720 = vpop.f32.mrb[0].mxu0
        %v1721 = vadd.f32 0.0, %v1720
        %v1722 = vpop.f32.mrb[0].mxu0
        %v1723 = vpop.f32.mrb[0].mxu0
        %v1724 = vadd.f32 0.0, %v1723
        %v1725 = vpop.f32.mrb[0].mxu0
        %1726 = vdwg.mxu0
        %1727 = vrot.lane.b32.xlu0 %v612, 56
        %v1728 = vpop.permute.xlu0 %1727
        %v1731 = vsel %vm865, %v1584, 0
        %1733 = vmatprep.subr.bf16.mxu0 0
        %1734 = vmatpush1.bf16.msra.mxu0 %v1728
        %1735 = vmatprep.subr.bf16.mxu0 0
        %1736 = vmatpush1.bf16.msra.mxu0 0
        %1737 = vmatprep.subr.bf16.mxu0 0
        %1738 = vmatpush1.bf16.msra.mxu0 0
        %1739 = vmatprep.subr.bf16.mxu0 0
        %1740 = vmatpush1.bf16.msra.mxu0 0
        %1741 = vmatprep.subr.bf16.mxu0 0
        %1742 = vmatpush1.bf16.msra.mxu0 0
        %1743 = vmatprep.subr.bf16.mxu0 0
        %1744 = vmatpush1.bf16.msra.mxu0 0
        %1745 = vmatprep.subr.bf16.mxu0 0
        %1746 = vmatpush1.bf16.msra.mxu0 0
        %1747 = vmatprep.subr.bf16.mxu0 0
        %1748 = vmatpush1.bf16.msra.mxu0 0
        %1749 = vmatprep.subr.bf16.mxu0 0
        %1750 = vmatpush1.bf16.msra.mxu0 0
        %1751 = vmatprep.subr.bf16.mxu0 0
        %1752 = vmatpush1.bf16.msra.mxu0 0
        %1753 = vmatprep.subr.bf16.mxu0 0
        %1754 = vmatpush1.bf16.msra.mxu0 0
        %1755 = vmatprep.subr.bf16.mxu0 0
        %1756 = vmatpush1.bf16.msra.mxu0 0
        %1757 = vmatprep.subr.bf16.mxu0 0
        %1758 = vmatpush1.bf16.msra.mxu0 0
        %1759 = vmatprep.subr.bf16.mxu0 0
        %1760 = vmatpush1.bf16.msra.mxu0 0
        %1761 = vmatprep.subr.bf16.mxu0 0
        %1762 = vmatpush1.bf16.msra.mxu0 0
        %1763 = vmatprep.subr.bf16.mxu0 0
        %1764 = vmatpush1.bf16.msra.mxu0 0
        %1765 = vmatprep.mubr.bf16.mxu0 0
        %1766 = vmatmul.mubr.bf16.gmra.mrb[0].mxu0 %v1731
        %v1767 = vpop.f32.mrb[0].mxu0
        %v1768 = vadd.f32 0.0, %v1767
        %v1769 = vpop.f32.mrb[0].mxu0
        %v1770 = vpop.f32.mrb[0].mxu0
        %v1771 = vadd.f32 0.0, %v1770
        %v1772 = vpop.f32.mrb[0].mxu0
        %1773 = vdwg.mxu0
        %1774 = vrot.lane.b32.xlu0 %v613, 56
        %v1775 = vpop.permute.xlu0 %1774
        %v1778 = vsel %vm865, %v1585, 0
        %1780 = vmatprep.subr.bf16.mxu0 0
        %1781 = vmatpush1.bf16.msra.mxu0 %v1775
        %1782 = vmatprep.subr.bf16.mxu0 0
        %1783 = vmatpush1.bf16.msra.mxu0 0
        %1784 = vmatprep.subr.bf16.mxu0 0
        %1785 = vmatpush1.bf16.msra.mxu0 0
        %1786 = vmatprep.subr.bf16.mxu0 0
        %1787 = vmatpush1.bf16.msra.mxu0 0
        %1788 = vmatprep.subr.bf16.mxu0 0
        %1789 = vmatpush1.bf16.msra.mxu0 0
        %1790 = vmatprep.subr.bf16.mxu0 0
        %1791 = vmatpush1.bf16.msra.mxu0 0
        %1792 = vmatprep.subr.bf16.mxu0 0
        %1793 = vmatpush1.bf16.msra.mxu0 0
        %1794 = vmatprep.subr.bf16.mxu0 0
        %1795 = vmatpush1.bf16.msra.mxu0 0
        %1796 = vmatprep.subr.bf16.mxu0 0
        %1797 = vmatpush1.bf16.msra.mxu0 0
        %1798 = vmatprep.subr.bf16.mxu0 0
        %1799 = vmatpush1.bf16.msra.mxu0 0
        %1800 = vmatprep.subr.bf16.mxu0 0
        %1801 = vmatpush1.bf16.msra.mxu0 0
        %1802 = vmatprep.subr.bf16.mxu0 0
        %1803 = vmatpush1.bf16.msra.mxu0 0
        %1804 = vmatprep.subr.bf16.mxu0 0
        %1805 = vmatpush1.bf16.msra.mxu0 0
        %1806 = vmatprep.subr.bf16.mxu0 0
        %1807 = vmatpush1.bf16.msra.mxu0 0
        %1808 = vmatprep.subr.bf16.mxu0 0
        %1809 = vmatpush1.bf16.msra.mxu0 0
        %1810 = vmatprep.subr.bf16.mxu0 0
        %1811 = vmatpush1.bf16.msra.mxu0 0
        %1812 = vmatprep.mubr.bf16.mxu0 0
        %1813 = vmatmul.mubr.bf16.gmra.mrb[0].mxu0 %v1778
        %v1814 = vpop.f32.mrb[0].mxu0
        %v1815 = vadd.f32 0.0, %v1814
        %v1816 = vpop.f32.mrb[0].mxu0
        %v1817 = vpop.f32.mrb[0].mxu0
        %v1818 = vadd.f32 0.0, %v1817
        %v1819 = vpop.f32.mrb[0].mxu0
        %1820 = vdwg.mxu0
        %1821 = vrot.lane.b32.xlu0 %v609, 112
        %v1822 = vpop.permute.xlu0 %1821
        %1823 = vrot.lane.b32.xlu0 %v609, 80
        %v1824 = vpop.permute.xlu0 %1823
        %v1826 = vsel %vm617, %v1822, 0
        %v1829 = vsel %vm617, %v1824, 0
        %1831 = vmatprep.subr.bf16.mxu0 0
        %1832 = vmatpush1.bf16.xpose.msra.mxu0 %v1829
        %1833 = vmatprep.subr.bf16.mxu0 0
        %1834 = vmatpush1.bf16.xpose.msra.mxu0 0
        %1835 = vmatprep.subr.bf16.mxu0 0
        %1836 = vmatpush1.bf16.xpose.msra.mxu0 0
        %1837 = vmatprep.subr.bf16.mxu0 0
        %1838 = vmatpush1.bf16.xpose.msra.mxu0 0
        %1839 = vmatprep.subr.bf16.mxu0 0
        %1840 = vmatpush1.bf16.xpose.msra.mxu0 0
        %1841 = vmatprep.subr.bf16.mxu0 0
        %1842 = vmatpush1.bf16.xpose.msra.mxu0 0
        %1843 = vmatprep.subr.bf16.mxu0 0
        %1844 = vmatpush1.bf16.xpose.msra.mxu0 0
        %1845 = vmatprep.subr.bf16.mxu0 0
        %1846 = vmatpush1.bf16.xpose.msra.mxu0 0
        %1847 = vmatprep.subr.bf16.mxu0 0
        %1848 = vmatpush1.bf16.xpose.msra.mxu0 0
        %1849 = vmatprep.subr.bf16.mxu0 0
        %1850 = vmatpush1.bf16.xpose.msra.mxu0 0
        %1851 = vmatprep.subr.bf16.mxu0 0
        %1852 = vmatpush1.bf16.xpose.msra.mxu0 0
        %1853 = vmatprep.subr.bf16.mxu0 0
        %1854 = vmatpush1.bf16.xpose.msra.mxu0 0
        %1855 = vmatprep.subr.bf16.mxu0 0
        %1856 = vmatpush1.bf16.xpose.msra.mxu0 0
        %1857 = vmatprep.subr.bf16.mxu0 0
        %1858 = vmatpush1.bf16.xpose.msra.mxu0 0
        %1859 = vmatprep.subr.bf16.mxu0 0
        %1860 = vmatpush1.bf16.xpose.msra.mxu0 0
        %1861 = vmatprep.subr.bf16.mxu0 0
        %1862 = vmatpush1.bf16.xpose.msra.mxu0 0
        %1863 = vmatprep.mubr.bf16.mxu0 0
        %1864 = vmatmul.mubr.bf16.gmra.mrb[0].mxu0 %v1826
        %v1865 = vpop.f32.mrb[0].mxu0
        %v1866 = vadd.f32 %v605, %v1865
        %v1867 = vpop.f32.mrb[0].mxu0
        %v1868 = vpop.f32.mrb[0].mxu0
        %v1869 = vadd.f32 %v606, %v1868
        %v1870 = vpop.f32.mrb[0].mxu0
        %1871 = vdwg.mxu0
        %1872 = vrot.lane.b32.xlu0 %v610, 112
        %v1873 = vpop.permute.xlu0 %1872
        %1874 = vrot.lane.b32.xlu0 %v610, 80
        %v1875 = vpop.permute.xlu0 %1874
        %v1877 = vsel %vm617, %v1873, 0
        %v1880 = vsel %vm617, %v1875, 0
        %1882 = vmatprep.subr.bf16.mxu0 0
        %1883 = vmatpush1.bf16.xpose.msra.mxu0 %v1880
        %1884 = vmatprep.subr.bf16.mxu0 0
        %1885 = vmatpush1.bf16.xpose.msra.mxu0 0
        %1886 = vmatprep.subr.bf16.mxu0 0
        %1887 = vmatpush1.bf16.xpose.msra.mxu0 0
        %1888 = vmatprep.subr.bf16.mxu0 0
        %1889 = vmatpush1.bf16.xpose.msra.mxu0 0
        %1890 = vmatprep.subr.bf16.mxu0 0
        %1891 = vmatpush1.bf16.xpose.msra.mxu0 0
        %1892 = vmatprep.subr.bf16.mxu0 0
        %1893 = vmatpush1.bf16.xpose.msra.mxu0 0
        %1894 = vmatprep.subr.bf16.mxu0 0
        %1895 = vmatpush1.bf16.xpose.msra.mxu0 0
        %1896 = vmatprep.subr.bf16.mxu0 0
        %1897 = vmatpush1.bf16.xpose.msra.mxu0 0
        %1898 = vmatprep.subr.bf16.mxu0 0
        %1899 = vmatpush1.bf16.xpose.msra.mxu0 0
        %1900 = vmatprep.subr.bf16.mxu0 0
        %1901 = vmatpush1.bf16.xpose.msra.mxu0 0
        %1902 = vmatprep.subr.bf16.mxu0 0
        %1903 = vmatpush1.bf16.xpose.msra.mxu0 0
        %1904 = vmatprep.subr.bf16.mxu0 0
        %1905 = vmatpush1.bf16.xpose.msra.mxu0 0
        %1906 = vmatprep.subr.bf16.mxu0 0
        %1907 = vmatpush1.bf16.xpose.msra.mxu0 0
        %1908 = vmatprep.subr.bf16.mxu0 0
        %1909 = vmatpush1.bf16.xpose.msra.mxu0 0
        %1910 = vmatprep.subr.bf16.mxu0 0
        %1911 = vmatpush1.bf16.xpose.msra.mxu0 0
        %1912 = vmatprep.subr.bf16.mxu0 0
        %1913 = vmatpush1.bf16.xpose.msra.mxu0 0
        %1914 = vmatprep.mubr.bf16.mxu0 0
        %1915 = vmatmul.mubr.bf16.gmra.mrb[0].mxu0 %v1877
        %v1916 = vpop.f32.mrb[0].mxu0
        %v1917 = vadd.f32 %v605, %v1916
        %v1918 = vpop.f32.mrb[0].mxu0
        %v1919 = vpop.f32.mrb[0].mxu0
        %v1920 = vadd.f32 %v606, %v1919
        %v1921 = vpop.f32.mrb[0].mxu0
        %1922 = vdwg.mxu0
        %1923 = vrot.lane.b32.xlu0 %v611, 112
        %v1924 = vpop.permute.xlu0 %1923
        %1925 = vrot.lane.b32.xlu0 %v611, 80
        %v1926 = vpop.permute.xlu0 %1925
        %v1928 = vsel %vm617, %v1924, 0
        %v1931 = vsel %vm617, %v1926, 0
        %1933 = vmatprep.subr.bf16.mxu0 0
        %1934 = vmatpush1.bf16.xpose.msra.mxu0 %v1931
        %1935 = vmatprep.subr.bf16.mxu0 0
        %1936 = vmatpush1.bf16.xpose.msra.mxu0 0
        %1937 = vmatprep.subr.bf16.mxu0 0
        %1938 = vmatpush1.bf16.xpose.msra.mxu0 0
        %1939 = vmatprep.subr.bf16.mxu0 0
        %1940 = vmatpush1.bf16.xpose.msra.mxu0 0
        %1941 = vmatprep.subr.bf16.mxu0 0
        %1942 = vmatpush1.bf16.xpose.msra.mxu0 0
        %1943 = vmatprep.subr.bf16.mxu0 0
        %1944 = vmatpush1.bf16.xpose.msra.mxu0 0
        %1945 = vmatprep.subr.bf16.mxu0 0
        %1946 = vmatpush1.bf16.xpose.msra.mxu0 0
        %1947 = vmatprep.subr.bf16.mxu0 0
        %1948 = vmatpush1.bf16.xpose.msra.mxu0 0
        %1949 = vmatprep.subr.bf16.mxu0 0
        %1950 = vmatpush1.bf16.xpose.msra.mxu0 0
        %1951 = vmatprep.subr.bf16.mxu0 0
        %1952 = vmatpush1.bf16.xpose.msra.mxu0 0
        %1953 = vmatprep.subr.bf16.mxu0 0
        %1954 = vmatpush1.bf16.xpose.msra.mxu0 0
        %1955 = vmatprep.subr.bf16.mxu0 0
        %1956 = vmatpush1.bf16.xpose.msra.mxu0 0
        %1957 = vmatprep.subr.bf16.mxu0 0
        %1958 = vmatpush1.bf16.xpose.msra.mxu0 0
        %1959 = vmatprep.subr.bf16.mxu0 0
        %1960 = vmatpush1.bf16.xpose.msra.mxu0 0
        %1961 = vmatprep.subr.bf16.mxu0 0
        %1962 = vmatpush1.bf16.xpose.msra.mxu0 0
        %1963 = vmatprep.subr.bf16.mxu0 0
        %1964 = vmatpush1.bf16.xpose.msra.mxu0 0
        %1965 = vmatprep.mubr.bf16.mxu0 0
        %1966 = vmatmul.mubr.bf16.gmra.mrb[0].mxu0 %v1928
        %v1967 = vpop.f32.mrb[0].mxu0
        %v1968 = vadd.f32 %v605, %v1967
        %v1969 = vpop.f32.mrb[0].mxu0
        %v1970 = vpop.f32.mrb[0].mxu0
        %v1971 = vadd.f32 %v606, %v1970
        %v1972 = vpop.f32.mrb[0].mxu0
        %1973 = vdwg.mxu0
        %1974 = vrot.lane.b32.xlu0 %v612, 112
        %v1975 = vpop.permute.xlu0 %1974
        %1976 = vrot.lane.b32.xlu0 %v612, 80
        %v1977 = vpop.permute.xlu0 %1976
        %v1979 = vsel %vm617, %v1975, 0
        %v1982 = vsel %vm617, %v1977, 0
        %1984 = vmatprep.subr.bf16.mxu0 0
        %1985 = vmatpush1.bf16.xpose.msra.mxu0 %v1982
        %1986 = vmatprep.subr.bf16.mxu0 0
        %1987 = vmatpush1.bf16.xpose.msra.mxu0 0
        %1988 = vmatprep.subr.bf16.mxu0 0
        %1989 = vmatpush1.bf16.xpose.msra.mxu0 0
        %1990 = vmatprep.subr.bf16.mxu0 0
        %1991 = vmatpush1.bf16.xpose.msra.mxu0 0
        %1992 = vmatprep.subr.bf16.mxu0 0
        %1993 = vmatpush1.bf16.xpose.msra.mxu0 0
        %1994 = vmatprep.subr.bf16.mxu0 0
        %1995 = vmatpush1.bf16.xpose.msra.mxu0 0
        %1996 = vmatprep.subr.bf16.mxu0 0
        %1997 = vmatpush1.bf16.xpose.msra.mxu0 0
        %1998 = vmatprep.subr.bf16.mxu0 0
        %1999 = vmatpush1.bf16.xpose.msra.mxu0 0
        %2000 = vmatprep.subr.bf16.mxu0 0
        %2001 = vmatpush1.bf16.xpose.msra.mxu0 0
        %2002 = vmatprep.subr.bf16.mxu0 0
        %2003 = vmatpush1.bf16.xpose.msra.mxu0 0
        %2004 = vmatprep.subr.bf16.mxu0 0
        %2005 = vmatpush1.bf16.xpose.msra.mxu0 0
        %2006 = vmatprep.subr.bf16.mxu0 0
        %2007 = vmatpush1.bf16.xpose.msra.mxu0 0
        %2008 = vmatprep.subr.bf16.mxu0 0
        %2009 = vmatpush1.bf16.xpose.msra.mxu0 0
        %2010 = vmatprep.subr.bf16.mxu0 0
        %2011 = vmatpush1.bf16.xpose.msra.mxu0 0
        %2012 = vmatprep.subr.bf16.mxu0 0
        %2013 = vmatpush1.bf16.xpose.msra.mxu0 0
        %2014 = vmatprep.subr.bf16.mxu0 0
        %2015 = vmatpush1.bf16.xpose.msra.mxu0 0
        %2016 = vmatprep.mubr.bf16.mxu0 0
        %2017 = vmatmul.mubr.bf16.gmra.mrb[0].mxu0 %v1979
        %v2018 = vpop.f32.mrb[0].mxu0
        %v2019 = vadd.f32 %v605, %v2018
        %v2020 = vpop.f32.mrb[0].mxu0
        %v2021 = vpop.f32.mrb[0].mxu0
        %v2022 = vadd.f32 %v606, %v2021
        %v2023 = vpop.f32.mrb[0].mxu0
        %2024 = vdwg.mxu0
        %2025 = vrot.lane.b32.xlu0 %v613, 112
        %v2026 = vpop.permute.xlu0 %2025
        %2027 = vrot.lane.b32.xlu0 %v613, 80
        %v2028 = vpop.permute.xlu0 %2027
        %v2030 = vsel %vm617, %v2026, 0
        %v2033 = vsel %vm617, %v2028, 0
        %2035 = vmatprep.subr.bf16.mxu0 0
        %2036 = vmatpush1.bf16.xpose.msra.mxu0 %v2033
        %2037 = vmatprep.subr.bf16.mxu0 0
        %2038 = vmatpush1.bf16.xpose.msra.mxu0 0
        %2039 = vmatprep.subr.bf16.mxu0 0
        %2040 = vmatpush1.bf16.xpose.msra.mxu0 0
        %2041 = vmatprep.subr.bf16.mxu0 0
        %2042 = vmatpush1.bf16.xpose.msra.mxu0 0
        %2043 = vmatprep.subr.bf16.mxu0 0
        %2044 = vmatpush1.bf16.xpose.msra.mxu0 0
        %2045 = vmatprep.subr.bf16.mxu0 0
        %2046 = vmatpush1.bf16.xpose.msra.mxu0 0
        %2047 = vmatprep.subr.bf16.mxu0 0
        %2048 = vmatpush1.bf16.xpose.msra.mxu0 0
        %2049 = vmatprep.subr.bf16.mxu0 0
        %2050 = vmatpush1.bf16.xpose.msra.mxu0 0
        %2051 = vmatprep.subr.bf16.mxu0 0
        %2052 = vmatpush1.bf16.xpose.msra.mxu0 0
        %2053 = vmatprep.subr.bf16.mxu0 0
        %2054 = vmatpush1.bf16.xpose.msra.mxu0 0
        %2055 = vmatprep.subr.bf16.mxu0 0
        %2056 = vmatpush1.bf16.xpose.msra.mxu0 0
        %2057 = vmatprep.subr.bf16.mxu0 0
        %2058 = vmatpush1.bf16.xpose.msra.mxu0 0
        %2059 = vmatprep.subr.bf16.mxu0 0
        %2060 = vmatpush1.bf16.xpose.msra.mxu0 0
        %2061 = vmatprep.subr.bf16.mxu0 0
        %2062 = vmatpush1.bf16.xpose.msra.mxu0 0
        %2063 = vmatprep.subr.bf16.mxu0 0
        %2064 = vmatpush1.bf16.xpose.msra.mxu0 0
        %2065 = vmatprep.subr.bf16.mxu0 0
        %2066 = vmatpush1.bf16.xpose.msra.mxu0 0
        %2067 = vmatprep.mubr.bf16.mxu0 0
        %2068 = vmatmul.mubr.bf16.gmra.mrb[0].mxu0 %v2030
        %v2069 = vpop.f32.mrb[0].mxu0
        %v2070 = vadd.f32 %v605, %v2069
        %v2071 = vpop.f32.mrb[0].mxu0
        %v2072 = vpop.f32.mrb[0].mxu0
        %v2073 = vadd.f32 %v606, %v2072
        %v2074 = vpop.f32.mrb[0].mxu0
        %2075 = vdwg.mxu0
        %v2076 = vsel %vm865, %v1866, -inf
        %2077 = vmax.xlane.f32.xlu0 %v2076
        %v2078 = vpop.xlane.xlu0 %2077
        %v2079 = vsel %vm865, %v1869, -inf
        %2080 = vmax.xlane.f32.xlu0 %v2079
        %v2081 = vpop.xlane.xlu0 %2080
        %v2082 = vsel %vm865, %v1917, -inf
        %2083 = vmax.xlane.f32.xlu0 %v2082
        %v2084 = vpop.xlane.xlu0 %2083
        %v2085 = vsel %vm865, %v1920, -inf
        %2086 = vmax.xlane.f32.xlu0 %v2085
        %v2087 = vpop.xlane.xlu0 %2086
        %v2088 = vsel %vm865, %v1968, -inf
        %2089 = vmax.xlane.f32.xlu0 %v2088
        %v2090 = vpop.xlane.xlu0 %2089
        %v2091 = vsel %vm865, %v1971, -inf
        %2092 = vmax.xlane.f32.xlu0 %v2091
        %v2093 = vpop.xlane.xlu0 %2092
        %v2094 = vsel %vm865, %v2019, -inf
        %2095 = vmax.xlane.f32.xlu0 %v2094
        %v2096 = vpop.xlane.xlu0 %2095
        %v2097 = vsel %vm865, %v2022, -inf
        %2098 = vmax.xlane.f32.xlu0 %v2097
        %v2099 = vpop.xlane.xlu0 %2098
        %v2100 = vsel %vm865, %v2070, -inf
        %2101 = vmax.xlane.f32.xlu0 %v2100
        %v2102 = vpop.xlane.xlu0 %2101
        %v2103 = vsel %vm865, %v2073, -inf
        %2104 = vmax.xlane.f32.xlu0 %v2103
        %v2105 = vpop.xlane.xlu0 %2104
        %v2106 = vsub.f32 %v1866, %v2078
        %v2107 = vsub.f32 %v1869, %v2081
        %v2108 = vsub.f32 %v1917, %v2084
        %v2109 = vsub.f32 %v1920, %v2087
        %v2110 = vsub.f32 %v1968, %v2090
        %v2111 = vsub.f32 %v1971, %v2093
        %v2112 = vsub.f32 %v2019, %v2096
        %v2113 = vsub.f32 %v2022, %v2099
        %v2114 = vsub.f32 %v2070, %v2102
        %v2115 = vsub.f32 %v2073, %v2105
        %v2116 = vmul.f32 %v2106, 1.442695
        %v2117 = vpow.pop %v2116
        %v2118 = vmul.f32 %v2107, 1.442695
        %v2119 = vpow.pop %v2118
        %v2120 = vmul.f32 %v2108, 1.442695
        %v2121 = vpow.pop %v2120
        %v2122 = vmul.f32 %v2109, 1.442695
        %v2123 = vpow.pop %v2122
        %v2124 = vmul.f32 %v2110, 1.442695
        %v2125 = vpow.pop %v2124
        %v2126 = vmul.f32 %v2111, 1.442695
        %v2127 = vpow.pop %v2126
        %v2128 = vmul.f32 %v2112, 1.442695
        %v2129 = vpow.pop %v2128
        %v2130 = vmul.f32 %v2113, 1.442695
        %v2131 = vpow.pop %v2130
        %v2132 = vmul.f32 %v2114, 1.442695
        %v2133 = vpow.pop %v2132
        %v2134 = vmul.f32 %v2115, 1.442695
        %v2135 = vpow.pop %v2134
        %v2136 = vsel %vm865, %v2117, 0.0
        %2137 = vadd.xlane.f32.xlu0 %v2136
        %v2138 = vpop.xlane.xlu0 %2137
        %v2139 = vsel %vm865, %v2119, 0.0
        %2140 = vadd.xlane.f32.xlu0 %v2139
        %v2141 = vpop.xlane.xlu0 %2140
        %v2142 = vsel %vm865, %v2121, 0.0
        %2143 = vadd.xlane.f32.xlu0 %v2142
        %v2144 = vpop.xlane.xlu0 %2143
        %v2145 = vsel %vm865, %v2123, 0.0
        %2146 = vadd.xlane.f32.xlu0 %v2145
        %v2147 = vpop.xlane.xlu0 %2146
        %v2148 = vsel %vm865, %v2125, 0.0
        %2149 = vadd.xlane.f32.xlu0 %v2148
        %v2150 = vpop.xlane.xlu0 %2149
        %v2151 = vsel %vm865, %v2127, 0.0
        %2152 = vadd.xlane.f32.xlu0 %v2151
        %v2153 = vpop.xlane.xlu0 %2152
        %v2154 = vsel %vm865, %v2129, 0.0
        %2155 = vadd.xlane.f32.xlu0 %v2154
        %v2156 = vpop.xlane.xlu0 %2155
        %v2157 = vsel %vm865, %v2131, 0.0
        %2158 = vadd.xlane.f32.xlu0 %v2157
        %v2159 = vpop.xlane.xlu0 %2158
        %v2160 = vsel %vm865, %v2133, 0.0
        %2161 = vadd.xlane.f32.xlu0 %v2160
        %v2162 = vpop.xlane.xlu0 %2161
        %v2163 = vsel %vm865, %v2135, 0.0
        %2164 = vadd.xlane.f32.xlu0 %v2163
        %v2165 = vpop.xlane.xlu0 %2164
        %v2166 = vrcp.pop %v2138
        %v2167 = vrcp.pop %v2141
        %v2168 = vrcp.pop %v2144
        %v2169 = vrcp.pop %v2147
        %v2170 = vrcp.pop %v2150
        %v2171 = vrcp.pop %v2153
        %v2172 = vrcp.pop %v2156
        %v2173 = vrcp.pop %v2159
        %v2174 = vrcp.pop %v2162
        %v2175 = vrcp.pop %v2165
        %v2176 = vmul.f32 %v2117, %v2166
        %v2177 = vmul.f32 %v2119, %v2167
        %v2178 = vmul.f32 %v2121, %v2168
        %v2179 = vmul.f32 %v2123, %v2169
        %v2180 = vmul.f32 %v2125, %v2170
        %v2181 = vmul.f32 %v2127, %v2171
        %v2182 = vmul.f32 %v2129, %v2172
        %v2183 = vmul.f32 %v2131, %v2173
        %v2184 = vmul.f32 %v2133, %v2174
        %v2185 = vmul.f32 %v2135, %v2175
        %v2186 = vpack.c.bf16 %v2177, %v2176
        %v2187 = vpack.c.bf16 %v2179, %v2178
        %v2188 = vpack.c.bf16 %v2181, %v2180
        %v2189 = vpack.c.bf16 %v2183, %v2182
        %v2190 = vpack.c.bf16 %v2185, %v2184
        %2191 = vrot.lane.b32.xlu0 %v609, 48
        %v2192 = vpop.permute.xlu0 %2191
        %v2195 = vsel %vm865, %v2186, 0
        %2197 = vmatprep.subr.bf16.mxu0 0
        %2198 = vmatpush1.bf16.msra.mxu0 %v2192
        %2199 = vmatprep.subr.bf16.mxu0 0
        %2200 = vmatpush1.bf16.msra.mxu0 0
        %2201 = vmatprep.subr.bf16.mxu0 0
        %2202 = vmatpush1.bf16.msra.mxu0 0
        %2203 = vmatprep.subr.bf16.mxu0 0
        %2204 = vmatpush1.bf16.msra.mxu0 0
        %2205 = vmatprep.subr.bf16.mxu0 0
        %2206 = vmatpush1.bf16.msra.mxu0 0
        %2207 = vmatprep.subr.bf16.mxu0 0
        %2208 = vmatpush1.bf16.msra.mxu0 0
        %2209 = vmatprep.subr.bf16.mxu0 0
        %2210 = vmatpush1.bf16.msra.mxu0 0
        %2211 = vmatprep.subr.bf16.mxu0 0
        %2212 = vmatpush1.bf16.msra.mxu0 0
        %2213 = vmatprep.subr.bf16.mxu0 0
        %2214 = vmatpush1.bf16.msra.mxu0 0
        %2215 = vmatprep.subr.bf16.mxu0 0
        %2216 = vmatpush1.bf16.msra.mxu0 0
        %2217 = vmatprep.subr.bf16.mxu0 0
        %2218 = vmatpush1.bf16.msra.mxu0 0
        %2219 = vmatprep.subr.bf16.mxu0 0
        %2220 = vmatpush1.bf16.msra.mxu0 0
        %2221 = vmatprep.subr.bf16.mxu0 0
        %2222 = vmatpush1.bf16.msra.mxu0 0
        %2223 = vmatprep.subr.bf16.mxu0 0
        %2224 = vmatpush1.bf16.msra.mxu0 0
        %2225 = vmatprep.subr.bf16.mxu0 0
        %2226 = vmatpush1.bf16.msra.mxu0 0
        %2227 = vmatprep.subr.bf16.mxu0 0
        %2228 = vmatpush1.bf16.msra.mxu0 0
        %2229 = vmatprep.mubr.bf16.mxu0 0
        %2230 = vmatmul.mubr.bf16.gmra.mrb[0].mxu0 %v2195
        %v2231 = vpop.f32.mrb[0].mxu0
        %v2232 = vadd.f32 0.0, %v2231
        %v2233 = vpop.f32.mrb[0].mxu0
        %v2234 = vpop.f32.mrb[0].mxu0
        %v2235 = vadd.f32 0.0, %v2234
        %v2236 = vpop.f32.mrb[0].mxu0
        %2237 = vdwg.mxu0
        %2238 = vrot.lane.b32.xlu0 %v610, 48
        %v2239 = vpop.permute.xlu0 %2238
        %v2242 = vsel %vm865, %v2187, 0
        %2244 = vmatprep.subr.bf16.mxu0 0
        %2245 = vmatpush1.bf16.msra.mxu0 %v2239
        %2246 = vmatprep.subr.bf16.mxu0 0
        %2247 = vmatpush1.bf16.msra.mxu0 0
        %2248 = vmatprep.subr.bf16.mxu0 0
        %2249 = vmatpush1.bf16.msra.mxu0 0
        %2250 = vmatprep.subr.bf16.mxu0 0
        %2251 = vmatpush1.bf16.msra.mxu0 0
        %2252 = vmatprep.subr.bf16.mxu0 0
        %2253 = vmatpush1.bf16.msra.mxu0 0
        %2254 = vmatprep.subr.bf16.mxu0 0
        %2255 = vmatpush1.bf16.msra.mxu0 0
        %2256 = vmatprep.subr.bf16.mxu0 0
        %2257 = vmatpush1.bf16.msra.mxu0 0
        %2258 = vmatprep.subr.bf16.mxu0 0
        %2259 = vmatpush1.bf16.msra.mxu0 0
        %2260 = vmatprep.subr.bf16.mxu0 0
        %2261 = vmatpush1.bf16.msra.mxu0 0
        %2262 = vmatprep.subr.bf16.mxu0 0
        %2263 = vmatpush1.bf16.msra.mxu0 0
        %2264 = vmatprep.subr.bf16.mxu0 0
        %2265 = vmatpush1.bf16.msra.mxu0 0
        %2266 = vmatprep.subr.bf16.mxu0 0
        %2267 = vmatpush1.bf16.msra.mxu0 0
        %2268 = vmatprep.subr.bf16.mxu0 0
        %2269 = vmatpush1.bf16.msra.mxu0 0
        %2270 = vmatprep.subr.bf16.mxu0 0
        %2271 = vmatpush1.bf16.msra.mxu0 0
        %2272 = vmatprep.subr.bf16.mxu0 0
        %2273 = vmatpush1.bf16.msra.mxu0 0
        %2274 = vmatprep.subr.bf16.mxu0 0
        %2275 = vmatpush1.bf16.msra.mxu0 0
        %2276 = vmatprep.mubr.bf16.mxu0 0
        %2277 = vmatmul.mubr.bf16.gmra.mrb[0].mxu0 %v2242
        %v2278 = vpop.f32.mrb[0].mxu0
        %v2279 = vadd.f32 0.0, %v2278
        %v2280 = vpop.f32.mrb[0].mxu0
        %v2281 = vpop.f32.mrb[0].mxu0
        %v2282 = vadd.f32 0.0, %v2281
        %v2283 = vpop.f32.mrb[0].mxu0
        %2284 = vdwg.mxu0
        %2285 = vrot.lane.b32.xlu0 %v611, 48
        %v2286 = vpop.permute.xlu0 %2285
        %v2289 = vsel %vm865, %v2188, 0
        %2291 = vmatprep.subr.bf16.mxu0 0
        %2292 = vmatpush1.bf16.msra.mxu0 %v2286
        %2293 = vmatprep.subr.bf16.mxu0 0
        %2294 = vmatpush1.bf16.msra.mxu0 0
        %2295 = vmatprep.subr.bf16.mxu0 0
        %2296 = vmatpush1.bf16.msra.mxu0 0
        %2297 = vmatprep.subr.bf16.mxu0 0
        %2298 = vmatpush1.bf16.msra.mxu0 0
        %2299 = vmatprep.subr.bf16.mxu0 0
        %2300 = vmatpush1.bf16.msra.mxu0 0
        %2301 = vmatprep.subr.bf16.mxu0 0
        %2302 = vmatpush1.bf16.msra.mxu0 0
        %2303 = vmatprep.subr.bf16.mxu0 0
        %2304 = vmatpush1.bf16.msra.mxu0 0
        %2305 = vmatprep.subr.bf16.mxu0 0
        %2306 = vmatpush1.bf16.msra.mxu0 0
        %2307 = vmatprep.subr.bf16.mxu0 0
        %2308 = vmatpush1.bf16.msra.mxu0 0
        %2309 = vmatprep.subr.bf16.mxu0 0
        %2310 = vmatpush1.bf16.msra.mxu0 0
        %2311 = vmatprep.subr.bf16.mxu0 0
        %2312 = vmatpush1.bf16.msra.mxu0 0
        %2313 = vmatprep.subr.bf16.mxu0 0
        %2314 = vmatpush1.bf16.msra.mxu0 0
        %2315 = vmatprep.subr.bf16.mxu0 0
        %2316 = vmatpush1.bf16.msra.mxu0 0
        %2317 = vmatprep.subr.bf16.mxu0 0
        %2318 = vmatpush1.bf16.msra.mxu0 0
        %2319 = vmatprep.subr.bf16.mxu0 0
        %2320 = vmatpush1.bf16.msra.mxu0 0
        %2321 = vmatprep.subr.bf16.mxu0 0
        %2322 = vmatpush1.bf16.msra.mxu0 0
        %2323 = vmatprep.mubr.bf16.mxu0 0
        %2324 = vmatmul.mubr.bf16.gmra.mrb[0].mxu0 %v2289
        %v2325 = vpop.f32.mrb[0].mxu0
        %v2326 = vadd.f32 0.0, %v2325
        %v2327 = vpop.f32.mrb[0].mxu0
        %v2328 = vpop.f32.mrb[0].mxu0
        %v2329 = vadd.f32 0.0, %v2328
        %v2330 = vpop.f32.mrb[0].mxu0
        %2331 = vdwg.mxu0
        %2332 = vrot.lane.b32.xlu0 %v612, 48
        %v2333 = vpop.permute.xlu0 %2332
        %v2336 = vsel %vm865, %v2189, 0
        %2338 = vmatprep.subr.bf16.mxu0 0
        %2339 = vmatpush1.bf16.msra.mxu0 %v2333
        %2340 = vmatprep.subr.bf16.mxu0 0
        %2341 = vmatpush1.bf16.msra.mxu0 0
        %2342 = vmatprep.subr.bf16.mxu0 0
        %2343 = vmatpush1.bf16.msra.mxu0 0
        %2344 = vmatprep.subr.bf16.mxu0 0
        %2345 = vmatpush1.bf16.msra.mxu0 0
        %2346 = vmatprep.subr.bf16.mxu0 0
        %2347 = vmatpush1.bf16.msra.mxu0 0
        %2348 = vmatprep.subr.bf16.mxu0 0
        %2349 = vmatpush1.bf16.msra.mxu0 0
        %2350 = vmatprep.subr.bf16.mxu0 0
        %2351 = vmatpush1.bf16.msra.mxu0 0
        %2352 = vmatprep.subr.bf16.mxu0 0
        %2353 = vmatpush1.bf16.msra.mxu0 0
        %2354 = vmatprep.subr.bf16.mxu0 0
        %2355 = vmatpush1.bf16.msra.mxu0 0
        %2356 = vmatprep.subr.bf16.mxu0 0
        %2357 = vmatpush1.bf16.msra.mxu0 0
        %2358 = vmatprep.subr.bf16.mxu0 0
        %2359 = vmatpush1.bf16.msra.mxu0 0
        %2360 = vmatprep.subr.bf16.mxu0 0
        %2361 = vmatpush1.bf16.msra.mxu0 0
        %2362 = vmatprep.subr.bf16.mxu0 0
        %2363 = vmatpush1.bf16.msra.mxu0 0
        %2364 = vmatprep.subr.bf16.mxu0 0
        %2365 = vmatpush1.bf16.msra.mxu0 0
        %2366 = vmatprep.subr.bf16.mxu0 0
        %2367 = vmatpush1.bf16.msra.mxu0 0
        %2368 = vmatprep.subr.bf16.mxu0 0
        %2369 = vmatpush1.bf16.msra.mxu0 0
        %2370 = vmatprep.mubr.bf16.mxu0 0
        %2371 = vmatmul.mubr.bf16.gmra.mrb[0].mxu0 %v2336
        %v2372 = vpop.f32.mrb[0].mxu0
        %v2373 = vadd.f32 0.0, %v2372
        %v2374 = vpop.f32.mrb[0].mxu0
        %v2375 = vpop.f32.mrb[0].mxu0
        %v2376 = vadd.f32 0.0, %v2375
        %v2377 = vpop.f32.mrb[0].mxu0
        %2378 = vdwg.mxu0
        %2379 = vrot.lane.b32.xlu0 %v613, 48
        %v2380 = vpop.permute.xlu0 %2379
        %v2383 = vsel %vm865, %v2190, 0
        %2385 = vmatprep.subr.bf16.mxu0 0
        %2386 = vmatpush1.bf16.msra.mxu0 %v2380
        %2387 = vmatprep.subr.bf16.mxu0 0
        %2388 = vmatpush1.bf16.msra.mxu0 0
        %2389 = vmatprep.subr.bf16.mxu0 0
        %2390 = vmatpush1.bf16.msra.mxu0 0
        %2391 = vmatprep.subr.bf16.mxu0 0
        %2392 = vmatpush1.bf16.msra.mxu0 0
        %2393 = vmatprep.subr.bf16.mxu0 0
        %2394 = vmatpush1.bf16.msra.mxu0 0
        %2395 = vmatprep.subr.bf16.mxu0 0
        %2396 = vmatpush1.bf16.msra.mxu0 0
        %2397 = vmatprep.subr.bf16.mxu0 0
        %2398 = vmatpush1.bf16.msra.mxu0 0
        %2399 = vmatprep.subr.bf16.mxu0 0
        %2400 = vmatpush1.bf16.msra.mxu0 0
        %2401 = vmatprep.subr.bf16.mxu0 0
        %2402 = vmatpush1.bf16.msra.mxu0 0
        %2403 = vmatprep.subr.bf16.mxu0 0
        %2404 = vmatpush1.bf16.msra.mxu0 0
        %2405 = vmatprep.subr.bf16.mxu0 0
        %2406 = vmatpush1.bf16.msra.mxu0 0
        %2407 = vmatprep.subr.bf16.mxu0 0
        %2408 = vmatpush1.bf16.msra.mxu0 0
        %2409 = vmatprep.subr.bf16.mxu0 0
        %2410 = vmatpush1.bf16.msra.mxu0 0
        %2411 = vmatprep.subr.bf16.mxu0 0
        %2412 = vmatpush1.bf16.msra.mxu0 0
        %2413 = vmatprep.subr.bf16.mxu0 0
        %2414 = vmatpush1.bf16.msra.mxu0 0
        %2415 = vmatprep.subr.bf16.mxu0 0
        %2416 = vmatpush1.bf16.msra.mxu0 0
        %2417 = vmatprep.mubr.bf16.mxu0 0
        %2418 = vmatmul.mubr.bf16.gmra.mrb[0].mxu0 %v2383
        %v2419 = vpop.f32.mrb[0].mxu0
        %v2420 = vadd.f32 0.0, %v2419
        %v2421 = vpop.f32.mrb[0].mxu0
        %v2422 = vpop.f32.mrb[0].mxu0
        %v2423 = vadd.f32 0.0, %v2422
        %v2424 = vpop.f32.mrb[0].mxu0
        %2425 = vdwg.mxu0
        %2426 = vrot.lane.b32.xlu0 %v609, 104
        %v2427 = vpop.permute.xlu0 %2426
        %2428 = vrot.lane.b32.xlu0 %v609, 72
        %v2429 = vpop.permute.xlu0 %2428
        %v2431 = vsel %vm617, %v2427, 0
        %v2434 = vsel %vm617, %v2429, 0
        %2436 = vmatprep.subr.bf16.mxu0 0
        %2437 = vmatpush1.bf16.xpose.msra.mxu0 %v2434
        %2438 = vmatprep.subr.bf16.mxu0 0
        %2439 = vmatpush1.bf16.xpose.msra.mxu0 0
        %2440 = vmatprep.subr.bf16.mxu0 0
        %2441 = vmatpush1.bf16.xpose.msra.mxu0 0
        %2442 = vmatprep.subr.bf16.mxu0 0
        %2443 = vmatpush1.bf16.xpose.msra.mxu0 0
        %2444 = vmatprep.subr.bf16.mxu0 0
        %2445 = vmatpush1.bf16.xpose.msra.mxu0 0
        %2446 = vmatprep.subr.bf16.mxu0 0
        %2447 = vmatpush1.bf16.xpose.msra.mxu0 0
        %2448 = vmatprep.subr.bf16.mxu0 0
        %2449 = vmatpush1.bf16.xpose.msra.mxu0 0
        %2450 = vmatprep.subr.bf16.mxu0 0
        %2451 = vmatpush1.bf16.xpose.msra.mxu0 0
        %2452 = vmatprep.subr.bf16.mxu0 0
        %2453 = vmatpush1.bf16.xpose.msra.mxu0 0
        %2454 = vmatprep.subr.bf16.mxu0 0
        %2455 = vmatpush1.bf16.xpose.msra.mxu0 0
        %2456 = vmatprep.subr.bf16.mxu0 0
        %2457 = vmatpush1.bf16.xpose.msra.mxu0 0
        %2458 = vmatprep.subr.bf16.mxu0 0
        %2459 = vmatpush1.bf16.xpose.msra.mxu0 0
        %2460 = vmatprep.subr.bf16.mxu0 0
        %2461 = vmatpush1.bf16.xpose.msra.mxu0 0
        %2462 = vmatprep.subr.bf16.mxu0 0
        %2463 = vmatpush1.bf16.xpose.msra.mxu0 0
        %2464 = vmatprep.subr.bf16.mxu0 0
        %2465 = vmatpush1.bf16.xpose.msra.mxu0 0
        %2466 = vmatprep.subr.bf16.mxu0 0
        %2467 = vmatpush1.bf16.xpose.msra.mxu0 0
        %2468 = vmatprep.mubr.bf16.mxu0 0
        %2469 = vmatmul.mubr.bf16.gmra.mrb[0].mxu0 %v2431
        %v2470 = vpop.f32.mrb[0].mxu0
        %v2471 = vadd.f32 %v607, %v2470
        %v2472 = vpop.f32.mrb[0].mxu0
        %v2473 = vpop.f32.mrb[0].mxu0
        %v2474 = vadd.f32 %v608, %v2473
        %v2475 = vpop.f32.mrb[0].mxu0
        %2476 = vdwg.mxu0
        %2477 = vrot.lane.b32.xlu0 %v610, 104
        %v2478 = vpop.permute.xlu0 %2477
        %2479 = vrot.lane.b32.xlu0 %v610, 72
        %v2480 = vpop.permute.xlu0 %2479
        %v2482 = vsel %vm617, %v2478, 0
        %v2485 = vsel %vm617, %v2480, 0
        %2487 = vmatprep.subr.bf16.mxu0 0
        %2488 = vmatpush1.bf16.xpose.msra.mxu0 %v2485
        %2489 = vmatprep.subr.bf16.mxu0 0
        %2490 = vmatpush1.bf16.xpose.msra.mxu0 0
        %2491 = vmatprep.subr.bf16.mxu0 0
        %2492 = vmatpush1.bf16.xpose.msra.mxu0 0
        %2493 = vmatprep.subr.bf16.mxu0 0
        %2494 = vmatpush1.bf16.xpose.msra.mxu0 0
        %2495 = vmatprep.subr.bf16.mxu0 0
        %2496 = vmatpush1.bf16.xpose.msra.mxu0 0
        %2497 = vmatprep.subr.bf16.mxu0 0
        %2498 = vmatpush1.bf16.xpose.msra.mxu0 0
        %2499 = vmatprep.subr.bf16.mxu0 0
        %2500 = vmatpush1.bf16.xpose.msra.mxu0 0
        %2501 = vmatprep.subr.bf16.mxu0 0
        %2502 = vmatpush1.bf16.xpose.msra.mxu0 0
        %2503 = vmatprep.subr.bf16.mxu0 0
        %2504 = vmatpush1.bf16.xpose.msra.mxu0 0
        %2505 = vmatprep.subr.bf16.mxu0 0
        %2506 = vmatpush1.bf16.xpose.msra.mxu0 0
        %2507 = vmatprep.subr.bf16.mxu0 0
        %2508 = vmatpush1.bf16.xpose.msra.mxu0 0
        %2509 = vmatprep.subr.bf16.mxu0 0
        %2510 = vmatpush1.bf16.xpose.msra.mxu0 0
        %2511 = vmatprep.subr.bf16.mxu0 0
        %2512 = vmatpush1.bf16.xpose.msra.mxu0 0
        %2513 = vmatprep.subr.bf16.mxu0 0
        %2514 = vmatpush1.bf16.xpose.msra.mxu0 0
        %2515 = vmatprep.subr.bf16.mxu0 0
        %2516 = vmatpush1.bf16.xpose.msra.mxu0 0
        %2517 = vmatprep.subr.bf16.mxu0 0
        %2518 = vmatpush1.bf16.xpose.msra.mxu0 0
        %2519 = vmatprep.mubr.bf16.mxu0 0
        %2520 = vmatmul.mubr.bf16.gmra.mrb[0].mxu0 %v2482
        %v2521 = vpop.f32.mrb[0].mxu0
        %v2522 = vadd.f32 %v607, %v2521
        %v2523 = vpop.f32.mrb[0].mxu0
        %v2524 = vpop.f32.mrb[0].mxu0
        %v2525 = vadd.f32 %v608, %v2524
        %v2526 = vpop.f32.mrb[0].mxu0
        %2527 = vdwg.mxu0
        %2528 = vrot.lane.b32.xlu0 %v611, 104
        %v2529 = vpop.permute.xlu0 %2528
        %2530 = vrot.lane.b32.xlu0 %v611, 72
        %v2531 = vpop.permute.xlu0 %2530
        %v2533 = vsel %vm617, %v2529, 0
        %v2536 = vsel %vm617, %v2531, 0
        %2538 = vmatprep.subr.bf16.mxu0 0
        %2539 = vmatpush1.bf16.xpose.msra.mxu0 %v2536
        %2540 = vmatprep.subr.bf16.mxu0 0
        %2541 = vmatpush1.bf16.xpose.msra.mxu0 0
        %2542 = vmatprep.subr.bf16.mxu0 0
        %2543 = vmatpush1.bf16.xpose.msra.mxu0 0
        %2544 = vmatprep.subr.bf16.mxu0 0
        %2545 = vmatpush1.bf16.xpose.msra.mxu0 0
        %2546 = vmatprep.subr.bf16.mxu0 0
        %2547 = vmatpush1.bf16.xpose.msra.mxu0 0
        %2548 = vmatprep.subr.bf16.mxu0 0
        %2549 = vmatpush1.bf16.xpose.msra.mxu0 0
        %2550 = vmatprep.subr.bf16.mxu0 0
        %2551 = vmatpush1.bf16.xpose.msra.mxu0 0
        %2552 = vmatprep.subr.bf16.mxu0 0
        %2553 = vmatpush1.bf16.xpose.msra.mxu0 0
        %2554 = vmatprep.subr.bf16.mxu0 0
        %2555 = vmatpush1.bf16.xpose.msra.mxu0 0
        %2556 = vmatprep.subr.bf16.mxu0 0
        %2557 = vmatpush1.bf16.xpose.msra.mxu0 0
        %2558 = vmatprep.subr.bf16.mxu0 0
        %2559 = vmatpush1.bf16.xpose.msra.mxu0 0
        %2560 = vmatprep.subr.bf16.mxu0 0
        %2561 = vmatpush1.bf16.xpose.msra.mxu0 0
        %2562 = vmatprep.subr.bf16.mxu0 0
        %2563 = vmatpush1.bf16.xpose.msra.mxu0 0
        %2564 = vmatprep.subr.bf16.mxu0 0
        %2565 = vmatpush1.bf16.xpose.msra.mxu0 0
        %2566 = vmatprep.subr.bf16.mxu0 0
        %2567 = vmatpush1.bf16.xpose.msra.mxu0 0
        %2568 = vmatprep.subr.bf16.mxu0 0
        %2569 = vmatpush1.bf16.xpose.msra.mxu0 0
        %2570 = vmatprep.mubr.bf16.mxu0 0
        %2571 = vmatmul.mubr.bf16.gmra.mrb[0].mxu0 %v2533
        %v2572 = vpop.f32.mrb[0].mxu0
        %v2573 = vadd.f32 %v607, %v2572
        %v2574 = vpop.f32.mrb[0].mxu0
        %v2575 = vpop.f32.mrb[0].mxu0
        %v2576 = vadd.f32 %v608, %v2575
        %v2577 = vpop.f32.mrb[0].mxu0
        %2578 = vdwg.mxu0
        %2579 = vrot.lane.b32.xlu0 %v612, 104
        %v2580 = vpop.permute.xlu0 %2579
        %2581 = vrot.lane.b32.xlu0 %v612, 72
        %v2582 = vpop.permute.xlu0 %2581
        %v2584 = vsel %vm617, %v2580, 0
        %v2587 = vsel %vm617, %v2582, 0
        %2589 = vmatprep.subr.bf16.mxu0 0
        %2590 = vmatpush1.bf16.xpose.msra.mxu0 %v2587
        %2591 = vmatprep.subr.bf16.mxu0 0
        %2592 = vmatpush1.bf16.xpose.msra.mxu0 0
        %2593 = vmatprep.subr.bf16.mxu0 0
        %2594 = vmatpush1.bf16.xpose.msra.mxu0 0
        %2595 = vmatprep.subr.bf16.mxu0 0
        %2596 = vmatpush1.bf16.xpose.msra.mxu0 0
        %2597 = vmatprep.subr.bf16.mxu0 0
        %2598 = vmatpush1.bf16.xpose.msra.mxu0 0
        %2599 = vmatprep.subr.bf16.mxu0 0
        %2600 = vmatpush1.bf16.xpose.msra.mxu0 0
        %2601 = vmatprep.subr.bf16.mxu0 0
        %2602 = vmatpush1.bf16.xpose.msra.mxu0 0
        %2603 = vmatprep.subr.bf16.mxu0 0
        %2604 = vmatpush1.bf16.xpose.msra.mxu0 0
        %2605 = vmatprep.subr.bf16.mxu0 0
        %2606 = vmatpush1.bf16.xpose.msra.mxu0 0
        %2607 = vmatprep.subr.bf16.mxu0 0
        %2608 = vmatpush1.bf16.xpose.msra.mxu0 0
        %2609 = vmatprep.subr.bf16.mxu0 0
        %2610 = vmatpush1.bf16.xpose.msra.mxu0 0
        %2611 = vmatprep.subr.bf16.mxu0 0
        %2612 = vmatpush1.bf16.xpose.msra.mxu0 0
        %2613 = vmatprep.subr.bf16.mxu0 0
        %2614 = vmatpush1.bf16.xpose.msra.mxu0 0
        %2615 = vmatprep.subr.bf16.mxu0 0
        %2616 = vmatpush1.bf16.xpose.msra.mxu0 0
        %2617 = vmatprep.subr.bf16.mxu0 0
        %2618 = vmatpush1.bf16.xpose.msra.mxu0 0
        %2619 = vmatprep.subr.bf16.mxu0 0
        %2620 = vmatpush1.bf16.xpose.msra.mxu0 0
        %2621 = vmatprep.mubr.bf16.mxu0 0
        %2622 = vmatmul.mubr.bf16.gmra.mrb[0].mxu0 %v2584
        %v2623 = vpop.f32.mrb[0].mxu0
        %v2624 = vadd.f32 %v607, %v2623
        %v2625 = vpop.f32.mrb[0].mxu0
        %v2626 = vpop.f32.mrb[0].mxu0
        %v2627 = vadd.f32 %v608, %v2626
        %v2628 = vpop.f32.mrb[0].mxu0
        %2629 = vdwg.mxu0
        %2630 = vrot.lane.b32.xlu0 %v613, 104
        %v2631 = vpop.permute.xlu0 %2630
        %2632 = vrot.lane.b32.xlu0 %v613, 72
        %v2633 = vpop.permute.xlu0 %2632
        %v2635 = vsel %vm617, %v2631, 0
        %v2638 = vsel %vm617, %v2633, 0
        %2640 = vmatprep.subr.bf16.mxu0 0
        %2641 = vmatpush1.bf16.xpose.msra.mxu0 %v2638
        %2642 = vmatprep.subr.bf16.mxu0 0
        %2643 = vmatpush1.bf16.xpose.msra.mxu0 0
        %2644 = vmatprep.subr.bf16.mxu0 0
        %2645 = vmatpush1.bf16.xpose.msra.mxu0 0
        %2646 = vmatprep.subr.bf16.mxu0 0
        %2647 = vmatpush1.bf16.xpose.msra.mxu0 0
        %2648 = vmatprep.subr.bf16.mxu0 0
        %2649 = vmatpush1.bf16.xpose.msra.mxu0 0
        %2650 = vmatprep.subr.bf16.mxu0 0
        %2651 = vmatpush1.bf16.xpose.msra.mxu0 0
        %2652 = vmatprep.subr.bf16.mxu0 0
        %2653 = vmatpush1.bf16.xpose.msra.mxu0 0
        %2654 = vmatprep.subr.bf16.mxu0 0
        %2655 = vmatpush1.bf16.xpose.msra.mxu0 0
        %2656 = vmatprep.subr.bf16.mxu0 0
        %2657 = vmatpush1.bf16.xpose.msra.mxu0 0
        %2658 = vmatprep.subr.bf16.mxu0 0
        %2659 = vmatpush1.bf16.xpose.msra.mxu0 0
        %2660 = vmatprep.subr.bf16.mxu0 0
        %2661 = vmatpush1.bf16.xpose.msra.mxu0 0
        %2662 = vmatprep.subr.bf16.mxu0 0
        %2663 = vmatpush1.bf16.xpose.msra.mxu0 0
        %2664 = vmatprep.subr.bf16.mxu0 0
        %2665 = vmatpush1.bf16.xpose.msra.mxu0 0
        %2666 = vmatprep.subr.bf16.mxu0 0
        %2667 = vmatpush1.bf16.xpose.msra.mxu0 0
        %2668 = vmatprep.subr.bf16.mxu0 0
        %2669 = vmatpush1.bf16.xpose.msra.mxu0 0
        %2670 = vmatprep.subr.bf16.mxu0 0
        %2671 = vmatpush1.bf16.xpose.msra.mxu0 0
        %2672 = vmatprep.mubr.bf16.mxu0 0
        %2673 = vmatmul.mubr.bf16.gmra.mrb[0].mxu0 %v2635
        %v2674 = vpop.f32.mrb[0].mxu0
        %v2675 = vadd.f32 %v607, %v2674
        %v2676 = vpop.f32.mrb[0].mxu0
        %v2677 = vpop.f32.mrb[0].mxu0
        %v2678 = vadd.f32 %v608, %v2677
        %v2679 = vpop.f32.mrb[0].mxu0
        %2680 = vdwg.mxu0
        %v2681 = vsel %vm865, %v2471, -inf
        %2682 = vmax.xlane.f32.xlu0 %v2681
        %v2683 = vpop.xlane.xlu0 %2682
        %v2684 = vsel %vm865, %v2474, -inf
        %2685 = vmax.xlane.f32.xlu0 %v2684
        %v2686 = vpop.xlane.xlu0 %2685
        %v2687 = vsel %vm865, %v2522, -inf
        %2688 = vmax.xlane.f32.xlu0 %v2687
        %v2689 = vpop.xlane.xlu0 %2688
        %v2690 = vsel %vm865, %v2525, -inf
        %2691 = vmax.xlane.f32.xlu0 %v2690
        %v2692 = vpop.xlane.xlu0 %2691
        %v2693 = vsel %vm865, %v2573, -inf
        %2694 = vmax.xlane.f32.xlu0 %v2693
        %v2695 = vpop.xlane.xlu0 %2694
        %v2696 = vsel %vm865, %v2576, -inf
        %2697 = vmax.xlane.f32.xlu0 %v2696
        %v2698 = vpop.xlane.xlu0 %2697
        %v2699 = vsel %vm865, %v2624, -inf
        %2700 = vmax.xlane.f32.xlu0 %v2699
        %v2701 = vpop.xlane.xlu0 %2700
        %v2702 = vsel %vm865, %v2627, -inf
        %2703 = vmax.xlane.f32.xlu0 %v2702
        %v2704 = vpop.xlane.xlu0 %2703
        %v2705 = vsel %vm865, %v2675, -inf
        %2706 = vmax.xlane.f32.xlu0 %v2705
        %v2707 = vpop.xlane.xlu0 %2706
        %v2708 = vsel %vm865, %v2678, -inf
        %2709 = vmax.xlane.f32.xlu0 %v2708
        %v2710 = vpop.xlane.xlu0 %2709
        %v2711 = vsub.f32 %v2471, %v2683
        %v2712 = vsub.f32 %v2474, %v2686
        %v2713 = vsub.f32 %v2522, %v2689
        %v2714 = vsub.f32 %v2525, %v2692
        %v2715 = vsub.f32 %v2573, %v2695
        %v2716 = vsub.f32 %v2576, %v2698
        %v2717 = vsub.f32 %v2624, %v2701
        %v2718 = vsub.f32 %v2627, %v2704
        %v2719 = vsub.f32 %v2675, %v2707
        %v2720 = vsub.f32 %v2678, %v2710
        %v2721 = vmul.f32 %v2711, 1.442695
        %v2722 = vpow.pop %v2721
        %v2723 = vmul.f32 %v2712, 1.442695
        %v2724 = vpow.pop %v2723
        %v2725 = vmul.f32 %v2713, 1.442695
        %v2726 = vpow.pop %v2725
        %v2727 = vmul.f32 %v2714, 1.442695
        %v2728 = vpow.pop %v2727
        %v2729 = vmul.f32 %v2715, 1.442695
        %v2730 = vpow.pop %v2729
        %v2731 = vmul.f32 %v2716, 1.442695
        %v2732 = vpow.pop %v2731
        %v2733 = vmul.f32 %v2717, 1.442695
        %v2734 = vpow.pop %v2733
        %v2735 = vmul.f32 %v2718, 1.442695
        %v2736 = vpow.pop %v2735
        %v2737 = vmul.f32 %v2719, 1.442695
        %v2738 = vpow.pop %v2737
        %v2739 = vmul.f32 %v2720, 1.442695
        %v2740 = vpow.pop %v2739
        %v2741 = vsel %vm865, %v2722, 0.0
        %2742 = vadd.xlane.f32.xlu0 %v2741
        %v2743 = vpop.xlane.xlu0 %2742
        %v2744 = vsel %vm865, %v2724, 0.0
        %2745 = vadd.xlane.f32.xlu0 %v2744
        %v2746 = vpop.xlane.xlu0 %2745
        %v2747 = vsel %vm865, %v2726, 0.0
        %2748 = vadd.xlane.f32.xlu0 %v2747
        %v2749 = vpop.xlane.xlu0 %2748
        %v2750 = vsel %vm865, %v2728, 0.0
        %2751 = vadd.xlane.f32.xlu0 %v2750
        %v2752 = vpop.xlane.xlu0 %2751
        %v2753 = vsel %vm865, %v2730, 0.0
        %2754 = vadd.xlane.f32.xlu0 %v2753
        %v2755 = vpop.xlane.xlu0 %2754
        %v2756 = vsel %vm865, %v2732, 0.0
        %2757 = vadd.xlane.f32.xlu0 %v2756
        %v2758 = vpop.xlane.xlu0 %2757
        %v2759 = vsel %vm865, %v2734, 0.0
        %2760 = vadd.xlane.f32.xlu0 %v2759
        %v2761 = vpop.xlane.xlu0 %2760
        %v2762 = vsel %vm865, %v2736, 0.0
        %2763 = vadd.xlane.f32.xlu0 %v2762
        %v2764 = vpop.xlane.xlu0 %2763
        %v2765 = vsel %vm865, %v2738, 0.0
        %2766 = vadd.xlane.f32.xlu0 %v2765
        %v2767 = vpop.xlane.xlu0 %2766
        %v2768 = vsel %vm865, %v2740, 0.0
        %2769 = vadd.xlane.f32.xlu0 %v2768
        %v2770 = vpop.xlane.xlu0 %2769
        %v2771 = vrcp.pop %v2743
        %v2772 = vrcp.pop %v2746
        %v2773 = vrcp.pop %v2749
        %v2774 = vrcp.pop %v2752
        %v2775 = vrcp.pop %v2755
        %v2776 = vrcp.pop %v2758
        %v2777 = vrcp.pop %v2761
        %v2778 = vrcp.pop %v2764
        %v2779 = vrcp.pop %v2767
        %v2780 = vrcp.pop %v2770
        %v2781 = vmul.f32 %v2722, %v2771
        %v2782 = vmul.f32 %v2724, %v2772
        %v2783 = vmul.f32 %v2726, %v2773
        %v2784 = vmul.f32 %v2728, %v2774
        %v2785 = vmul.f32 %v2730, %v2775
        %v2786 = vmul.f32 %v2732, %v2776
        %v2787 = vmul.f32 %v2734, %v2777
        %v2788 = vmul.f32 %v2736, %v2778
        %v2789 = vmul.f32 %v2738, %v2779
        %v2790 = vmul.f32 %v2740, %v2780
        %v2791 = vpack.c.bf16 %v2782, %v2781
        %v2792 = vpack.c.bf16 %v2784, %v2783
        %v2793 = vpack.c.bf16 %v2786, %v2785
        %v2794 = vpack.c.bf16 %v2788, %v2787
        %v2795 = vpack.c.bf16 %v2790, %v2789
        %2796 = vrot.lane.b32.xlu0 %v609, 40
        %v2797 = vpop.permute.xlu0 %2796
        %v2800 = vsel %vm865, %v2791, 0
        %2802 = vmatprep.subr.bf16.mxu0 0
        %2803 = vmatpush1.bf16.msra.mxu0 %v2797
        %2804 = vmatprep.subr.bf16.mxu0 0
        %2805 = vmatpush1.bf16.msra.mxu0 0
        %2806 = vmatprep.subr.bf16.mxu0 0
        %2807 = vmatpush1.bf16.msra.mxu0 0
        %2808 = vmatprep.subr.bf16.mxu0 0
        %2809 = vmatpush1.bf16.msra.mxu0 0
        %2810 = vmatprep.subr.bf16.mxu0 0
        %2811 = vmatpush1.bf16.msra.mxu0 0
        %2812 = vmatprep.subr.bf16.mxu0 0
        %2813 = vmatpush1.bf16.msra.mxu0 0
        %2814 = vmatprep.subr.bf16.mxu0 0
        %2815 = vmatpush1.bf16.msra.mxu0 0
        %2816 = vmatprep.subr.bf16.mxu0 0
        %2817 = vmatpush1.bf16.msra.mxu0 0
        %2818 = vmatprep.subr.bf16.mxu0 0
        %2819 = vmatpush1.bf16.msra.mxu0 0
        %2820 = vmatprep.subr.bf16.mxu0 0
        %2821 = vmatpush1.bf16.msra.mxu0 0
        %2822 = vmatprep.subr.bf16.mxu0 0
        %2823 = vmatpush1.bf16.msra.mxu0 0
        %2824 = vmatprep.subr.bf16.mxu0 0
        %2825 = vmatpush1.bf16.msra.mxu0 0
        %2826 = vmatprep.subr.bf16.mxu0 0
        %2827 = vmatpush1.bf16.msra.mxu0 0
        %2828 = vmatprep.subr.bf16.mxu0 0
        %2829 = vmatpush1.bf16.msra.mxu0 0
        %2830 = vmatprep.subr.bf16.mxu0 0
        %2831 = vmatpush1.bf16.msra.mxu0 0
        %2832 = vmatprep.subr.bf16.mxu0 0
        %2833 = vmatpush1.bf16.msra.mxu0 0
        %2834 = vmatprep.mubr.bf16.mxu0 0
        %2835 = vmatmul.mubr.bf16.gmra.mrb[0].mxu0 %v2800
        %v2836 = vpop.f32.mrb[0].mxu0
        %v2837 = vadd.f32 0.0, %v2836
        %v2838 = vpop.f32.mrb[0].mxu0
        %v2839 = vpop.f32.mrb[0].mxu0
        %v2840 = vadd.f32 0.0, %v2839
        %v2841 = vpop.f32.mrb[0].mxu0
        %2842 = vdwg.mxu0
        %2843 = vrot.lane.b32.xlu0 %v610, 40
        %v2844 = vpop.permute.xlu0 %2843
        %v2847 = vsel %vm865, %v2792, 0
        %2849 = vmatprep.subr.bf16.mxu0 0
        %2850 = vmatpush1.bf16.msra.mxu0 %v2844
        %2851 = vmatprep.subr.bf16.mxu0 0
        %2852 = vmatpush1.bf16.msra.mxu0 0
        %2853 = vmatprep.subr.bf16.mxu0 0
        %2854 = vmatpush1.bf16.msra.mxu0 0
        %2855 = vmatprep.subr.bf16.mxu0 0
        %2856 = vmatpush1.bf16.msra.mxu0 0
        %2857 = vmatprep.subr.bf16.mxu0 0
        %2858 = vmatpush1.bf16.msra.mxu0 0
        %2859 = vmatprep.subr.bf16.mxu0 0
        %2860 = vmatpush1.bf16.msra.mxu0 0
        %2861 = vmatprep.subr.bf16.mxu0 0
        %2862 = vmatpush1.bf16.msra.mxu0 0
        %2863 = vmatprep.subr.bf16.mxu0 0
        %2864 = vmatpush1.bf16.msra.mxu0 0
        %2865 = vmatprep.subr.bf16.mxu0 0
        %2866 = vmatpush1.bf16.msra.mxu0 0
        %2867 = vmatprep.subr.bf16.mxu0 0
        %2868 = vmatpush1.bf16.msra.mxu0 0
        %2869 = vmatprep.subr.bf16.mxu0 0
        %2870 = vmatpush1.bf16.msra.mxu0 0
        %2871 = vmatprep.subr.bf16.mxu0 0
        %2872 = vmatpush1.bf16.msra.mxu0 0
        %2873 = vmatprep.subr.bf16.mxu0 0
        %2874 = vmatpush1.bf16.msra.mxu0 0
        %2875 = vmatprep.subr.bf16.mxu0 0
        %2876 = vmatpush1.bf16.msra.mxu0 0
        %2877 = vmatprep.subr.bf16.mxu0 0
        %2878 = vmatpush1.bf16.msra.mxu0 0
        %2879 = vmatprep.subr.bf16.mxu0 0
        %2880 = vmatpush1.bf16.msra.mxu0 0
        %2881 = vmatprep.mubr.bf16.mxu0 0
        %2882 = vmatmul.mubr.bf16.gmra.mrb[0].mxu0 %v2847
        %v2883 = vpop.f32.mrb[0].mxu0
        %v2884 = vadd.f32 0.0, %v2883
        %v2885 = vpop.f32.mrb[0].mxu0
        %v2886 = vpop.f32.mrb[0].mxu0
        %v2887 = vadd.f32 0.0, %v2886
        %v2888 = vpop.f32.mrb[0].mxu0
        %2889 = vdwg.mxu0
        %2890 = vrot.lane.b32.xlu0 %v611, 40
        %v2891 = vpop.permute.xlu0 %2890
        %v2894 = vsel %vm865, %v2793, 0
        %2896 = vmatprep.subr.bf16.mxu0 0
        %2897 = vmatpush1.bf16.msra.mxu0 %v2891
        %2898 = vmatprep.subr.bf16.mxu0 0
        %2899 = vmatpush1.bf16.msra.mxu0 0
        %2900 = vmatprep.subr.bf16.mxu0 0
        %2901 = vmatpush1.bf16.msra.mxu0 0
        %2902 = vmatprep.subr.bf16.mxu0 0
        %2903 = vmatpush1.bf16.msra.mxu0 0
        %2904 = vmatprep.subr.bf16.mxu0 0
        %2905 = vmatpush1.bf16.msra.mxu0 0
        %2906 = vmatprep.subr.bf16.mxu0 0
        %2907 = vmatpush1.bf16.msra.mxu0 0
        %2908 = vmatprep.subr.bf16.mxu0 0
        %2909 = vmatpush1.bf16.msra.mxu0 0
        %2910 = vmatprep.subr.bf16.mxu0 0
        %2911 = vmatpush1.bf16.msra.mxu0 0
        %2912 = vmatprep.subr.bf16.mxu0 0
        %2913 = vmatpush1.bf16.msra.mxu0 0
        %2914 = vmatprep.subr.bf16.mxu0 0
        %2915 = vmatpush1.bf16.msra.mxu0 0
        %2916 = vmatprep.subr.bf16.mxu0 0
        %2917 = vmatpush1.bf16.msra.mxu0 0
        %2918 = vmatprep.subr.bf16.mxu0 0
        %2919 = vmatpush1.bf16.msra.mxu0 0
        %2920 = vmatprep.subr.bf16.mxu0 0
        %2921 = vmatpush1.bf16.msra.mxu0 0
        %2922 = vmatprep.subr.bf16.mxu0 0
        %2923 = vmatpush1.bf16.msra.mxu0 0
        %2924 = vmatprep.subr.bf16.mxu0 0
        %2925 = vmatpush1.bf16.msra.mxu0 0
        %2926 = vmatprep.subr.bf16.mxu0 0
        %2927 = vmatpush1.bf16.msra.mxu0 0
        %2928 = vmatprep.mubr.bf16.mxu0 0
        %2929 = vmatmul.mubr.bf16.gmra.mrb[0].mxu0 %v2894
        %v2930 = vpop.f32.mrb[0].mxu0
        %v2931 = vadd.f32 0.0, %v2930
        %v2932 = vpop.f32.mrb[0].mxu0
        %v2933 = vpop.f32.mrb[0].mxu0
        %v2934 = vadd.f32 0.0, %v2933
        %v2935 = vpop.f32.mrb[0].mxu0
        %2936 = vdwg.mxu0
        %2937 = vrot.lane.b32.xlu0 %v612, 40
        %v2938 = vpop.permute.xlu0 %2937
        %v2941 = vsel %vm865, %v2794, 0
        %2943 = vmatprep.subr.bf16.mxu0 0
        %2944 = vmatpush1.bf16.msra.mxu0 %v2938
        %2945 = vmatprep.subr.bf16.mxu0 0
        %2946 = vmatpush1.bf16.msra.mxu0 0
        %2947 = vmatprep.subr.bf16.mxu0 0
        %2948 = vmatpush1.bf16.msra.mxu0 0
        %2949 = vmatprep.subr.bf16.mxu0 0
        %2950 = vmatpush1.bf16.msra.mxu0 0
        %2951 = vmatprep.subr.bf16.mxu0 0
        %2952 = vmatpush1.bf16.msra.mxu0 0
        %2953 = vmatprep.subr.bf16.mxu0 0
        %2954 = vmatpush1.bf16.msra.mxu0 0
        %2955 = vmatprep.subr.bf16.mxu0 0
        %2956 = vmatpush1.bf16.msra.mxu0 0
        %2957 = vmatprep.subr.bf16.mxu0 0
        %2958 = vmatpush1.bf16.msra.mxu0 0
        %2959 = vmatprep.subr.bf16.mxu0 0
        %2960 = vmatpush1.bf16.msra.mxu0 0
        %2961 = vmatprep.subr.bf16.mxu0 0
        %2962 = vmatpush1.bf16.msra.mxu0 0
        %2963 = vmatprep.subr.bf16.mxu0 0
        %2964 = vmatpush1.bf16.msra.mxu0 0
        %2965 = vmatprep.subr.bf16.mxu0 0
        %2966 = vmatpush1.bf16.msra.mxu0 0
        %2967 = vmatprep.subr.bf16.mxu0 0
        %2968 = vmatpush1.bf16.msra.mxu0 0
        %2969 = vmatprep.subr.bf16.mxu0 0
        %2970 = vmatpush1.bf16.msra.mxu0 0
        %2971 = vmatprep.subr.bf16.mxu0 0
        %2972 = vmatpush1.bf16.msra.mxu0 0
        %2973 = vmatprep.subr.bf16.mxu0 0
        %2974 = vmatpush1.bf16.msra.mxu0 0
        %2975 = vmatprep.mubr.bf16.mxu0 0
        %2976 = vmatmul.mubr.bf16.gmra.mrb[0].mxu0 %v2941
        %v2977 = vpop.f32.mrb[0].mxu0
        %v2978 = vadd.f32 0.0, %v2977
        %v2979 = vpop.f32.mrb[0].mxu0
        %v2980 = vpop.f32.mrb[0].mxu0
        %v2981 = vadd.f32 0.0, %v2980
        %v2982 = vpop.f32.mrb[0].mxu0
        %2983 = vdwg.mxu0
        %2984 = vrot.lane.b32.xlu0 %v613, 40
        %v2985 = vpop.permute.xlu0 %2984
        %v2988 = vsel %vm865, %v2795, 0
        %2990 = vmatprep.subr.bf16.mxu0 0
        %2991 = vmatpush1.bf16.msra.mxu0 %v2985
        %2992 = vmatprep.subr.bf16.mxu0 0
        %2993 = vmatpush1.bf16.msra.mxu0 0
        %2994 = vmatprep.subr.bf16.mxu0 0
        %2995 = vmatpush1.bf16.msra.mxu0 0
        %2996 = vmatprep.subr.bf16.mxu0 0
        %2997 = vmatpush1.bf16.msra.mxu0 0
        %2998 = vmatprep.subr.bf16.mxu0 0
        %2999 = vmatpush1.bf16.msra.mxu0 0
        %3000 = vmatprep.subr.bf16.mxu0 0
        %3001 = vmatpush1.bf16.msra.mxu0 0
        %3002 = vmatprep.subr.bf16.mxu0 0
        %3003 = vmatpush1.bf16.msra.mxu0 0
        %3004 = vmatprep.subr.bf16.mxu0 0
        %3005 = vmatpush1.bf16.msra.mxu0 0
        %3006 = vmatprep.subr.bf16.mxu0 0
        %3007 = vmatpush1.bf16.msra.mxu0 0
        %3008 = vmatprep.subr.bf16.mxu0 0
        %3009 = vmatpush1.bf16.msra.mxu0 0
        %3010 = vmatprep.subr.bf16.mxu0 0
        %3011 = vmatpush1.bf16.msra.mxu0 0
        %3012 = vmatprep.subr.bf16.mxu0 0
        %3013 = vmatpush1.bf16.msra.mxu0 0
        %3014 = vmatprep.subr.bf16.mxu0 0
        %3015 = vmatpush1.bf16.msra.mxu0 0
        %3016 = vmatprep.subr.bf16.mxu0 0
        %3017 = vmatpush1.bf16.msra.mxu0 0
        %3018 = vmatprep.subr.bf16.mxu0 0
        %3019 = vmatpush1.bf16.msra.mxu0 0
        %3020 = vmatprep.subr.bf16.mxu0 0
        %3021 = vmatpush1.bf16.msra.mxu0 0
        %3022 = vmatprep.mubr.bf16.mxu0 0
        %3023 = vmatmul.mubr.bf16.gmra.mrb[0].mxu0 %v2988
        %v3024 = vpop.f32.mrb[0].mxu0
        %v3025 = vadd.f32 0.0, %v3024
        %v3026 = vpop.f32.mrb[0].mxu0
        %v3027 = vpop.f32.mrb[0].mxu0
        %v3028 = vadd.f32 0.0, %v3027
        %v3029 = vpop.f32.mrb[0].mxu0
        %3030 = vdwg.mxu0
        %3041 = vrot.lane.b32.xlu0 %v1627, 8
        %v3042 = vpop.permute.xlu0 %3041
        %3043 = vrot.lane.b32.xlu0 %v1630, 8
        %v3044 = vpop.permute.xlu0 %3043
        %3045 = vrot.lane.b32.xlu0 %v1674, 8
        %v3046 = vpop.permute.xlu0 %3045
        %3047 = vrot.lane.b32.xlu0 %v1677, 8
        %v3048 = vpop.permute.xlu0 %3047
        %3049 = vrot.lane.b32.xlu0 %v1721, 8
        %v3050 = vpop.permute.xlu0 %3049
        %3051 = vrot.lane.b32.xlu0 %v1724, 8
        %v3052 = vpop.permute.xlu0 %3051
        %3053 = vrot.lane.b32.xlu0 %v1768, 8
        %v3054 = vpop.permute.xlu0 %3053
        %3055 = vrot.lane.b32.xlu0 %v1771, 8
        %v3056 = vpop.permute.xlu0 %3055
        %3057 = vrot.lane.b32.xlu0 %v1815, 8
        %v3058 = vpop.permute.xlu0 %3057
        %3059 = vrot.lane.b32.xlu0 %v1818, 8
        %v3060 = vpop.permute.xlu0 %3059
        %3081 = vrot.lane.b32.xlu0 %v2232, 16
        %v3082 = vpop.permute.xlu0 %3081
        %3083 = vrot.lane.b32.xlu0 %v2235, 16
        %v3084 = vpop.permute.xlu0 %3083
        %3085 = vrot.lane.b32.xlu0 %v2279, 16
        %v3086 = vpop.permute.xlu0 %3085
        %3087 = vrot.lane.b32.xlu0 %v2282, 16
        %v3088 = vpop.permute.xlu0 %3087
        %3089 = vrot.lane.b32.xlu0 %v2326, 16
        %v3090 = vpop.permute.xlu0 %3089
        %3091 = vrot.lane.b32.xlu0 %v2329, 16
        %v3092 = vpop.permute.xlu0 %3091
        %3093 = vrot.lane.b32.xlu0 %v2373, 16
        %v3094 = vpop.permute.xlu0 %3093
        %3095 = vrot.lane.b32.xlu0 %v2376, 16
        %v3096 = vpop.permute.xlu0 %3095
        %3097 = vrot.lane.b32.xlu0 %v2420, 16
        %v3098 = vpop.permute.xlu0 %3097
        %3099 = vrot.lane.b32.xlu0 %v2423, 16
        %v3100 = vpop.permute.xlu0 %3099
        %3121 = vrot.lane.b32.xlu0 %v2837, 24
        %v3122 = vpop.permute.xlu0 %3121
        %3123 = vrot.lane.b32.xlu0 %v2840, 24
        %v3124 = vpop.permute.xlu0 %3123
        %3125 = vrot.lane.b32.xlu0 %v2884, 24
        %v3126 = vpop.permute.xlu0 %3125
        %3127 = vrot.lane.b32.xlu0 %v2887, 24
        %v3128 = vpop.permute.xlu0 %3127
        %3129 = vrot.lane.b32.xlu0 %v2931, 24
        %v3130 = vpop.permute.xlu0 %3129
        %3131 = vrot.lane.b32.xlu0 %v2934, 24
        %v3132 = vpop.permute.xlu0 %3131
        %3133 = vrot.lane.b32.xlu0 %v2978, 24
        %v3134 = vpop.permute.xlu0 %3133
        %3135 = vrot.lane.b32.xlu0 %v2981, 24
        %v3136 = vpop.permute.xlu0 %3135
        %3137 = vrot.lane.b32.xlu0 %v3025, 24
        %v3138 = vpop.permute.xlu0 %3137
        %3139 = vrot.lane.b32.xlu0 %v3028, 24
        %v3140 = vpop.permute.xlu0 %3139
        %v3151 = vsel %vm617, %v1022, %v3042
        %v3152 = vsel %vm617, %v1025, %v3044
        %v3153 = vsel %vm617, %v1069, %v3046
        %v3154 = vsel %vm617, %v1072, %v3048
        %v3155 = vsel %vm617, %v1116, %v3050
        %v3156 = vsel %vm617, %v1119, %v3052
        %v3157 = vsel %vm617, %v1163, %v3054
        %v3158 = vsel %vm617, %v1166, %v3056
        %v3159 = vsel %vm617, %v1210, %v3058
        %v3160 = vsel %vm617, %v1213, %v3060
        %v3161 = vsel %vm865, %v3151, %v3082
        %v3162 = vsel %vm865, %v3152, %v3084
        %v3163 = vsel %vm865, %v3153, %v3086
        %v3164 = vsel %vm865, %v3154, %v3088
        %v3165 = vsel %vm865, %v3155, %v3090
        %v3166 = vsel %vm865, %v3156, %v3092
        %v3167 = vsel %vm865, %v3157, %v3094
        %v3168 = vsel %vm865, %v3158, %v3096
        %v3169 = vsel %vm865, %v3159, %v3098
        %v3170 = vsel %vm865, %v3160, %v3100
        %vm3171 = vcmask 195584
        %v3172 = vsel %vm3171, %v3161, %v3122
        %v3173 = vsel %vm3171, %v3162, %v3124
        %v3174 = vsel %vm3171, %v3163, %v3126
        %v3175 = vsel %vm3171, %v3164, %v3128
        %v3176 = vsel %vm3171, %v3165, %v3130
        %v3177 = vsel %vm3171, %v3166, %v3132
        %v3178 = vsel %vm3171, %v3167, %v3134
        %v3179 = vsel %vm3171, %v3168, %v3136
        %v3180 = vsel %vm3171, %v3169, %v3138
        %v3181 = vsel %vm3171, %v3170, %v3140
        %v3182 = vpack.c.bf16 %v3173, %v3172
        %v3183 = vpack.c.bf16 %v3175, %v3174
        %v3184 = vpack.c.bf16 %v3177, %v3176
        %v3185 = vpack.c.bf16 %v3179, %v3178
        %v3186 = vpack.c.bf16 %v3181, %v3180
        %v3187 = vld [vmem:[#allocation8] sm:$0xf]
        %v3188 = vld [vmem:[#allocation8 + $0x4] sm:$0xf]
        %v3189 = vld [vmem:[#allocation8 + $0x8] sm:$0xf]
        %v3190 = vld [vmem:[#allocation8 + $0xc] sm:$0xf]
        %v3191 = vld [vmem:[#allocation10] sm:$0x1]
        %v3193 = vlaneseq
        %v3194 = vshrl.u32 %v3193, 7
        %v3195 = vsub.s32 0, %v3194
        %v3196 = vrot.slane %v3191, %v3195
        %v3202 = vunpack.c.l.b16 %v3187
        %v3203 = vunpack.c.l.b16 %v3188
        %v3204 = vunpack.c.l.b16 %v3189
        %v3205 = vunpack.c.l.b16 %v3190
        %v3206 = vpack.c.b16 %v3203, %v3202
        %v3207 = vpack.c.b16 %v3205, %v3204
        %v3211 = vsel %vm353, %v3182, 0
        %v3214 = vsel %vm353, %v3183, 0
        %v3217 = vsel %vm353, %v3184, 0
        %v3220 = vsel %vm353, %v3185, 0
        %v3223 = vsel %vm353, %v3186, 0
        %3225 = vmatprep.subr.bf16.mxu0 0
        %3226 = vmatpush1.bf16.msra.mxu0 %v3206
        %3227 = vmatprep.subr.bf16.mxu0 0
        %3228 = vmatpush1.bf16.msra.mxu0 %v3207
        %3229 = vmatprep.subr.bf16.mxu0 0
        %3230 = vmatpush1.bf16.msra.mxu0 0
        %3231 = vmatprep.subr.bf16.mxu0 0
        %3232 = vmatpush1.bf16.msra.mxu0 0
        %3233 = vmatprep.subr.bf16.mxu0 0
        %3234 = vmatpush1.bf16.msra.mxu0 0
        %3235 = vmatprep.subr.bf16.mxu0 0
        %3236 = vmatpush1.bf16.msra.mxu0 0
        %3237 = vmatprep.subr.bf16.mxu0 0
        %3238 = vmatpush1.bf16.msra.mxu0 0
        %3239 = vmatprep.subr.bf16.mxu0 0
        %3240 = vmatpush1.bf16.msra.mxu0 0
        %3241 = vmatprep.subr.bf16.mxu0 0
        %3242 = vmatpush1.bf16.msra.mxu0 0
        %3243 = vmatprep.subr.bf16.mxu0 0
        %3244 = vmatpush1.bf16.msra.mxu0 0
        %3245 = vmatprep.subr.bf16.mxu0 0
        %3246 = vmatpush1.bf16.msra.mxu0 0
        %3247 = vmatprep.subr.bf16.mxu0 0
        %3248 = vmatpush1.bf16.msra.mxu0 0
        %3249 = vmatprep.subr.bf16.mxu0 0
        %3250 = vmatpush1.bf16.msra.mxu0 0
        %3251 = vmatprep.subr.bf16.mxu0 0
        %3252 = vmatpush1.bf16.msra.mxu0 0
        %3253 = vmatprep.subr.bf16.mxu0 0
        %3254 = vmatpush1.bf16.msra.mxu0 0
        %3255 = vmatprep.subr.bf16.mxu0 0
        %3256 = vmatpush1.bf16.msra.mxu0 0
        %3257 = vmatprep.mubr.bf16.mxu0 0
        %3258 = vmatmul.mubr.bf16.gmra.mrb[0].mxu0 %v3211
        %v3259 = vpop.f32.mrb[0].mxu0
        %v3260 = vadd.f32 %v3196, %v3259
        %v3261 = vpop.f32.mrb[0].mxu0
        %v3262 = vpop.f32.mrb[0].mxu0
        %v3263 = vadd.f32 %v3196, %v3262
        %v3264 = vpop.f32.mrb[0].mxu0
        %3265 = vmatprep.mubr.bf16.mxu0 0
        %3266 = vmatmul.mubr.bf16.gmra.mrb[0].mxu0 %v3214
        %v3267 = vpop.f32.mrb[0].mxu0
        %v3268 = vadd.f32 %v3196, %v3267
        %v3269 = vpop.f32.mrb[0].mxu0
        %v3270 = vpop.f32.mrb[0].mxu0
        %v3271 = vadd.f32 %v3196, %v3270
        %v3272 = vpop.f32.mrb[0].mxu0
        %3273 = vmatprep.mubr.bf16.mxu0 0
        %3274 = vmatmul.mubr.bf16.gmra.mrb[0].mxu0 %v3217
        %v3275 = vpop.f32.mrb[0].mxu0
        %v3276 = vadd.f32 %v3196, %v3275
        %v3277 = vpop.f32.mrb[0].mxu0
        %v3278 = vpop.f32.mrb[0].mxu0
        %v3279 = vadd.f32 %v3196, %v3278
        %v3280 = vpop.f32.mrb[0].mxu0
        %3281 = vmatprep.mubr.bf16.mxu0 0
        %3282 = vmatmul.mubr.bf16.gmra.mrb[0].mxu0 %v3220
        %v3283 = vpop.f32.mrb[0].mxu0
        %v3284 = vadd.f32 %v3196, %v3283
        %v3285 = vpop.f32.mrb[0].mxu0
        %v3286 = vpop.f32.mrb[0].mxu0
        %v3287 = vadd.f32 %v3196, %v3286
        %v3288 = vpop.f32.mrb[0].mxu0
        %3289 = vmatprep.mubr.bf16.mxu0 0
        %3290 = vmatmul.mubr.bf16.gmra.mrb[0].mxu0 %v3223
        %v3291 = vpop.f32.mrb[0].mxu0
        %v3292 = vadd.f32 %v3196, %v3291
        %v3293 = vpop.f32.mrb[0].mxu0
        %v3294 = vpop.f32.mrb[0].mxu0
        %v3295 = vadd.f32 %v3196, %v3294
        %v3296 = vpop.f32.mrb[0].mxu0
        %3297 = vdwg.mxu0
        %v3298 = vadd.f32 %v3260, %v343
        %v3299 = vadd.f32 %v3263, %v344
        %v3300 = vadd.f32 %v3268, %v345
        %v3301 = vadd.f32 %v3271, %v346
        %v3302 = vadd.f32 %v3276, %v347
        %v3303 = vadd.f32 %v3279, %v348
        %v3304 = vadd.f32 %v3284, %v349
        %v3305 = vadd.f32 %v3287, %v350
        %v3306 = vadd.f32 %v3292, %v351
        %v3307 = vadd.f32 %v3295, %v352
        %3308 = vst.msk [vmem:[%s339] sm:$0xff] %vm353, %v3298
        %3309 = vst.msk [vmem:[%s339 + $0x8] sm:$0xff] %vm353, %v3299
        %3310 = vst.msk [vmem:[%s339 + $0x10] sm:$0xff] %vm353, %v3300
        %3311 = vst.msk [vmem:[%s339 + $0x18] sm:$0xff] %vm353, %v3301
        %3312 = vst.msk [vmem:[%s339 + $0x20] sm:$0xff] %vm353, %v3302
        %3313 = vst.msk [vmem:[%s339 + $0x28] sm:$0xff] %vm353, %v3303
        %3314 = vst.msk [vmem:[%s339 + $0x30] sm:$0xff] %vm353, %v3304
        %3315 = vst.msk [vmem:[%s339 + $0x38] sm:$0xff] %vm353, %v3305
        %3316 = vst.msk [vmem:[%s339 + $0x40] sm:$0xff] %vm353, %v3306
        %3317 = vst.msk [vmem:[%s339 + $0x48] sm:$0xff] %vm353, %v3307
        %s3318 = sand.u32 %s165, 1
        %s3319 = scalar_lea.sflag [#allocation4], %s3318
        %s3320 = sand.u32 %s165, 1
        %s3321 = smul.addr %s3320, 80
        %s3322 = scalar_lea.vmem [#allocation13], %s3321
        // Predicated region
        $region69: #{swin_layer_forward.2} parent=43 // pred_check
          %p3323 = pneg %p175
        $region70: #{swin_layer_forward.2} parent=43 // pred_check_branch
          %3325 = sbr.rel (%p3323) target = $region72
        $region71: #{swin_layer_forward.2} parent=43 // pred_region
          %s3326 = smul.u32 5, %s26
          %s3328 = ssub.s32 1280, 1280
          %3329 = vsyncadd %s3319, %s3328
          %s3330 = smul.addr %s3326, 2
          %s3331 = smul.addr %s3330, 128
          %s3332 = scalar_lea.hbm %s6, %s3331
          %s3333 = sshll.u32 %s3322, 4
          %s3334 = int_to_ptr.vmem [resolvable:$true] %s3333
          %3339 = dma.vmem_to_hbm [thread:$0]  %s3334, 1280, %s3332, %s3319, 128, 128, 8
        $region72: #{swin_layer_forward.2} parent=43 // pred_fallthru
          _
      $region44: #{swin_layer_forward.2} parent=5 // pred_fallthru
        _
      %p3340 = scmp.le.s32.totalorder 2, %s21
      // Predicated region
      $region73: #{swin_layer_forward.2} parent=5 // pred_check
        %p3341 = pneg %p3340
      $region74: #{swin_layer_forward.2} parent=5 // pred_check_branch
        %3343 = sbr.rel (%p3341) target = $region76
      $region75: #{swin_layer_forward.2} parent=5 // pred_region
        %s3344 = ssub.s32 %s21, 2
        // Predicated region
        $region77: #{swin_layer_forward.2} parent=75 // pred_check
          %p3345 = pneg %p181
        $region78: #{swin_layer_forward.2} parent=75 // pred_check_branch
          %3347 = sbr.rel (%p3345) target = $region80
        $region79: #{swin_layer_forward.2} parent=75 // pred_region
          %s3348 = sand.u32 %s166, 1
          %s3349 = scalar_lea.sflag [#allocation4], %s3348
          %s3350 = sand.u32 %s166, 1
          %s3351 = smul.addr %s3350, 80
          %s3352 = scalar_lea.vmem [#allocation13], %s3351
          %3353 = dma.done %s3349, 1280
        $region80: #{swin_layer_forward.2} parent=75 // pred_fallthru
          _
      $region76: #{swin_layer_forward.2} parent=5 // pred_fallthru
        _
    $region6: #{swin_layer_forward.2} parent=1 // loop_footer
      %s25 = sadd.s32 1, %s21
    $region7: #{swin_layer_forward.2} parent=1 // loop_footer_branch
      %20 = sbr.rel target = $region3
    $region8: #{swin_layer_forward.2} parent=1 // loop_exit
      _
    %3354 = vsyncpa [#allocation3], 1
    %s3355 = scalar_lea.sflag [#allocation3], 1
    %3356 = vsyncpa %s3355, 1
    %3357 = vsyncpa [#allocation6], 1
    %3358 = vsyncpa [#allocation9], 1
    %3359 = vsyncpa [#allocation12], 1
    %3360 = vsyncpa [#allocation4], 1
    %s3361 = scalar_lea.sflag [#allocation4], 1
    %3362 = vsyncpa %s3361, 1

</llo_original>
